<compile_context>
chip_gen: v7x
topology: tpu7x:2x2x1
jax: 0.10.0
libtpu: 0.0.40
codegen_flags: <defaults>
</compile_context>

<pallas_src>
import jax
import jax.numpy as jnp
from jax.experimental import pallas as pl
from jax.experimental.pallas import tpu as pltpu

C_PAD = 128                      # lane-dense channel padding
VMEM_LIMIT = 32 * 1024 * 1024    # <= physical VMEM on v5e/v6e/v7x; tiles use far less


def _round_up(x, m):
    return ((x + m - 1) // m) * m


def _cdiv(a, b):
    return -(-a // b)


def _choose_tiling(m):
    """Return (tile_m, num_tiles): tile multiple of 16, <= 2048 rows, >= 2 tiles
    when the problem is big enough to pipeline / megacore-shard."""
    m16 = _round_up(m, 16)
    if m16 <= 256:
        return m16, 1
    num_tiles = max(2, _cdiv(m16, 2048))
    tm = _round_up(_cdiv(m16, num_tiles), 16)
    return tm, num_tiles


# ----------------------------------------------------------------------------
# Pallas kernels
# ----------------------------------------------------------------------------
def _conv_stats_kernel(p_ref, w_ref, stats_ref):
    """Per-tile conv matmul, emitting only per-channel partial sum / sum-of-squares.

    p_ref:     (TM, K)        bf16 im2col patches
    w_ref:     (K, C_PAD)     bf16 weights (zero-padded channels), VMEM-resident
    stats_ref: (1, 2, C_PAD)  f32 per-tile partials; row0=sum, row1=sumsq
    """
    conv = jnp.dot(p_ref[...], w_ref[...], preferred_element_type=jnp.float32)
    stats_ref[0, 0:1, :] = jnp.sum(conv, axis=0, keepdims=True)
    stats_ref[0, 1:2, :] = jnp.sum(conv * conv, axis=0, keepdims=True)


def _conv_bn_relu_kernel(p_ref, w_ref, scale_ref, bias_ref, o_ref):
    """Fused conv (recompute) + BN scale/bias + ReLU; bf16 output.

    p_ref: (TM, K) bf16; w_ref: (K, C_PAD) bf16 resident;
    scale_ref/bias_ref: (1, C_PAD) f32 resident; o_ref: (TM, C_PAD) bf16.
    """
    conv = jnp.dot(p_ref[...], w_ref[...], preferred_element_type=jnp.float32)
    y = conv * scale_ref[...] + bias_ref[...]
    o_ref[...] = jnp.maximum(y, 0.0).astype(o_ref.dtype)


def _maxpool_kernel(ev_ref, od_ref, o_ref):
    """3x3 / stride-2 / pad-1 max pool on a post-ReLU activation (>= 0).

    ev_ref: (1, Hp, Wo2+1, C)  even padded columns (2j) of the zero-padded input
    od_ref: (1, Hp, Wo2+1, C)  odd  padded columns (2j+1)
    o_ref:  (1, Ho2, Wo2, C)
    """
    _, ho2, wo2, c = o_ref.shape
    e = ev_ref[...]
    d = od_ref[...]
    # W window j = max(col 2j, col 2j+1, col 2j+2) = max(e[j], d[j], e[j+1]).
    wmax = jnp.maximum(jnp.maximum(e[:, :, :wo2, :], d[:, :, :wo2, :]),
                       e[:, :, 1:wo2 + 1, :])                    # (1, Hp, Wo2, C)
    he = 2 * ho2
    # H-direction stride-2 window via relayout-free major-dim reshapes.
    a = wmax[:, 0:he].reshape(1, ho2, 2, wo2, c)                 # rows 2i and 2i+1
    b = wmax[:, 2:he + 2].reshape(1, ho2, 2, wo2, c)             # rows 2i+2
    o_ref[...] = jnp.maximum(jnp.maximum(a[:, :, 0], a[:, :, 1]), b[:, :, 0])


# ----------------------------------------------------------------------------
# Wrappers
# ----------------------------------------------------------------------------
def _im2col(x_nhwc, ksize, stride, padding):
    n, h, w, c = x_nhwc.shape
    xp = jnp.pad(x_nhwc, ((0, 0), (padding, padding), (padding, padding), (0, 0)))
    ho = (h + 2 * padding - ksize) // stride + 1
    wo = (w + 2 * padding - ksize) // stride + 1
    taps = []
    for kh in range(ksize):
        for kw in range(ksize):
            taps.append(jax.lax.slice(
                xp, (0, kh, kw, 0),
                (n, kh + (ho - 1) * stride + 1, kw + (wo - 1) * stride + 1, c),
                (1, stride, stride, 1)))
    patches = jnp.stack(taps, axis=3)                            # (N, Ho, Wo, k*k, C)
    return patches.reshape(n * ho * wo, ksize * ksize * c), (n, ho, wo)


def conv_bn_relu(x_nhwc, w_oihw, gamma, beta, *, ksize, stride, padding, eps=1e-5):
    """Fused conv + BatchNorm(batch stats) + ReLU.

    Returns a bf16 activation with channels zero-padded to C_PAD: (N, Ho, Wo, C_PAD);
    channels [Cout:] are exactly zero.
    """
    cout = w_oihw.shape[0]
    patches, (n, ho, wo) = _im2col(x_nhwc.astype(jnp.bfloat16), ksize, stride, padding)
    m, k = patches.shape

    tm, num_tiles = _choose_tiling(m)
    m_pad = tm * num_tiles
    if m_pad != m:
        # Zero patch rows give zero conv rows -> contribute 0 to sum/sumsq (stats exact).
        patches = jnp.pad(patches, ((0, m_pad - m), (0, 0)))

    # (Cout, Cin, kh, kw) -> (kh, kw, Cin, Cout) -> (K, Cout) -> pad lanes to C_PAD.
    w_mat = jnp.transpose(w_oihw, (2, 3, 1, 0)).reshape(k, cout)
    w_mat = jnp.pad(w_mat, ((0, 0), (0, C_PAD - cout))).astype(jnp.bfloat16)

    mm_flops = 2 * m_pad * k * C_PAD
    patch_bytes = patches.size * 2
    w_bytes = w_mat.size * 2

    # Pass A: per-tile partial per-channel sum / sum-of-squares of the conv output.
    # Each tile writes its own partial block, so the M axis is fully parallel.
    stats = pl.pallas_call(
        _conv_stats_kernel,
        out_shape=jax.ShapeDtypeStruct((num_tiles, 2, C_PAD), jnp.float32),
        grid=(num_tiles,),
        in_specs=[
            pl.BlockSpec((tm, k), lambda i: (i, 0)),
            pl.BlockSpec((k, C_PAD), lambda i: (0, 0)),           # weights resident
        ],
        out_specs=pl.BlockSpec((1, 2, C_PAD), lambda i: (i, 0, 0)),
        compiler_params=pltpu.CompilerParams(
            dimension_semantics=("parallel",),
            vmem_limit_bytes=VMEM_LIMIT),
        cost_estimate=pl.CostEstimate(
            flops=mm_flops + 3 * m_pad * C_PAD, transcendentals=0,
            bytes_accessed=patch_bytes + w_bytes + num_tiles * 2 * C_PAD * 4),
    )(patches, w_mat)

    # Tiny JAX epilogue: reduce tile partials and fold BN into per-channel scale/bias.
    cnt = jnp.float32(m)                                          # true (unpadded) rows
    tot = jnp.sum(stats, axis=0)                                  # (2, C_PAD)
    mean = tot[0] / cnt
    var = jnp.maximum(tot[1] / cnt - mean * mean, 0.0)            # biased var, like PyTorch
    gamma_p = jnp.pad(gamma.astype(jnp.float32), (0, C_PAD - cout))
    beta_p = jnp.pad(beta.astype(jnp.float32), (0, C_PAD - cout))
    scale = gamma_p * jax.lax.rsqrt(var + eps)
    bias = beta_p - mean * scale

    # Pass B: recompute conv (weights resident, MXU is nearly idle anyway) and apply
    # scale/bias + ReLU in-kernel; activation written once, in bf16.
    act = pl.pallas_call(
        _conv_bn_relu_kernel,
        out_shape=jax.ShapeDtypeStruct((m_pad, C_PAD), jnp.bfloat16),
        grid=(num_tiles,),
        in_specs=[
            pl.BlockSpec((tm, k), lambda i: (i, 0)),
            pl.BlockSpec((k, C_PAD), lambda i: (0, 0)),           # weights resident
            pl.BlockSpec((1, C_PAD), lambda i: (0, 0)),           # scale resident
            pl.BlockSpec((1, C_PAD), lambda i: (0, 0)),           # bias resident
        ],
        out_specs=pl.BlockSpec((tm, C_PAD), lambda i: (i, 0)),
        compiler_params=pltpu.CompilerParams(
            dimension_semantics=("parallel",),
            vmem_limit_bytes=VMEM_LIMIT),
        cost_estimate=pl.CostEstimate(
            flops=mm_flops + 3 * m_pad * C_PAD, transcendentals=0,
            bytes_accessed=patch_bytes + w_bytes + m_pad * C_PAD * 2),
    )(patches, w_mat, scale.reshape(1, C_PAD), bias.reshape(1, C_PAD))

    return act[:m].reshape(n, ho, wo, C_PAD)


def maxpool_3x3_s2_p1(act):
    """3x3/s2/p1 max pool on a post-ReLU NHWC activation (values >= 0), bf16 in/out."""
    n, ho, wo, c = act.shape
    ho2 = (ho - 1) // 2 + 1
    wo2 = (wo - 1) // 2 + 1
    hp = 2 * ho2 + 2
    wp = 2 * wo2 + 2
    # Zero padding is equivalent to -inf padding because act >= 0 after ReLU.
    xp = jnp.pad(act, ((0, 0), (1, hp - ho - 1), (1, wp - wo - 1), (0, 0)))
    # Even / odd W columns (padded coords 2j / 2j+1); XLA fuses pad + strided slice,
    # so total wrapper traffic is ~1x the activation instead of the previous 3x stack.
    ev = xp[:, :, 0::2, :]                                        # (N, Hp, Wo2+1, C)
    od = xp[:, :, 1::2, :]                                        # (N, Hp, Wo2+1, C)
    itemsize = jnp.dtype(act.dtype).itemsize

    return pl.pallas_call(
        _maxpool_kernel,
        out_shape=jax.ShapeDtypeStruct((n, ho2, wo2, c), act.dtype),
        grid=(n,),
        in_specs=[pl.BlockSpec((1, hp, wo2 + 1, c), lambda i: (i, 0, 0, 0)),
                  pl.BlockSpec((1, hp, wo2 + 1, c), lambda i: (i, 0, 0, 0))],
        out_specs=pl.BlockSpec((1, ho2, wo2, c), lambda i: (i, 0, 0, 0)),
        compiler_params=pltpu.CompilerParams(
            dimension_semantics=("parallel",),
            vmem_limit_bytes=VMEM_LIMIT),
        cost_estimate=pl.CostEstimate(
            flops=5 * n * ho2 * wo2 * c, transcendentals=0,
            bytes_accessed=(ev.size + od.size + n * ho2 * wo2 * c) * itemsize),
    )(ev, od)


def entry_encoder_forward(x, params, eps=1e-5):
    """x: (B, P, Cin, H, W)  ->  (B, P, C2, Ho, Wo)   (PyTorch axis conventions)."""
    b, p, cin, h, w = x.shape
    xf = jnp.transpose(x.reshape(b * p, cin, h, w), (0, 2, 3, 1))   # NCHW -> NHWC

    c1 = params["w1"].shape[0]
    c2 = params["w2"].shape[0]

    a = conv_bn_relu(xf, params["w1"], params["g1"], params["b1"],
                     ksize=7, stride=2, padding=3, eps=eps)         # (N, H/2, W/2, 128) bf16
    a = maxpool_3x3_s2_p1(a)                                        # (N, H/4, W/4, 128) bf16
    a = conv_bn_relu(a[..., :c1], params["w2"], params["g2"], params["b2"],
                     ksize=3, stride=1, padding=1, eps=eps)         # (N, H/4, W/4, 128) bf16
    a = maxpool_3x3_s2_p1(a)                                        # (N, H/8, W/8, 128) bf16

    a = jnp.transpose(a[..., :c2].astype(jnp.float32), (0, 3, 1, 2))  # NHWC -> NCHW, f32
    _, cout, ho, wo = a.shape
    return a.reshape(b, p, cout, ho, wo)


# ----------------------------------------------------------------------------
# Pure-JAX reference (conv operands cast to bf16 to match the kernel path)
# ----------------------------------------------------------------------------
def reference_forward(x, params, eps=1e-5):
    def conv(x_nhwc, w_oihw, stride, padding):
        w_hwio = jnp.transpose(w_oihw, (2, 3, 1, 0))
        return jax.lax.conv_general_dilated(
            x_nhwc.astype(jnp.bfloat16), w_hwio.astype(jnp.bfloat16),
            window_strides=(stride, stride),
            padding=[(padding, padding), (padding, padding)],
            dimension_numbers=("NHWC", "HWIO", "NHWC"),
            preferred_element_type=jnp.float32)

    def bn_relu(y, g, bb):
        mean = jnp.mean(y, axis=(0, 1, 2))
        var = jnp.mean(jnp.square(y - mean), axis=(0, 1, 2))
        return jnp.maximum((y - mean) * jax.lax.rsqrt(var + eps) * g + bb, 0.0)

    def pool(y):
        return jax.lax.reduce_window(
            y, jnp.array(-jnp.inf, y.dtype), jax.lax.max,
            (1, 3, 3, 1), (1, 2, 2, 1), [(0, 0), (1, 1), (1, 1), (0, 0)])

    b, p, cin, h, w = x.shape
    xf = jnp.transpose(x.reshape(b * p, cin, h, w), (0, 2, 3, 1))
    y = pool(bn_relu(conv(xf, params["w1"], 2, 3), params["g1"], params["b1"]))
    y = pool(bn_relu(conv(y, params["w2"], 1, 1), params["g2"], params["b2"]))
    y = jnp.transpose(y, (0, 3, 1, 2))
    _, c, ho, wo = y.shape
    return y.reshape(b, p, c, ho, wo)


def init_params(key, in_channels, out_channels_1, out_channels_2):
    k1, k2, k3, k4, k5, k6 = jax.random.split(key, 6)
    return {
        # Conv2d(in, c1, k=7, s=2, p=3, bias=False): weight (c1, in, 7, 7)
        "w1": 0.1 * jax.random.normal(k1, (out_channels_1, in_channels, 7, 7), jnp.float32),
        "g1": 1.0 + 0.1 * jax.random.normal(k2, (out_channels_1,), jnp.float32),
        "b1": 0.1 * jax.random.normal(k3, (out_channels_1,), jnp.float32),
        # Conv2d(c1, c2, k=3, s=1, p=1, bias=False): weight (c2, c1, 3, 3)
        "w2": 0.1 * jax.random.normal(k4, (out_channels_2, out_channels_1, 3, 3), jnp.float32),
        "g2": 1.0 + 0.1 * jax.random.normal(k5, (out_channels_2,), jnp.float32),
        "b2": 0.1 * jax.random.normal(k6, (out_channels_2,), jnp.float32),
    }


if __name__ == "__main__":
    key = jax.random.PRNGKey(0)
    kx, kp = jax.random.split(key)

    B, P, Cin, H, W = 2, 3, 1, 32, 32
    C1, C2 = 8, 16

    x = jax.random.normal(kx, (B, P, Cin, H, W), jnp.float32)
    params = init_params(kp, Cin, C1, C2)

    fwd = jax.jit(entry_encoder_forward)
    y = fwd(x, params)
    jax.block_until_ready(y)

    # 32 -> conv s2 -> 16 -> pool s2 -> 8 -> conv s1 -> 8 -> pool s2 -> 4
    assert y.shape == (B, P, C2, 4, 4), y.shape
    assert y.dtype == jnp.float32

    ref = jax.jit(reference_forward)(x, params)
    err = float(jnp.max(jnp.abs(y - ref)))
    # bf16 matmul operands + bf16 inter-stage activations (by design) vs f32 reference.
    assert err < 5e-2, f"max abs error vs reference: {err}"

    print("KERNEL_OK")
</pallas_src>

<mosaic_0001>
module attributes {stable_mosaic.version = 11 : i64} {
  func.func @_conv_stats_kernel(%arg0: i32, %arg1: memref<768x49xbf16, #tpu.memory_space<vmem>>, %arg2: memref<49x128xbf16, #tpu.memory_space<vmem>>, %arg3: memref<1x2x128xf32, #tpu.memory_space<vmem>>) attributes {dimension_semantics = [#tpu.dimension_semantics<parallel>], iteration_bounds = array<i64: 2>, scalar_prefetch = 0 : i64, scratch_operands = 0 : i64, tpu.core_type = #tpu.core_type<tc>, window_params = [{transform_indices = @transform_0, window_bounds = array<i64: 768, 49>}, {pipeline_mode = #tpu.pipeline_mode<synchronous>, transform_indices = @transform_1, window_bounds = array<i64: 49, 128>}, {transform_indices = @transform_2, window_bounds = array<i64: 1, 2, 128>}]} {
    %c0 = arith.constant 0 : index
    %c0_0 = arith.constant 0 : index
    %0 = vector.load %arg1[%c0, %c0_0] : memref<768x49xbf16, #tpu.memory_space<vmem>>, vector<768x49xbf16>
    %c0_1 = arith.constant 0 : index
    %c0_2 = arith.constant 0 : index
    %1 = vector.load %arg2[%c0_1, %c0_2] : memref<49x128xbf16, #tpu.memory_space<vmem>>, vector<49x128xbf16>
    %cst = arith.constant dense<0.000000e+00> : vector<768x128xf32>
    %2 = tpu.matmul %0, %1, %cst {dimension_numbers = #tpu.dot_dimension_numbers<[1], [0], [0], [1], [0, 0, 1, 1], [], []>} : vector<768x49xbf16>, vector<49x128xbf16>, vector<768x128xf32> -> vector<768x128xf32>
    %cst_3 = arith.constant dense<0.000000e+00> : vector<128xf32>
    %3 = vector.multi_reduction <add>, %2, %cst_3 [0] : vector<768x128xf32> to vector<128xf32>
    %4 = vector.shape_cast %3 : vector<128xf32> to vector<1x128xf32>
    %c0_4 = arith.constant 0 : index
    %c0_5 = arith.constant 0 : index
    %c0_6 = arith.constant 0 : index
    %5 = vector.load %arg3[%c0_4, %c0_5, %c0_6] : memref<1x2x128xf32, #tpu.memory_space<vmem>>, vector<1x1x128xf32>
    %6 = vector.shape_cast %5 : vector<1x1x128xf32> to vector<1x128xf32>
    %7 = vector.shape_cast %4 : vector<1x128xf32> to vector<1x1x128xf32>
    tpu.vector_store %arg3[%c0_4, %c0_5, %c0_6], %7 {strides = array<i32>} : memref<1x2x128xf32, #tpu.memory_space<vmem>>, vector<1x1x128xf32>,
    %8 = arith.mulf %2, %2 : vector<768x128xf32>
    %cst_7 = arith.constant dense<0.000000e+00> : vector<128xf32>
    %9 = vector.multi_reduction <add>, %8, %cst_7 [0] : vector<768x128xf32> to vector<128xf32>
    %10 = vector.shape_cast %9 : vector<128xf32> to vector<1x128xf32>
    %c0_8 = arith.constant 0 : index
    %c1 = arith.constant 1 : index
    %c0_9 = arith.constant 0 : index
    %11 = vector.load %arg3[%c0_8, %c1, %c0_9] : memref<1x2x128xf32, #tpu.memory_space<vmem>>, vector<1x1x128xf32>
    %12 = vector.shape_cast %11 : vector<1x1x128xf32> to vector<1x128xf32>
    %13 = vector.shape_cast %10 : vector<1x128xf32> to vector<1x1x128xf32>
    tpu.vector_store %arg3[%c0_8, %c1, %c0_9], %13 {strides = array<i32>} : memref<1x2x128xf32, #tpu.memory_space<vmem>>, vector<1x1x128xf32>,
    return
  }
  func.func @transform_0(%arg0: i32) -> (i32, i32) {
    %c0_i32 = arith.constant 0 : i32
    %c0_i32_0 = arith.constant 0 : i32
    return %arg0, %c0_i32 : i32, i32
  }
  func.func @transform_1(%arg0: i32) -> (i32, i32) {
    %c0_i32 = arith.constant 0 : i32
    %c0_i32_0 = arith.constant 0 : i32
    %c0_i32_1 = arith.constant 0 : i32
    return %c0_i32, %c0_i32_0 : i32, i32
  }
  func.func @transform_2(%arg0: i32) -> (i32, i32, i32) {
    %c0_i32 = arith.constant 0 : i32
    %c0_i32_0 = arith.constant 0 : i32
    %c0_i32_1 = arith.constant 0 : i32
    return %arg0, %c0_i32, %c0_i32_0 : i32, i32, i32
  }
}

module attributes {stable_mosaic.version = 11 : i64} {
  func.func @_conv_bn_relu_kernel(%arg0: i32, %arg1: memref<768x49xbf16, #tpu.memory_space<vmem>>, %arg2: memref<49x128xbf16, #tpu.memory_space<vmem>>, %arg3: memref<1x128xf32, #tpu.memory_space<vmem>>, %arg4: memref<1x128xf32, #tpu.memory_space<vmem>>, %arg5: memref<768x128xbf16, #tpu.memory_space<vmem>>) attributes {dimension_semantics = [#tpu.dimension_semantics<parallel>], iteration_bounds = array<i64: 2>, scalar_prefetch = 0 : i64, scratch_operands = 0 : i64, tpu.core_type = #tpu.core_type<tc>, window_params = [{transform_indices = @transform_0, window_bounds = array<i64: 768, 49>}, {pipeline_mode = #tpu.pipeline_mode<synchronous>, transform_indices = @transform_1, window_bounds = array<i64: 49, 128>}, {pipeline_mode = #tpu.pipeline_mode<synchronous>, transform_indices = @transform_2, window_bounds = array<i64: 1, 128>}, {pipeline_mode = #tpu.pipeline_mode<synchronous>, transform_indices = @transform_3, window_bounds = array<i64: 1, 128>}, {transform_indices = @transform_4, window_bounds = array<i64: 768, 128>}]} {
    %c0 = arith.constant 0 : index
    %c0_0 = arith.constant 0 : index
    %0 = vector.load %arg1[%c0, %c0_0] : memref<768x49xbf16, #tpu.memory_space<vmem>>, vector<768x49xbf16>
    %c0_1 = arith.constant 0 : index
    %c0_2 = arith.constant 0 : index
    %1 = vector.load %arg2[%c0_1, %c0_2] : memref<49x128xbf16, #tpu.memory_space<vmem>>, vector<49x128xbf16>
    %cst = arith.constant dense<0.000000e+00> : vector<768x128xf32>
    %2 = tpu.matmul %0, %1, %cst {dimension_numbers = #tpu.dot_dimension_numbers<[1], [0], [0], [1], [0, 0, 1, 1], [], []>} : vector<768x49xbf16>, vector<49x128xbf16>, vector<768x128xf32> -> vector<768x128xf32>
    %c0_3 = arith.constant 0 : index
    %c0_4 = arith.constant 0 : index
    %3 = vector.load %arg3[%c0_3, %c0_4] : memref<1x128xf32, #tpu.memory_space<vmem>>, vector<1x128xf32>
    %4 = vector.broadcast %3 : vector<1x128xf32> to vector<768x128xf32>
    %5 = arith.mulf %2, %4 : vector<768x128xf32>
    %c0_5 = arith.constant 0 : index
    %c0_6 = arith.constant 0 : index
    %6 = vector.load %arg4[%c0_5, %c0_6] : memref<1x128xf32, #tpu.memory_space<vmem>>, vector<1x128xf32>
    %7 = vector.broadcast %6 : vector<1x128xf32> to vector<768x128xf32>
    %8 = arith.addf %5, %7 : vector<768x128xf32>
    %cst_7 = arith.constant 0.000000e+00 : f32
    %9 = vector.broadcast %cst_7 : f32 to vector<768x128xf32>
    %10 = arith.maximumf %8, %9 : vector<768x128xf32>
    %11 = arith.truncf %10 : vector<768x128xf32> to vector<768x128xbf16>
    %c0_8 = arith.constant 0 : index
    %c0_9 = arith.constant 0 : index
    %12 = vector.load %arg5[%c0_8, %c0_9] : memref<768x128xbf16, #tpu.memory_space<vmem>>, vector<768x128xbf16>
    tpu.vector_store %arg5[%c0_8, %c0_9], %11 {strides = array<i32>} : memref<768x128xbf16, #tpu.memory_space<vmem>>, vector<768x128xbf16>,
    return
  }
  func.func @transform_0(%arg0: i32) -> (i32, i32) {
    %c0_i32 = arith.constant 0 : i32
    %c0_i32_0 = arith.constant 0 : i32
    return %arg0, %c0_i32 : i32, i32
  }
  func.func @transform_1(%arg0: i32) -> (i32, i32) {
    %c0_i32 = arith.constant 0 : i32
    %c0_i32_0 = arith.constant 0 : i32
    %c0_i32_1 = arith.constant 0 : i32
    return %c0_i32, %c0_i32_0 : i32, i32
  }
  func.func @transform_2(%arg0: i32) -> (i32, i32) {
    %c0_i32 = arith.constant 0 : i32
    %c0_i32_0 = arith.constant 0 : i32
    %c0_i32_1 = arith.constant 0 : i32
    return %c0_i32, %c0_i32_0 : i32, i32
  }
  func.func @transform_3(%arg0: i32) -> (i32, i32) {
    %c0_i32 = arith.constant 0 : i32
    %c0_i32_0 = arith.constant 0 : i32
    %c0_i32_1 = arith.constant 0 : i32
    return %c0_i32, %c0_i32_0 : i32, i32
  }
  func.func @transform_4(%arg0: i32) -> (i32, i32) {
    %c0_i32 = arith.constant 0 : i32
    %c0_i32_0 = arith.constant 0 : i32
    return %arg0, %c0_i32 : i32, i32
  }
}

module attributes {stable_mosaic.version = 11 : i64} {
  func.func @_maxpool_kernel(%arg0: i32, %arg1: memref<1x18x9x128xbf16, #tpu.memory_space<vmem>>, %arg2: memref<1x18x9x128xbf16, #tpu.memory_space<vmem>>, %arg3: memref<1x8x8x128xbf16, #tpu.memory_space<vmem>>) attributes {dimension_semantics = [#tpu.dimension_semantics<parallel>], iteration_bounds = array<i64: 6>, scalar_prefetch = 0 : i64, scratch_operands = 0 : i64, tpu.core_type = #tpu.core_type<tc>, window_params = [{transform_indices = @transform_0, window_bounds = array<i64: 1, 18, 9, 128>}, {transform_indices = @transform_1, window_bounds = array<i64: 1, 18, 9, 128>}, {transform_indices = @transform_2, window_bounds = array<i64: 1, 8, 8, 128>}]} {
    %c0 = arith.constant 0 : index
    %c0_0 = arith.constant 0 : index
    %c0_1 = arith.constant 0 : index
    %c0_2 = arith.constant 0 : index
    %0 = vector.load %arg1[%c0, %c0_0, %c0_1, %c0_2] : memref<1x18x9x128xbf16, #tpu.memory_space<vmem>>, vector<1x18x9x128xbf16>
    %c0_3 = arith.constant 0 : index
    %c0_4 = arith.constant 0 : index
    %c0_5 = arith.constant 0 : index
    %c0_6 = arith.constant 0 : index
    %1 = vector.load %arg2[%c0_3, %c0_4, %c0_5, %c0_6] : memref<1x18x9x128xbf16, #tpu.memory_space<vmem>>, vector<1x18x9x128xbf16>
    %2 = vector.extract_strided_slice %0 {offsets = [0, 0, 0, 0], sizes = [1, 18, 8, 128], strides = [1, 1, 1, 1]} : vector<1x18x9x128xbf16> to vector<1x18x8x128xbf16>
    %3 = vector.extract_strided_slice %1 {offsets = [0, 0, 0, 0], sizes = [1, 18, 8, 128], strides = [1, 1, 1, 1]} : vector<1x18x9x128xbf16> to vector<1x18x8x128xbf16>
    %4 = arith.maximumf %2, %3 : vector<1x18x8x128xbf16>
    %5 = vector.extract_strided_slice %0 {offsets = [0, 0, 1, 0], sizes = [1, 18, 8, 128], strides = [1, 1, 1, 1]} : vector<1x18x9x128xbf16> to vector<1x18x8x128xbf16>
    %6 = arith.maximumf %4, %5 : vector<1x18x8x128xbf16>
    %7 = vector.extract_strided_slice %6 {offsets = [0, 0, 0, 0], sizes = [1, 16, 8, 128], strides = [1, 1, 1, 1]} : vector<1x18x8x128xbf16> to vector<1x16x8x128xbf16>
    %8 = vector.shape_cast %7 : vector<1x16x8x128xbf16> to vector<1x8x2x8x128xbf16>
    %9 = vector.extract_strided_slice %6 {offsets = [0, 2, 0, 0], sizes = [1, 16, 8, 128], strides = [1, 1, 1, 1]} : vector<1x18x8x128xbf16> to vector<1x16x8x128xbf16>
    %10 = vector.shape_cast %9 : vector<1x16x8x128xbf16> to vector<1x8x2x8x128xbf16>
    %11 = vector.extract_strided_slice %8 {offsets = [0, 0, 0, 0, 0], sizes = [1, 8, 1, 8, 128], strides = [1, 1, 1, 1, 1]} : vector<1x8x2x8x128xbf16> to vector<1x8x1x8x128xbf16>
    %12 = vector.shape_cast %11 : vector<1x8x1x8x128xbf16> to vector<1x8x8x128xbf16>
    %13 = vector.extract_strided_slice %8 {offsets = [0, 0, 1, 0, 0], sizes = [1, 8, 1, 8, 128], strides = [1, 1, 1, 1, 1]} : vector<1x8x2x8x128xbf16> to vector<1x8x1x8x128xbf16>
    %14 = vector.shape_cast %13 : vector<1x8x1x8x128xbf16> to vector<1x8x8x128xbf16>
    %15 = arith.maximumf %12, %14 : vector<1x8x8x128xbf16>
    %16 = vector.extract_strided_slice %10 {offsets = [0, 0, 0, 0, 0], sizes = [1, 8, 1, 8, 128], strides = [1, 1, 1, 1, 1]} : vector<1x8x2x8x128xbf16> to vector<1x8x1x8x128xbf16>
    %17 = vector.shape_cast %16 : vector<1x8x1x8x128xbf16> to vector<1x8x8x128xbf16>
    %18 = arith.maximumf %15, %17 : vector<1x8x8x128xbf16>
    %c0_7 = arith.constant 0 : index
    %c0_8 = arith.constant 0 : index
    %c0_9 = arith.constant 0 : index
    %c0_10 = arith.constant 0 : index
    %19 = vector.load %arg3[%c0_7, %c0_8, %c0_9, %c0_10] : memref<1x8x8x128xbf16, #tpu.memory_space<vmem>>, vector<1x8x8x128xbf16>
    tpu.vector_store %arg3[%c0_7, %c0_8, %c0_9, %c0_10], %18 {strides = array<i32>} : memref<1x8x8x128xbf16, #tpu.memory_space<vmem>>, vector<1x8x8x128xbf16>,
    return
  }
  func.func @transform_0(%arg0: i32) -> (i32, i32, i32, i32) {
    %c0_i32 = arith.constant 0 : i32
    %c0_i32_0 = arith.constant 0 : i32
    %c0_i32_1 = arith.constant 0 : i32
    %c0_i32_2 = arith.constant 0 : i32
    return %arg0, %c0_i32, %c0_i32_0, %c0_i32_1 : i32, i32, i32, i32
  }
  func.func @transform_1(%arg0: i32) -> (i32, i32, i32, i32) {
    %c0_i32 = arith.constant 0 : i32
    %c0_i32_0 = arith.constant 0 : i32
    %c0_i32_1 = arith.constant 0 : i32
    %c0_i32_2 = arith.constant 0 : i32
    return %arg0, %c0_i32, %c0_i32_0, %c0_i32_1 : i32, i32, i32, i32
  }
  func.func @transform_2(%arg0: i32) -> (i32, i32, i32, i32) {
    %c0_i32 = arith.constant 0 : i32
    %c0_i32_0 = arith.constant 0 : i32
    %c0_i32_1 = arith.constant 0 : i32
    %c0_i32_2 = arith.constant 0 : i32
    return %arg0, %c0_i32, %c0_i32_0, %c0_i32_1 : i32, i32, i32, i32
  }
}

module attributes {stable_mosaic.version = 11 : i64} {
  func.func @_conv_stats_kernel(%arg0: i32, %arg1: memref<192x72xbf16, #tpu.memory_space<vmem>>, %arg2: memref<72x128xbf16, #tpu.memory_space<vmem>>, %arg3: memref<1x2x128xf32, #tpu.memory_space<vmem>>) attributes {dimension_semantics = [#tpu.dimension_semantics<parallel>], iteration_bounds = array<i64: 2>, scalar_prefetch = 0 : i64, scratch_operands = 0 : i64, tpu.core_type = #tpu.core_type<tc>, window_params = [{transform_indices = @transform_0, window_bounds = array<i64: 192, 72>}, {pipeline_mode = #tpu.pipeline_mode<synchronous>, transform_indices = @transform_1, window_bounds = array<i64: 72, 128>}, {transform_indices = @transform_2, window_bounds = array<i64: 1, 2, 128>}]} {
    %c0 = arith.constant 0 : index
    %c0_0 = arith.constant 0 : index
    %0 = vector.load %arg1[%c0, %c0_0] : memref<192x72xbf16, #tpu.memory_space<vmem>>, vector<192x72xbf16>
    %c0_1 = arith.constant 0 : index
    %c0_2 = arith.constant 0 : index
    %1 = vector.load %arg2[%c0_1, %c0_2] : memref<72x128xbf16, #tpu.memory_space<vmem>>, vector<72x128xbf16>
    %cst = arith.constant dense<0.000000e+00> : vector<192x128xf32>
    %2 = tpu.matmul %0, %1, %cst {dimension_numbers = #tpu.dot_dimension_numbers<[1], [0], [0], [1], [0, 0, 1, 1], [], []>} : vector<192x72xbf16>, vector<72x128xbf16>, vector<192x128xf32> -> vector<192x128xf32>
    %cst_3 = arith.constant dense<0.000000e+00> : vector<128xf32>
    %3 = vector.multi_reduction <add>, %2, %cst_3 [0] : vector<192x128xf32> to vector<128xf32>
    %4 = vector.shape_cast %3 : vector<128xf32> to vector<1x128xf32>
    %c0_4 = arith.constant 0 : index
    %c0_5 = arith.constant 0 : index
    %c0_6 = arith.constant 0 : index
    %5 = vector.load %arg3[%c0_4, %c0_5, %c0_6] : memref<1x2x128xf32, #tpu.memory_space<vmem>>, vector<1x1x128xf32>
    %6 = vector.shape_cast %5 : vector<1x1x128xf32> to vector<1x128xf32>
    %7 = vector.shape_cast %4 : vector<1x128xf32> to vector<1x1x128xf32>
    tpu.vector_store %arg3[%c0_4, %c0_5, %c0_6], %7 {strides = array<i32>} : memref<1x2x128xf32, #tpu.memory_space<vmem>>, vector<1x1x128xf32>,
    %8 = arith.mulf %2, %2 : vector<192x128xf32>
    %cst_7 = arith.constant dense<0.000000e+00> : vector<128xf32>
    %9 = vector.multi_reduction <add>, %8, %cst_7 [0] : vector<192x128xf32> to vector<128xf32>
    %10 = vector.shape_cast %9 : vector<128xf32> to vector<1x128xf32>
    %c0_8 = arith.constant 0 : index
    %c1 = arith.constant 1 : index
    %c0_9 = arith.constant 0 : index
    %11 = vector.load %arg3[%c0_8, %c1, %c0_9] : memref<1x2x128xf32, #tpu.memory_space<vmem>>, vector<1x1x128xf32>
    %12 = vector.shape_cast %11 : vector<1x1x128xf32> to vector<1x128xf32>
    %13 = vector.shape_cast %10 : vector<1x128xf32> to vector<1x1x128xf32>
    tpu.vector_store %arg3[%c0_8, %c1, %c0_9], %13 {strides = array<i32>} : memref<1x2x128xf32, #tpu.memory_space<vmem>>, vector<1x1x128xf32>,
    return
  }
  func.func @transform_0(%arg0: i32) -> (i32, i32) {
    %c0_i32 = arith.constant 0 : i32
    %c0_i32_0 = arith.constant 0 : i32
    return %arg0, %c0_i32 : i32, i32
  }
  func.func @transform_1(%arg0: i32) -> (i32, i32) {
    %c0_i32 = arith.constant 0 : i32
    %c0_i32_0 = arith.constant 0 : i32
    %c0_i32_1 = arith.constant 0 : i32
    return %c0_i32, %c0_i32_0 : i32, i32
  }
  func.func @transform_2(%arg0: i32) -> (i32, i32, i32) {
    %c0_i32 = arith.constant 0 : i32
    %c0_i32_0 = arith.constant 0 : i32
    %c0_i32_1 = arith.constant 0 : i32
    return %arg0, %c0_i32, %c0_i32_0 : i32, i32, i32
  }
}

module attributes {stable_mosaic.version = 11 : i64} {
  func.func @_conv_bn_relu_kernel(%arg0: i32, %arg1: memref<192x72xbf16, #tpu.memory_space<vmem>>, %arg2: memref<72x128xbf16, #tpu.memory_space<vmem>>, %arg3: memref<1x128xf32, #tpu.memory_space<vmem>>, %arg4: memref<1x128xf32, #tpu.memory_space<vmem>>, %arg5: memref<192x128xbf16, #tpu.memory_space<vmem>>) attributes {dimension_semantics = [#tpu.dimension_semantics<parallel>], iteration_bounds = array<i64: 2>, scalar_prefetch = 0 : i64, scratch_operands = 0 : i64, tpu.core_type = #tpu.core_type<tc>, window_params = [{transform_indices = @transform_0, window_bounds = array<i64: 192, 72>}, {pipeline_mode = #tpu.pipeline_mode<synchronous>, transform_indices = @transform_1, window_bounds = array<i64: 72, 128>}, {pipeline_mode = #tpu.pipeline_mode<synchronous>, transform_indices = @transform_2, window_bounds = array<i64: 1, 128>}, {pipeline_mode = #tpu.pipeline_mode<synchronous>, transform_indices = @transform_3, window_bounds = array<i64: 1, 128>}, {transform_indices = @transform_4, window_bounds = array<i64: 192, 128>}]} {
    %c0 = arith.constant 0 : index
    %c0_0 = arith.constant 0 : index
    %0 = vector.load %arg1[%c0, %c0_0] : memref<192x72xbf16, #tpu.memory_space<vmem>>, vector<192x72xbf16>
    %c0_1 = arith.constant 0 : index
    %c0_2 = arith.constant 0 : index
    %1 = vector.load %arg2[%c0_1, %c0_2] : memref<72x128xbf16, #tpu.memory_space<vmem>>, vector<72x128xbf16>
    %cst = arith.constant dense<0.000000e+00> : vector<192x128xf32>
    %2 = tpu.matmul %0, %1, %cst {dimension_numbers = #tpu.dot_dimension_numbers<[1], [0], [0], [1], [0, 0, 1, 1], [], []>} : vector<192x72xbf16>, vector<72x128xbf16>, vector<192x128xf32> -> vector<192x128xf32>
    %c0_3 = arith.constant 0 : index
    %c0_4 = arith.constant 0 : index
    %3 = vector.load %arg3[%c0_3, %c0_4] : memref<1x128xf32, #tpu.memory_space<vmem>>, vector<1x128xf32>
    %4 = vector.broadcast %3 : vector<1x128xf32> to vector<192x128xf32>
    %5 = arith.mulf %2, %4 : vector<192x128xf32>
    %c0_5 = arith.constant 0 : index
    %c0_6 = arith.constant 0 : index
    %6 = vector.load %arg4[%c0_5, %c0_6] : memref<1x128xf32, #tpu.memory_space<vmem>>, vector<1x128xf32>
    %7 = vector.broadcast %6 : vector<1x128xf32> to vector<192x128xf32>
    %8 = arith.addf %5, %7 : vector<192x128xf32>
    %cst_7 = arith.constant 0.000000e+00 : f32
    %9 = vector.broadcast %cst_7 : f32 to vector<192x128xf32>
    %10 = arith.maximumf %8, %9 : vector<192x128xf32>
    %11 = arith.truncf %10 : vector<192x128xf32> to vector<192x128xbf16>
    %c0_8 = arith.constant 0 : index
    %c0_9 = arith.constant 0 : index
    %12 = vector.load %arg5[%c0_8, %c0_9] : memref<192x128xbf16, #tpu.memory_space<vmem>>, vector<192x128xbf16>
    tpu.vector_store %arg5[%c0_8, %c0_9], %11 {strides = array<i32>} : memref<192x128xbf16, #tpu.memory_space<vmem>>, vector<192x128xbf16>,
    return
  }
  func.func @transform_0(%arg0: i32) -> (i32, i32) {
    %c0_i32 = arith.constant 0 : i32
    %c0_i32_0 = arith.constant 0 : i32
    return %arg0, %c0_i32 : i32, i32
  }
  func.func @transform_1(%arg0: i32) -> (i32, i32) {
    %c0_i32 = arith.constant 0 : i32
    %c0_i32_0 = arith.constant 0 : i32
    %c0_i32_1 = arith.constant 0 : i32
    return %c0_i32, %c0_i32_0 : i32, i32
  }
  func.func @transform_2(%arg0: i32) -> (i32, i32) {
    %c0_i32 = arith.constant 0 : i32
    %c0_i32_0 = arith.constant 0 : i32
    %c0_i32_1 = arith.constant 0 : i32
    return %c0_i32, %c0_i32_0 : i32, i32
  }
  func.func @transform_3(%arg0: i32) -> (i32, i32) {
    %c0_i32 = arith.constant 0 : i32
    %c0_i32_0 = arith.constant 0 : i32
    %c0_i32_1 = arith.constant 0 : i32
    return %c0_i32, %c0_i32_0 : i32, i32
  }
  func.func @transform_4(%arg0: i32) -> (i32, i32) {
    %c0_i32 = arith.constant 0 : i32
    %c0_i32_0 = arith.constant 0 : i32
    return %arg0, %c0_i32 : i32, i32
  }
}

module attributes {stable_mosaic.version = 11 : i64} {
  func.func @_maxpool_kernel(%arg0: i32, %arg1: memref<1x10x5x128xbf16, #tpu.memory_space<vmem>>, %arg2: memref<1x10x5x128xbf16, #tpu.memory_space<vmem>>, %arg3: memref<1x4x4x128xbf16, #tpu.memory_space<vmem>>) attributes {dimension_semantics = [#tpu.dimension_semantics<parallel>], iteration_bounds = array<i64: 6>, scalar_prefetch = 0 : i64, scratch_operands = 0 : i64, tpu.core_type = #tpu.core_type<tc>, window_params = [{transform_indices = @transform_0, window_bounds = array<i64: 1, 10, 5, 128>}, {transform_indices = @transform_1, window_bounds = array<i64: 1, 10, 5, 128>}, {transform_indices = @transform_2, window_bounds = array<i64: 1, 4, 4, 128>}]} {
    %c0 = arith.constant 0 : index
    %c0_0 = arith.constant 0 : index
    %c0_1 = arith.constant 0 : index
    %c0_2 = arith.constant 0 : index
    %0 = vector.load %arg1[%c0, %c0_0, %c0_1, %c0_2] : memref<1x10x5x128xbf16, #tpu.memory_space<vmem>>, vector<1x10x5x128xbf16>
    %c0_3 = arith.constant 0 : index
    %c0_4 = arith.constant 0 : index
    %c0_5 = arith.constant 0 : index
    %c0_6 = arith.constant 0 : index
    %1 = vector.load %arg2[%c0_3, %c0_4, %c0_5, %c0_6] : memref<1x10x5x128xbf16, #tpu.memory_space<vmem>>, vector<1x10x5x128xbf16>
    %2 = vector.extract_strided_slice %0 {offsets = [0, 0, 0, 0], sizes = [1, 10, 4, 128], strides = [1, 1, 1, 1]} : vector<1x10x5x128xbf16> to vector<1x10x4x128xbf16>
    %3 = vector.extract_strided_slice %1 {offsets = [0, 0, 0, 0], sizes = [1, 10, 4, 128], strides = [1, 1, 1, 1]} : vector<1x10x5x128xbf16> to vector<1x10x4x128xbf16>
    %4 = arith.maximumf %2, %3 : vector<1x10x4x128xbf16>
    %5 = vector.extract_strided_slice %0 {offsets = [0, 0, 1, 0], sizes = [1, 10, 4, 128], strides = [1, 1, 1, 1]} : vector<1x10x5x128xbf16> to vector<1x10x4x128xbf16>
    %6 = arith.maximumf %4, %5 : vector<1x10x4x128xbf16>
    %7 = vector.extract_strided_slice %6 {offsets = [0, 0, 0, 0], sizes = [1, 8, 4, 128], strides = [1, 1, 1, 1]} : vector<1x10x4x128xbf16> to vector<1x8x4x128xbf16>
    %8 = vector.shape_cast %7 : vector<1x8x4x128xbf16> to vector<1x4x2x4x128xbf16>
    %9 = vector.extract_strided_slice %6 {offsets = [0, 2, 0, 0], sizes = [1, 8, 4, 128], strides = [1, 1, 1, 1]} : vector<1x10x4x128xbf16> to vector<1x8x4x128xbf16>
    %10 = vector.shape_cast %9 : vector<1x8x4x128xbf16> to vector<1x4x2x4x128xbf16>
    %11 = vector.extract_strided_slice %8 {offsets = [0, 0, 0, 0, 0], sizes = [1, 4, 1, 4, 128], strides = [1, 1, 1, 1, 1]} : vector<1x4x2x4x128xbf16> to vector<1x4x1x4x128xbf16>
    %12 = vector.shape_cast %11 : vector<1x4x1x4x128xbf16> to vector<1x4x4x128xbf16>
    %13 = vector.extract_strided_slice %8 {offsets = [0, 0, 1, 0, 0], sizes = [1, 4, 1, 4, 128], strides = [1, 1, 1, 1, 1]} : vector<1x4x2x4x128xbf16> to vector<1x4x1x4x128xbf16>
    %14 = vector.shape_cast %13 : vector<1x4x1x4x128xbf16> to vector<1x4x4x128xbf16>
    %15 = arith.maximumf %12, %14 : vector<1x4x4x128xbf16>
    %16 = vector.extract_strided_slice %10 {offsets = [0, 0, 0, 0, 0], sizes = [1, 4, 1, 4, 128], strides = [1, 1, 1, 1, 1]} : vector<1x4x2x4x128xbf16> to vector<1x4x1x4x128xbf16>
    %17 = vector.shape_cast %16 : vector<1x4x1x4x128xbf16> to vector<1x4x4x128xbf16>
    %18 = arith.maximumf %15, %17 : vector<1x4x4x128xbf16>
    %c0_7 = arith.constant 0 : index
    %c0_8 = arith.constant 0 : index
    %c0_9 = arith.constant 0 : index
    %c0_10 = arith.constant 0 : index
    %19 = vector.load %arg3[%c0_7, %c0_8, %c0_9, %c0_10] : memref<1x4x4x128xbf16, #tpu.memory_space<vmem>>, vector<1x4x4x128xbf16>
    tpu.vector_store %arg3[%c0_7, %c0_8, %c0_9, %c0_10], %18 {strides = array<i32>} : memref<1x4x4x128xbf16, #tpu.memory_space<vmem>>, vector<1x4x4x128xbf16>,
    return
  }
  func.func @transform_0(%arg0: i32) -> (i32, i32, i32, i32) {
    %c0_i32 = arith.constant 0 : i32
    %c0_i32_0 = arith.constant 0 : i32
    %c0_i32_1 = arith.constant 0 : i32
    %c0_i32_2 = arith.constant 0 : i32
    return %arg0, %c0_i32, %c0_i32_0, %c0_i32_1 : i32, i32, i32, i32
  }
  func.func @transform_1(%arg0: i32) -> (i32, i32, i32, i32) {
    %c0_i32 = arith.constant 0 : i32
    %c0_i32_0 = arith.constant 0 : i32
    %c0_i32_1 = arith.constant 0 : i32
    %c0_i32_2 = arith.constant 0 : i32
    return %arg0, %c0_i32, %c0_i32_0, %c0_i32_1 : i32, i32, i32, i32
  }
  func.func @transform_2(%arg0: i32) -> (i32, i32, i32, i32) {
    %c0_i32 = arith.constant 0 : i32
    %c0_i32_0 = arith.constant 0 : i32
    %c0_i32_1 = arith.constant 0 : i32
    %c0_i32_2 = arith.constant 0 : i32
    return %arg0, %c0_i32, %c0_i32_0, %c0_i32_1 : i32, i32, i32, i32
  }
}

</mosaic_0001>

<llo_original>
// kernel: entry_encoder_forward.6
$region0: #{entry_encoder_forward.6}
  #allocation0 [shape = 'u32[]', space=smem, size = 0x4, offset = 0x4, fixed_abs, tag = 'smem constant byte address 0x4 - core index']
  #allocation1 [shape = 'u32[144,128]{1,0:T(1,128)}', space=vmem, size = 0x12000, scoped, tag = 'internal scratch']
  %s0 = inlined_call_operand.vmem [shape: bf16[1536,49], index: 0, kind: input, shape index: {}]
  %s1 = inlined_call_operand.vmem [shape: bf16[49,128], index: 1, kind: input, shape index: {}]
  %s2 = inlined_call_operand.vmem [shape: f32[2,2,128], index: 2, kind: output, shape index: {}]
  %s3 = sld [smem:[#allocation0]]
  $region41: #{entry_encoder_forward.6} parent=0
    _
  %s5 = ssub.s32 1, %s3
  %s6 = scalar_select 0, %s5, %s3
  loop: start=0, step=1, limit=4
  $region2: #{entry_encoder_forward.6} parent=0 // loop_pre_header
    _
  $region3: #{entry_encoder_forward.6} parent=0 // loop_header
    %s8 = sphi 0, %s12
    %p9 = scmp.ge.s32.totalorder %s8, 4
    %s18 = sphi 0, %s20
    %s21 = sphi 0, %s18
    %s22 = sphi 0, %s21
    %s38 = sphi 0, %s22
    %s42 = sphi 0, %s42
    %s44 = sphi 0, %s42
    %s45 = sphi 0, %s44
    %s59 = sphi 0, %s45
    %s65 = sphi 0, %s67
    %s68 = sphi 0, %s65
    %s69 = sphi 0, %s68
    %s85 = sphi 0, %s69
  $region4: #{entry_encoder_forward.6} parent=0 // loop_header_branch
    %11 = sbr.rel (%p9) target = $region8
  $region5: #{entry_encoder_forward.6} parent=0 // loop_body
    %s13 = ssub.s32 %s8, 1
    %s14 = ssub.s32 %s8, 2
    %s15 = sadd.s32 %s8, 1
    %s16 = ssub.s32 %s8, %s15
    %p17 = scmp.eq.s32.totalorder %s16, 0
    %s19 = sadd.s32 %s18, 1
    %s20 = scalar_select %p17, %s18, %s19
    %p23 = pneg %p17
    %p24 = scmp.eq.s32.totalorder %s8, 1
    %p25 = por %p23, %p24
    %p26 = scmp.ne.s32.totalorder %s18, %s21
    %p27 = scmp.eq.s32.totalorder %s8, 0
    %p28 = por %p26, %p27
    %p29 = scmp.ne.s32.totalorder %s18, %s21
    %p30 = scmp.eq.s32.totalorder %s13, 1
    %p31 = por %p29, %p30
    %p32 = scmp.ne.s32.totalorder %s21, %s22
    %p33 = scmp.eq.s32.totalorder %s13, 0
    %p34 = por %p32, %p33
    %p35 = scmp.ne.s32.totalorder %s21, %s22
    %p36 = scmp.eq.s32.totalorder %s14, 1
    %p37 = por %p35, %p36
    %p39 = scmp.ne.s32.totalorder %s22, %s38
    %p40 = scmp.eq.s32.totalorder %s14, 0
    %p41 = por %p39, %p40
    %s43 = sadd.s32 %s42, 1
    %p46 = scmp.eq.s32.totalorder %s8, 1
    %p47 = scmp.ne.s32.totalorder %s42, %s44
    %p48 = scmp.eq.s32.totalorder %s8, 0
    %p49 = por %p47, %p48
    %p50 = scmp.ne.s32.totalorder %s42, %s44
    %p51 = scmp.eq.s32.totalorder %s13, 1
    %p52 = por %p50, %p51
    %p53 = scmp.ne.s32.totalorder %s44, %s45
    %p54 = scmp.eq.s32.totalorder %s13, 0
    %p55 = por %p53, %p54
    %p56 = scmp.ne.s32.totalorder %s44, %s45
    %p57 = scmp.eq.s32.totalorder %s14, 1
    %p58 = por %p56, %p57
    %p60 = scmp.ne.s32.totalorder %s45, %s59
    %p61 = scmp.eq.s32.totalorder %s14, 0
    %p62 = por %p60, %p61
    %s63 = ssub.s32 %s8, %s15
    %p64 = scmp.eq.s32.totalorder %s63, 0
    %s66 = sadd.s32 %s65, 1
    %s67 = scalar_select %p64, %s65, %s66
    %p70 = pneg %p64
    %p71 = scmp.eq.s32.totalorder %s8, 1
    %p72 = por %p70, %p71
    %p73 = scmp.ne.s32.totalorder %s65, %s68
    %p74 = scmp.eq.s32.totalorder %s8, 0
    %p75 = por %p73, %p74
    %p76 = scmp.ne.s32.totalorder %s65, %s68
    %p77 = scmp.eq.s32.totalorder %s13, 1
    %p78 = por %p76, %p77
    %p79 = scmp.ne.s32.totalorder %s68, %s69
    %p80 = scmp.eq.s32.totalorder %s13, 0
    %p81 = por %p79, %p80
    %p82 = scmp.ne.s32.totalorder %s68, %s69
    %p83 = scmp.eq.s32.totalorder %s14, 1
    %p84 = por %p82, %p83
    %p86 = scmp.ne.s32.totalorder %s69, %s85
    %p87 = scmp.eq.s32.totalorder %s14, 0
    %p88 = por %p86, %p87
    %p89 = scmp.le.s32.totalorder 1, %s8
    %p90 = scmp.lt.s32.totalorder %s8, 3
    %p91 = pnand %p89, %p90
    %p92 = pneg %p91
    // Predicated region
    $region9: #{entry_encoder_forward.6} parent=5 // pred_check
      _
    $region10: #{entry_encoder_forward.6} parent=5 // pred_check_branch
      %94 = sbr.rel (%p91) target = $region12
    $region11: #{entry_encoder_forward.6} parent=5 // pred_region
      %s95 = ssub.s32 %s8, 1
      // Predicated region
      $region13: #{entry_encoder_forward.6} parent=11 // pred_check
        %p96 = pneg %p55
      $region14: #{entry_encoder_forward.6} parent=11 // pred_check_branch
        %98 = sbr.rel (%p96) target = $region16
      $region15: #{entry_encoder_forward.6} parent=11 // pred_region
        _
      $region16: #{entry_encoder_forward.6} parent=11 // pred_fallthru
        _
    $region12: #{entry_encoder_forward.6} parent=5 // pred_fallthru
      _
    %p99 = scmp.lt.s32.totalorder %s8, 2
    // Predicated region
    $region17: #{entry_encoder_forward.6} parent=5 // pred_check
      %p100 = pneg %p99
    $region18: #{entry_encoder_forward.6} parent=5 // pred_check_branch
      %102 = sbr.rel (%p100) target = $region20
    $region19: #{entry_encoder_forward.6} parent=5 // pred_region
      // Predicated region
      $region21: #{entry_encoder_forward.6} parent=19 // pred_check
        %p103 = pneg %p28
      $region22: #{entry_encoder_forward.6} parent=19 // pred_check_branch
        %105 = sbr.rel (%p103) target = $region24
      $region23: #{entry_encoder_forward.6} parent=19 // pred_region
        %s106 = smul.u32 96, %s8
        %p107 = scmp.lt.s32.totalorder %s106, 191
        %s108 = scalar_select %p107, %s106, 191
        %s109 = smul.addr %s108, 4
        %s110 = scalar_lea.vmem %s0, %s109
        %s111 = smul.u32 96, %s8
      $region24: #{entry_encoder_forward.6} parent=19 // pred_fallthru
        _
    $region20: #{entry_encoder_forward.6} parent=5 // pred_fallthru
      _
    %p112 = scmp.le.s32.totalorder 1, %s8
    %p113 = scmp.lt.s32.totalorder %s8, 3
    %p114 = pnand %p112, %p113
    %p115 = pneg %p114
    // Predicated region
    $region25: #{entry_encoder_forward.6} parent=5 // pred_check
      _
    $region26: #{entry_encoder_forward.6} parent=5 // pred_check_branch
      %117 = sbr.rel (%p114) target = $region28
    $region27: #{entry_encoder_forward.6} parent=5 // pred_region
      %s118 = ssub.s32 %s8, 1
      %s119 = smul.u32 96, %s13
      %p120 = scmp.lt.s32.totalorder %s119, 191
      %s121 = scalar_select %p120, %s119, 191
      %s122 = smul.addr %s121, 4
      %s123 = scalar_lea.vmem %s0, %s122
      %p124 = pneg %p34
      %p125 = pneg %p31
      %p126 = pneg %p55
      %p127 = pneg %p52
      %p128 = pneg %p81
      %p129 = pneg %p78
      %p130 = scmp.lt.s32.totalorder %s13, 1
      %s131 = scalar_select %p130, %s13, 1
      %s132 = smul.addr %s131, 2
      %s133 = scalar_lea.vmem %s2, %s132
      %s134 = smul.u32 96, %s13
      %p135 = scmp.lt.s32.totalorder %s134, 191
      %s136 = scalar_select %p135, %s134, 191
      %s137 = smul.addr %s136, 4
      %s138 = scalar_lea.vmem %s0, %s137
      %s139 = smul.u32 96, %s13
      %p140 = scmp.lt.s32.totalorder %s13, 1
      %s141 = scalar_select %p140, %s13, 1
      %s142 = smul.addr %s141, 2
      %s143 = scalar_lea.vmem %s2, %s142
      %v145 = vld [vmem:[%s138] sm:$0xf]
      %v146 = vld [vmem:[%s138 + $0x4] sm:$0xf]
      %v147 = vld [vmem:[%s138 + $0x8] sm:$0xf]
      %v148 = vld [vmem:[%s138 + $0xc] sm:$0xf]
      %v149 = vld [vmem:[%s138 + $0x10] sm:$0xf]
      %v150 = vld [vmem:[%s138 + $0x14] sm:$0xf]
      %v151 = vld [vmem:[%s138 + $0x18] sm:$0xf]
      %v152 = vld [vmem:[%s138 + $0x1c] sm:$0xf]
      %v153 = vld [vmem:[%s138 + $0x20] sm:$0xf]
      %v154 = vld [vmem:[%s138 + $0x24] sm:$0xf]
      %v155 = vld [vmem:[%s138 + $0x28] sm:$0xf]
      %v156 = vld [vmem:[%s138 + $0x2c] sm:$0xf]
      %v157 = vld [vmem:[%s138 + $0x30] sm:$0xf]
      %v158 = vld [vmem:[%s138 + $0x34] sm:$0xf]
      %v159 = vld [vmem:[%s138 + $0x38] sm:$0xf]
      %v160 = vld [vmem:[%s138 + $0x3c] sm:$0xf]
      %v161 = vld [vmem:[%s138 + $0x40] sm:$0xf]
      %v162 = vld [vmem:[%s138 + $0x44] sm:$0xf]
      %v163 = vld [vmem:[%s138 + $0x48] sm:$0xf]
      %v164 = vld [vmem:[%s138 + $0x4c] sm:$0xf]
      %v165 = vld [vmem:[%s138 + $0x50] sm:$0xf]
      %v166 = vld [vmem:[%s138 + $0x54] sm:$0xf]
      %v167 = vld [vmem:[%s138 + $0x58] sm:$0xf]
      %v168 = vld [vmem:[%s138 + $0x5c] sm:$0xf]
      %v169 = vld [vmem:[%s138 + $0x60] sm:$0xf]
      %v170 = vld [vmem:[%s138 + $0x64] sm:$0xf]
      %v171 = vld [vmem:[%s138 + $0x68] sm:$0xf]
      %v172 = vld [vmem:[%s138 + $0x6c] sm:$0xf]
      %v173 = vld [vmem:[%s138 + $0x70] sm:$0xf]
      %v174 = vld [vmem:[%s138 + $0x74] sm:$0xf]
      %v175 = vld [vmem:[%s138 + $0x78] sm:$0xf]
      %v176 = vld [vmem:[%s138 + $0x7c] sm:$0xf]
      %v177 = vld [vmem:[%s138 + $0x80] sm:$0xf]
      %v178 = vld [vmem:[%s138 + $0x84] sm:$0xf]
      %v179 = vld [vmem:[%s138 + $0x88] sm:$0xf]
      %v180 = vld [vmem:[%s138 + $0x8c] sm:$0xf]
      %v181 = vld [vmem:[%s138 + $0x90] sm:$0xf]
      %v182 = vld [vmem:[%s138 + $0x94] sm:$0xf]
      %v183 = vld [vmem:[%s138 + $0x98] sm:$0xf]
      %v184 = vld [vmem:[%s138 + $0x9c] sm:$0xf]
      %v185 = vld [vmem:[%s138 + $0xa0] sm:$0xf]
      %v186 = vld [vmem:[%s138 + $0xa4] sm:$0xf]
      %v187 = vld [vmem:[%s138 + $0xa8] sm:$0xf]
      %v188 = vld [vmem:[%s138 + $0xac] sm:$0xf]
      %v189 = vld [vmem:[%s138 + $0xb0] sm:$0xf]
      %v190 = vld [vmem:[%s138 + $0xb4] sm:$0xf]
      %v191 = vld [vmem:[%s138 + $0xb8] sm:$0xf]
      %v192 = vld [vmem:[%s138 + $0xbc] sm:$0xf]
      %v193 = vld [vmem:[%s138 + $0xc0] sm:$0xf]
      %v194 = vld [vmem:[%s138 + $0xc4] sm:$0xf]
      %v195 = vld [vmem:[%s138 + $0xc8] sm:$0xf]
      %v196 = vld [vmem:[%s138 + $0xcc] sm:$0xf]
      %v197 = vld [vmem:[%s138 + $0xd0] sm:$0xf]
      %v198 = vld [vmem:[%s138 + $0xd4] sm:$0xf]
      %v199 = vld [vmem:[%s138 + $0xd8] sm:$0xf]
      %v200 = vld [vmem:[%s138 + $0xdc] sm:$0xf]
      %v201 = vld [vmem:[%s138 + $0xe0] sm:$0xf]
      %v202 = vld [vmem:[%s138 + $0xe4] sm:$0xf]
      %v203 = vld [vmem:[%s138 + $0xe8] sm:$0xf]
      %v204 = vld [vmem:[%s138 + $0xec] sm:$0xf]
      %v205 = vld [vmem:[%s138 + $0xf0] sm:$0xf]
      %v206 = vld [vmem:[%s138 + $0xf4] sm:$0xf]
      %v207 = vld [vmem:[%s138 + $0xf8] sm:$0xf]
      %v208 = vld [vmem:[%s138 + $0xfc] sm:$0xf]
      %v209 = vld [vmem:[%s138 + $0x100] sm:$0xf]
      %v210 = vld [vmem:[%s138 + $0x104] sm:$0xf]
      %v211 = vld [vmem:[%s138 + $0x108] sm:$0xf]
      %v212 = vld [vmem:[%s138 + $0x10c] sm:$0xf]
      %v213 = vld [vmem:[%s138 + $0x110] sm:$0xf]
      %v214 = vld [vmem:[%s138 + $0x114] sm:$0xf]
      %v215 = vld [vmem:[%s138 + $0x118] sm:$0xf]
      %v216 = vld [vmem:[%s138 + $0x11c] sm:$0xf]
      %v217 = vld [vmem:[%s138 + $0x120] sm:$0xf]
      %v218 = vld [vmem:[%s138 + $0x124] sm:$0xf]
      %v219 = vld [vmem:[%s138 + $0x128] sm:$0xf]
      %v220 = vld [vmem:[%s138 + $0x12c] sm:$0xf]
      %v221 = vld [vmem:[%s138 + $0x130] sm:$0xf]
      %v222 = vld [vmem:[%s138 + $0x134] sm:$0xf]
      %v223 = vld [vmem:[%s138 + $0x138] sm:$0xf]
      %v224 = vld [vmem:[%s138 + $0x13c] sm:$0xf]
      %v225 = vld [vmem:[%s138 + $0x140] sm:$0xf]
      %v226 = vld [vmem:[%s138 + $0x144] sm:$0xf]
      %v227 = vld [vmem:[%s138 + $0x148] sm:$0xf]
      %v228 = vld [vmem:[%s138 + $0x14c] sm:$0xf]
      %v229 = vld [vmem:[%s138 + $0x150] sm:$0xf]
      %v230 = vld [vmem:[%s138 + $0x154] sm:$0xf]
      %v231 = vld [vmem:[%s138 + $0x158] sm:$0xf]
      %v232 = vld [vmem:[%s138 + $0x15c] sm:$0xf]
      %v233 = vld [vmem:[%s138 + $0x160] sm:$0xf]
      %v234 = vld [vmem:[%s138 + $0x164] sm:$0xf]
      %v235 = vld [vmem:[%s138 + $0x168] sm:$0xf]
      %v236 = vld [vmem:[%s138 + $0x16c] sm:$0xf]
      %v237 = vld [vmem:[%s138 + $0x170] sm:$0xf]
      %v238 = vld [vmem:[%s138 + $0x174] sm:$0xf]
      %v239 = vld [vmem:[%s138 + $0x178] sm:$0xf]
      %v240 = vld [vmem:[%s138 + $0x17c] sm:$0xf]
      %v241 = vld [vmem:[%s1] sm:$0xf]
      %v242 = vld [vmem:[%s1 + $0x4] sm:$0xf]
      %v243 = vld [vmem:[%s1 + $0x8] sm:$0xf]
      %v244 = vld [vmem:[%s1 + $0xc] sm:$0xf]
      %v245 = vld [vmem:[%s1 + $0x10] sm:$0xf]
      %v246 = vld [vmem:[%s1 + $0x14] sm:$0xf]
      %v247 = vld [vmem:[%s1 + $0x18] sm:$0x1]
      %v344 = vunpack.c.l.b16 %v145
      %v345 = vunpack.c.l.b16 %v146
      %v346 = vunpack.c.l.b16 %v147
      %v347 = vunpack.c.l.b16 %v148
      %v348 = vunpack.c.l.b16 %v149
      %v349 = vunpack.c.l.b16 %v150
      %v350 = vunpack.c.l.b16 %v151
      %v351 = vunpack.c.l.b16 %v152
      %v352 = vunpack.c.l.b16 %v153
      %v353 = vunpack.c.l.b16 %v154
      %v354 = vunpack.c.l.b16 %v155
      %v355 = vunpack.c.l.b16 %v156
      %v356 = vunpack.c.l.b16 %v157
      %v357 = vunpack.c.l.b16 %v158
      %v358 = vunpack.c.l.b16 %v159
      %v359 = vunpack.c.l.b16 %v160
      %v360 = vunpack.c.l.b16 %v161
      %v361 = vunpack.c.l.b16 %v162
      %v362 = vunpack.c.l.b16 %v163
      %v363 = vunpack.c.l.b16 %v164
      %v364 = vunpack.c.l.b16 %v165
      %v365 = vunpack.c.l.b16 %v166
      %v366 = vunpack.c.l.b16 %v167
      %v367 = vunpack.c.l.b16 %v168
      %v368 = vunpack.c.l.b16 %v169
      %v369 = vunpack.c.l.b16 %v170
      %v370 = vunpack.c.l.b16 %v171
      %v371 = vunpack.c.l.b16 %v172
      %v372 = vunpack.c.l.b16 %v173
      %v373 = vunpack.c.l.b16 %v174
      %v374 = vunpack.c.l.b16 %v175
      %v375 = vunpack.c.l.b16 %v176
      %v376 = vunpack.c.l.b16 %v177
      %v377 = vunpack.c.l.b16 %v178
      %v378 = vunpack.c.l.b16 %v179
      %v379 = vunpack.c.l.b16 %v180
      %v380 = vunpack.c.l.b16 %v181
      %v381 = vunpack.c.l.b16 %v182
      %v382 = vunpack.c.l.b16 %v183
      %v383 = vunpack.c.l.b16 %v184
      %v384 = vunpack.c.l.b16 %v185
      %v385 = vunpack.c.l.b16 %v186
      %v386 = vunpack.c.l.b16 %v187
      %v387 = vunpack.c.l.b16 %v188
      %v388 = vunpack.c.l.b16 %v189
      %v389 = vunpack.c.l.b16 %v190
      %v390 = vunpack.c.l.b16 %v191
      %v391 = vunpack.c.l.b16 %v192
      %v392 = vunpack.c.l.b16 %v193
      %v393 = vunpack.c.l.b16 %v194
      %v394 = vunpack.c.l.b16 %v195
      %v395 = vunpack.c.l.b16 %v196
      %v396 = vunpack.c.l.b16 %v197
      %v397 = vunpack.c.l.b16 %v198
      %v398 = vunpack.c.l.b16 %v199
      %v399 = vunpack.c.l.b16 %v200
      %v400 = vunpack.c.l.b16 %v201
      %v401 = vunpack.c.l.b16 %v202
      %v402 = vunpack.c.l.b16 %v203
      %v403 = vunpack.c.l.b16 %v204
      %v404 = vunpack.c.l.b16 %v205
      %v405 = vunpack.c.l.b16 %v206
      %v406 = vunpack.c.l.b16 %v207
      %v407 = vunpack.c.l.b16 %v208
      %v408 = vunpack.c.l.b16 %v209
      %v409 = vunpack.c.l.b16 %v210
      %v410 = vunpack.c.l.b16 %v211
      %v411 = vunpack.c.l.b16 %v212
      %v412 = vunpack.c.l.b16 %v213
      %v413 = vunpack.c.l.b16 %v214
      %v414 = vunpack.c.l.b16 %v215
      %v415 = vunpack.c.l.b16 %v216
      %v416 = vunpack.c.l.b16 %v217
      %v417 = vunpack.c.l.b16 %v218
      %v418 = vunpack.c.l.b16 %v219
      %v419 = vunpack.c.l.b16 %v220
      %v420 = vunpack.c.l.b16 %v221
      %v421 = vunpack.c.l.b16 %v222
      %v422 = vunpack.c.l.b16 %v223
      %v423 = vunpack.c.l.b16 %v224
      %v424 = vunpack.c.l.b16 %v225
      %v425 = vunpack.c.l.b16 %v226
      %v426 = vunpack.c.l.b16 %v227
      %v427 = vunpack.c.l.b16 %v228
      %v428 = vunpack.c.l.b16 %v229
      %v429 = vunpack.c.l.b16 %v230
      %v430 = vunpack.c.l.b16 %v231
      %v431 = vunpack.c.l.b16 %v232
      %v432 = vunpack.c.l.b16 %v233
      %v433 = vunpack.c.l.b16 %v234
      %v434 = vunpack.c.l.b16 %v235
      %v435 = vunpack.c.l.b16 %v236
      %v436 = vunpack.c.l.b16 %v237
      %v437 = vunpack.c.l.b16 %v238
      %v438 = vunpack.c.l.b16 %v239
      %v439 = vunpack.c.l.b16 %v240
      %v440 = vpack.c.b16 %v345, %v344
      %v441 = vpack.c.b16 %v347, %v346
      %v442 = vpack.c.b16 %v349, %v348
      %v443 = vpack.c.b16 %v351, %v350
      %v444 = vpack.c.b16 %v353, %v352
      %v445 = vpack.c.b16 %v355, %v354
      %v446 = vpack.c.b16 %v357, %v356
      %v447 = vpack.c.b16 %v359, %v358
      %v448 = vpack.c.b16 %v361, %v360
      %v449 = vpack.c.b16 %v363, %v362
      %v450 = vpack.c.b16 %v365, %v364
      %v451 = vpack.c.b16 %v367, %v366
      %v452 = vpack.c.b16 %v369, %v368
      %v453 = vpack.c.b16 %v371, %v370
      %v454 = vpack.c.b16 %v373, %v372
      %v455 = vpack.c.b16 %v375, %v374
      %v456 = vpack.c.b16 %v377, %v376
      %v457 = vpack.c.b16 %v379, %v378
      %v458 = vpack.c.b16 %v381, %v380
      %v459 = vpack.c.b16 %v383, %v382
      %v460 = vpack.c.b16 %v385, %v384
      %v461 = vpack.c.b16 %v387, %v386
      %v462 = vpack.c.b16 %v389, %v388
      %v463 = vpack.c.b16 %v391, %v390
      %v464 = vpack.c.b16 %v393, %v392
      %v465 = vpack.c.b16 %v395, %v394
      %v466 = vpack.c.b16 %v397, %v396
      %v467 = vpack.c.b16 %v399, %v398
      %v468 = vpack.c.b16 %v401, %v400
      %v469 = vpack.c.b16 %v403, %v402
      %v470 = vpack.c.b16 %v405, %v404
      %v471 = vpack.c.b16 %v407, %v406
      %v472 = vpack.c.b16 %v409, %v408
      %v473 = vpack.c.b16 %v411, %v410
      %v474 = vpack.c.b16 %v413, %v412
      %v475 = vpack.c.b16 %v415, %v414
      %v476 = vpack.c.b16 %v417, %v416
      %v477 = vpack.c.b16 %v419, %v418
      %v478 = vpack.c.b16 %v421, %v420
      %v479 = vpack.c.b16 %v423, %v422
      %v480 = vpack.c.b16 %v425, %v424
      %v481 = vpack.c.b16 %v427, %v426
      %v482 = vpack.c.b16 %v429, %v428
      %v483 = vpack.c.b16 %v431, %v430
      %v484 = vpack.c.b16 %v433, %v432
      %v485 = vpack.c.b16 %v435, %v434
      %v486 = vpack.c.b16 %v437, %v436
      %v487 = vpack.c.b16 %v439, %v438
      %v495 = vunpack.c.l.b16 %v241
      %v496 = vunpack.c.l.b16 %v242
      %v497 = vunpack.c.l.b16 %v243
      %v498 = vunpack.c.l.b16 %v244
      %v499 = vunpack.c.l.b16 %v245
      %v500 = vunpack.c.l.b16 %v246
      %v501 = vunpack.c.l.b16 %v247
      %v502 = vpack.c.b16 %v496, %v495
      %v503 = vpack.c.b16 %v498, %v497
      %v504 = vpack.c.b16 %v500, %v499
      %v505 = vpack.c.b16 %v501, %v501
      %vm509 = vcmask 400384
      %v511 = vsel %vm509, %v440, 0
      %v514 = vsel %vm509, %v441, 0
      %v517 = vsel %vm509, %v442, 0
      %v520 = vsel %vm509, %v443, 0
      %v523 = vsel %vm509, %v444, 0
      %v526 = vsel %vm509, %v445, 0
      %v529 = vsel %vm509, %v446, 0
      %v532 = vsel %vm509, %v447, 0
      %v535 = vsel %vm509, %v448, 0
      %v538 = vsel %vm509, %v449, 0
      %v541 = vsel %vm509, %v450, 0
      %v544 = vsel %vm509, %v451, 0
      %v547 = vsel %vm509, %v452, 0
      %v550 = vsel %vm509, %v453, 0
      %v553 = vsel %vm509, %v454, 0
      %v556 = vsel %vm509, %v455, 0
      %v559 = vsel %vm509, %v456, 0
      %v562 = vsel %vm509, %v457, 0
      %v565 = vsel %vm509, %v458, 0
      %v568 = vsel %vm509, %v459, 0
      %v571 = vsel %vm509, %v460, 0
      %v574 = vsel %vm509, %v461, 0
      %v577 = vsel %vm509, %v462, 0
      %v580 = vsel %vm509, %v463, 0
      %v583 = vsel %vm509, %v464, 0
      %v586 = vsel %vm509, %v465, 0
      %v589 = vsel %vm509, %v466, 0
      %v592 = vsel %vm509, %v467, 0
      %v595 = vsel %vm509, %v468, 0
      %v598 = vsel %vm509, %v469, 0
      %v601 = vsel %vm509, %v470, 0
      %v604 = vsel %vm509, %v471, 0
      %v607 = vsel %vm509, %v472, 0
      %v610 = vsel %vm509, %v473, 0
      %v613 = vsel %vm509, %v474, 0
      %v616 = vsel %vm509, %v475, 0
      %v619 = vsel %vm509, %v476, 0
      %v622 = vsel %vm509, %v477, 0
      %v625 = vsel %vm509, %v478, 0
      %v628 = vsel %vm509, %v479, 0
      %v631 = vsel %vm509, %v480, 0
      %v634 = vsel %vm509, %v481, 0
      %v637 = vsel %vm509, %v482, 0
      %v640 = vsel %vm509, %v483, 0
      %v643 = vsel %vm509, %v484, 0
      %v646 = vsel %vm509, %v485, 0
      %v649 = vsel %vm509, %v486, 0
      %v652 = vsel %vm509, %v487, 0
      %vm654 = vcmask 1040384
      %v655 = vsel 0, 4294967295, 65535
      %v656 = vsel %vm654, %v655, 0
      %v658 = vand.u32 %v505, %v656
      %660 = vmatprep.subr.bf16.mxu0 0
      %661 = vmatpush1.bf16.msra.mxu0 %v502
      %662 = vmatprep.subr.bf16.mxu0 0
      %663 = vmatpush1.bf16.msra.mxu0 %v503
      %664 = vmatprep.subr.bf16.mxu0 0
      %665 = vmatpush1.bf16.msra.mxu0 %v504
      %666 = vmatprep.subr.bf16.mxu0 0
      %667 = vmatpush1.bf16.msra.mxu0 %v658
      %668 = vmatprep.subr.bf16.mxu0 0
      %669 = vmatpush1.bf16.msra.mxu0 0
      %670 = vmatprep.subr.bf16.mxu0 0
      %671 = vmatpush1.bf16.msra.mxu0 0
      %672 = vmatprep.subr.bf16.mxu0 0
      %673 = vmatpush1.bf16.msra.mxu0 0
      %674 = vmatprep.subr.bf16.mxu0 0
      %675 = vmatpush1.bf16.msra.mxu0 0
      %676 = vmatprep.subr.bf16.mxu0 0
      %677 = vmatpush1.bf16.msra.mxu0 0
      %678 = vmatprep.subr.bf16.mxu0 0
      %679 = vmatpush1.bf16.msra.mxu0 0
      %680 = vmatprep.subr.bf16.mxu0 0
      %681 = vmatpush1.bf16.msra.mxu0 0
      %682 = vmatprep.subr.bf16.mxu0 0
      %683 = vmatpush1.bf16.msra.mxu0 0
      %684 = vmatprep.subr.bf16.mxu0 0
      %685 = vmatpush1.bf16.msra.mxu0 0
      %686 = vmatprep.subr.bf16.mxu0 0
      %687 = vmatpush1.bf16.msra.mxu0 0
      %688 = vmatprep.subr.bf16.mxu0 0
      %689 = vmatpush1.bf16.msra.mxu0 0
      %690 = vmatprep.subr.bf16.mxu0 0
      %691 = vmatpush1.bf16.msra.mxu0 0
      %692 = vmatprep.mubr.bf16.mxu0 0
      %693 = vmatmul.mubr.bf16.gmra.mrb[0].mxu0 %v511
      %v694 = vpop.f32.mrb[0].mxu0
      %v695 = vadd.f32 0.0, %v694
      %v696 = vpop.f32.mrb[0].mxu0
      %v697 = vpop.f32.mrb[0].mxu0
      %v698 = vadd.f32 0.0, %v697
      %v699 = vpop.f32.mrb[0].mxu0
      %700 = vmatprep.mubr.bf16.mxu0 0
      %701 = vmatmul.mubr.bf16.gmra.mrb[0].mxu0 %v514
      %v702 = vpop.f32.mrb[0].mxu0
      %v703 = vadd.f32 0.0, %v702
      %v704 = vpop.f32.mrb[0].mxu0
      %v705 = vpop.f32.mrb[0].mxu0
      %v706 = vadd.f32 0.0, %v705
      %v707 = vpop.f32.mrb[0].mxu0
      %708 = vmatprep.mubr.bf16.mxu0 0
      %709 = vmatmul.mubr.bf16.gmra.mrb[0].mxu0 %v517
      %v710 = vpop.f32.mrb[0].mxu0
      %v711 = vadd.f32 0.0, %v710
      %v712 = vpop.f32.mrb[0].mxu0
      %v713 = vpop.f32.mrb[0].mxu0
      %v714 = vadd.f32 0.0, %v713
      %v715 = vpop.f32.mrb[0].mxu0
      %716 = vmatprep.mubr.bf16.mxu0 0
      %717 = vmatmul.mubr.bf16.gmra.mrb[0].mxu0 %v520
      %v718 = vpop.f32.mrb[0].mxu0
      %v719 = vadd.f32 0.0, %v718
      %v720 = vpop.f32.mrb[0].mxu0
      %v721 = vpop.f32.mrb[0].mxu0
      %v722 = vadd.f32 0.0, %v721
      %v723 = vpop.f32.mrb[0].mxu0
      %724 = vmatprep.mubr.bf16.mxu0 0
      %725 = vmatmul.mubr.bf16.gmra.mrb[0].mxu0 %v523
      %v726 = vpop.f32.mrb[0].mxu0
      %v727 = vadd.f32 0.0, %v726
      %v728 = vpop.f32.mrb[0].mxu0
      %v729 = vpop.f32.mrb[0].mxu0
      %v730 = vadd.f32 0.0, %v729
      %v731 = vpop.f32.mrb[0].mxu0
      %732 = vmatprep.mubr.bf16.mxu0 0
      %733 = vmatmul.mubr.bf16.gmra.mrb[0].mxu0 %v526
      %v734 = vpop.f32.mrb[0].mxu0
      %v735 = vadd.f32 0.0, %v734
      %v736 = vpop.f32.mrb[0].mxu0
      %v737 = vpop.f32.mrb[0].mxu0
      %v738 = vadd.f32 0.0, %v737
      %v739 = vpop.f32.mrb[0].mxu0
      %740 = vmatprep.mubr.bf16.mxu0 0
      %741 = vmatmul.mubr.bf16.gmra.mrb[0].mxu0 %v529
      %v742 = vpop.f32.mrb[0].mxu0
      %v743 = vadd.f32 0.0, %v742
      %v744 = vpop.f32.mrb[0].mxu0
      %v745 = vpop.f32.mrb[0].mxu0
      %v746 = vadd.f32 0.0, %v745
      %v747 = vpop.f32.mrb[0].mxu0
      %748 = vmatprep.mubr.bf16.mxu0 0
      %749 = vmatmul.mubr.bf16.gmra.mrb[0].mxu0 %v532
      %v750 = vpop.f32.mrb[0].mxu0
      %v751 = vadd.f32 0.0, %v750
      %v752 = vpop.f32.mrb[0].mxu0
      %v753 = vpop.f32.mrb[0].mxu0
      %v754 = vadd.f32 0.0, %v753
      %v755 = vpop.f32.mrb[0].mxu0
      %756 = vmatprep.mubr.bf16.mxu0 0
      %757 = vmatmul.mubr.bf16.gmra.mrb[0].mxu0 %v535
      %v758 = vpop.f32.mrb[0].mxu0
      %v759 = vadd.f32 0.0, %v758
      %v760 = vpop.f32.mrb[0].mxu0
      %v761 = vpop.f32.mrb[0].mxu0
      %v762 = vadd.f32 0.0, %v761
      %v763 = vpop.f32.mrb[0].mxu0
      %764 = vmatprep.mubr.bf16.mxu0 0
      %765 = vmatmul.mubr.bf16.gmra.mrb[0].mxu0 %v538
      %v766 = vpop.f32.mrb[0].mxu0
      %v767 = vadd.f32 0.0, %v766
      %v768 = vpop.f32.mrb[0].mxu0
      %v769 = vpop.f32.mrb[0].mxu0
      %v770 = vadd.f32 0.0, %v769
      %v771 = vpop.f32.mrb[0].mxu0
      %772 = vmatprep.mubr.bf16.mxu0 0
      %773 = vmatmul.mubr.bf16.gmra.mrb[0].mxu0 %v541
      %v774 = vpop.f32.mrb[0].mxu0
      %v775 = vadd.f32 0.0, %v774
      %v776 = vpop.f32.mrb[0].mxu0
      %v777 = vpop.f32.mrb[0].mxu0
      %v778 = vadd.f32 0.0, %v777
      %v779 = vpop.f32.mrb[0].mxu0
      %780 = vmatprep.mubr.bf16.mxu0 0
      %781 = vmatmul.mubr.bf16.gmra.mrb[0].mxu0 %v544
      %v782 = vpop.f32.mrb[0].mxu0
      %v783 = vadd.f32 0.0, %v782
      %v784 = vpop.f32.mrb[0].mxu0
      %v785 = vpop.f32.mrb[0].mxu0
      %v786 = vadd.f32 0.0, %v785
      %v787 = vpop.f32.mrb[0].mxu0
      %788 = vmatprep.mubr.bf16.mxu0 0
      %789 = vmatmul.mubr.bf16.gmra.mrb[0].mxu0 %v547
      %v790 = vpop.f32.mrb[0].mxu0
      %v791 = vadd.f32 0.0, %v790
      %v792 = vpop.f32.mrb[0].mxu0
      %v793 = vpop.f32.mrb[0].mxu0
      %v794 = vadd.f32 0.0, %v793
      %v795 = vpop.f32.mrb[0].mxu0
      %796 = vmatprep.mubr.bf16.mxu0 0
      %797 = vmatmul.mubr.bf16.gmra.mrb[0].mxu0 %v550
      %v798 = vpop.f32.mrb[0].mxu0
      %v799 = vadd.f32 0.0, %v798
      %v800 = vpop.f32.mrb[0].mxu0
      %v801 = vpop.f32.mrb[0].mxu0
      %v802 = vadd.f32 0.0, %v801
      %v803 = vpop.f32.mrb[0].mxu0
      %804 = vmatprep.mubr.bf16.mxu0 0
      %805 = vmatmul.mubr.bf16.gmra.mrb[0].mxu0 %v553
      %v806 = vpop.f32.mrb[0].mxu0
      %v807 = vadd.f32 0.0, %v806
      %v808 = vpop.f32.mrb[0].mxu0
      %v809 = vpop.f32.mrb[0].mxu0
      %v810 = vadd.f32 0.0, %v809
      %v811 = vpop.f32.mrb[0].mxu0
      %812 = vmatprep.mubr.bf16.mxu0 0
      %813 = vmatmul.mubr.bf16.gmra.mrb[0].mxu0 %v556
      %v814 = vpop.f32.mrb[0].mxu0
      %v815 = vadd.f32 0.0, %v814
      %v816 = vpop.f32.mrb[0].mxu0
      %v817 = vpop.f32.mrb[0].mxu0
      %v818 = vadd.f32 0.0, %v817
      %v819 = vpop.f32.mrb[0].mxu0
      %820 = vmatprep.mubr.bf16.mxu0 0
      %821 = vmatmul.mubr.bf16.gmra.mrb[0].mxu0 %v559
      %v822 = vpop.f32.mrb[0].mxu0
      %v823 = vadd.f32 0.0, %v822
      %v824 = vpop.f32.mrb[0].mxu0
      %v825 = vpop.f32.mrb[0].mxu0
      %v826 = vadd.f32 0.0, %v825
      %v827 = vpop.f32.mrb[0].mxu0
      %828 = vmatprep.mubr.bf16.mxu0 0
      %829 = vmatmul.mubr.bf16.gmra.mrb[0].mxu0 %v562
      %v830 = vpop.f32.mrb[0].mxu0
      %v831 = vadd.f32 0.0, %v830
      %v832 = vpop.f32.mrb[0].mxu0
      %v833 = vpop.f32.mrb[0].mxu0
      %v834 = vadd.f32 0.0, %v833
      %v835 = vpop.f32.mrb[0].mxu0
      %836 = vmatprep.mubr.bf16.mxu0 0
      %837 = vmatmul.mubr.bf16.gmra.mrb[0].mxu0 %v565
      %v838 = vpop.f32.mrb[0].mxu0
      %v839 = vadd.f32 0.0, %v838
      %v840 = vpop.f32.mrb[0].mxu0
      %v841 = vpop.f32.mrb[0].mxu0
      %v842 = vadd.f32 0.0, %v841
      %v843 = vpop.f32.mrb[0].mxu0
      %844 = vmatprep.mubr.bf16.mxu0 0
      %845 = vmatmul.mubr.bf16.gmra.mrb[0].mxu0 %v568
      %v846 = vpop.f32.mrb[0].mxu0
      %v847 = vadd.f32 0.0, %v846
      %v848 = vpop.f32.mrb[0].mxu0
      %v849 = vpop.f32.mrb[0].mxu0
      %v850 = vadd.f32 0.0, %v849
      %v851 = vpop.f32.mrb[0].mxu0
      %852 = vmatprep.mubr.bf16.mxu0 0
      %853 = vmatmul.mubr.bf16.gmra.mrb[0].mxu0 %v571
      %v854 = vpop.f32.mrb[0].mxu0
      %v855 = vadd.f32 0.0, %v854
      %v856 = vpop.f32.mrb[0].mxu0
      %v857 = vpop.f32.mrb[0].mxu0
      %v858 = vadd.f32 0.0, %v857
      %v859 = vpop.f32.mrb[0].mxu0
      %860 = vmatprep.mubr.bf16.mxu0 0
      %861 = vmatmul.mubr.bf16.gmra.mrb[0].mxu0 %v574
      %v862 = vpop.f32.mrb[0].mxu0
      %v863 = vadd.f32 0.0, %v862
      %v864 = vpop.f32.mrb[0].mxu0
      %v865 = vpop.f32.mrb[0].mxu0
      %v866 = vadd.f32 0.0, %v865
      %v867 = vpop.f32.mrb[0].mxu0
      %868 = vmatprep.mubr.bf16.mxu0 0
      %869 = vmatmul.mubr.bf16.gmra.mrb[0].mxu0 %v577
      %v870 = vpop.f32.mrb[0].mxu0
      %v871 = vadd.f32 0.0, %v870
      %v872 = vpop.f32.mrb[0].mxu0
      %v873 = vpop.f32.mrb[0].mxu0
      %v874 = vadd.f32 0.0, %v873
      %v875 = vpop.f32.mrb[0].mxu0
      %876 = vmatprep.mubr.bf16.mxu0 0
      %877 = vmatmul.mubr.bf16.gmra.mrb[0].mxu0 %v580
      %v878 = vpop.f32.mrb[0].mxu0
      %v879 = vadd.f32 0.0, %v878
      %v880 = vpop.f32.mrb[0].mxu0
      %v881 = vpop.f32.mrb[0].mxu0
      %v882 = vadd.f32 0.0, %v881
      %v883 = vpop.f32.mrb[0].mxu0
      %884 = vmatprep.mubr.bf16.mxu0 0
      %885 = vmatmul.mubr.bf16.gmra.mrb[0].mxu0 %v583
      %v886 = vpop.f32.mrb[0].mxu0
      %v887 = vadd.f32 0.0, %v886
      %v888 = vpop.f32.mrb[0].mxu0
      %v889 = vpop.f32.mrb[0].mxu0
      %v890 = vadd.f32 0.0, %v889
      %v891 = vpop.f32.mrb[0].mxu0
      %892 = vmatprep.mubr.bf16.mxu0 0
      %893 = vmatmul.mubr.bf16.gmra.mrb[0].mxu0 %v586
      %v894 = vpop.f32.mrb[0].mxu0
      %v895 = vadd.f32 0.0, %v894
      %v896 = vpop.f32.mrb[0].mxu0
      %v897 = vpop.f32.mrb[0].mxu0
      %v898 = vadd.f32 0.0, %v897
      %v899 = vpop.f32.mrb[0].mxu0
      %900 = vmatprep.mubr.bf16.mxu0 0
      %901 = vmatmul.mubr.bf16.gmra.mrb[0].mxu0 %v589
      %v902 = vpop.f32.mrb[0].mxu0
      %v903 = vadd.f32 0.0, %v902
      %v904 = vpop.f32.mrb[0].mxu0
      %v905 = vpop.f32.mrb[0].mxu0
      %v906 = vadd.f32 0.0, %v905
      %v907 = vpop.f32.mrb[0].mxu0
      %908 = vmatprep.mubr.bf16.mxu0 0
      %909 = vmatmul.mubr.bf16.gmra.mrb[0].mxu0 %v592
      %v910 = vpop.f32.mrb[0].mxu0
      %v911 = vadd.f32 0.0, %v910
      %v912 = vpop.f32.mrb[0].mxu0
      %v913 = vpop.f32.mrb[0].mxu0
      %v914 = vadd.f32 0.0, %v913
      %v915 = vpop.f32.mrb[0].mxu0
      %916 = vmatprep.mubr.bf16.mxu0 0
      %917 = vmatmul.mubr.bf16.gmra.mrb[0].mxu0 %v595
      %v918 = vpop.f32.mrb[0].mxu0
      %v919 = vadd.f32 0.0, %v918
      %v920 = vpop.f32.mrb[0].mxu0
      %v921 = vpop.f32.mrb[0].mxu0
      %v922 = vadd.f32 0.0, %v921
      %v923 = vpop.f32.mrb[0].mxu0
      %924 = vmatprep.mubr.bf16.mxu0 0
      %925 = vmatmul.mubr.bf16.gmra.mrb[0].mxu0 %v598
      %v926 = vpop.f32.mrb[0].mxu0
      %v927 = vadd.f32 0.0, %v926
      %v928 = vpop.f32.mrb[0].mxu0
      %v929 = vpop.f32.mrb[0].mxu0
      %v930 = vadd.f32 0.0, %v929
      %v931 = vpop.f32.mrb[0].mxu0
      %932 = vmatprep.mubr.bf16.mxu0 0
      %933 = vmatmul.mubr.bf16.gmra.mrb[0].mxu0 %v601
      %v934 = vpop.f32.mrb[0].mxu0
      %v935 = vadd.f32 0.0, %v934
      %v936 = vpop.f32.mrb[0].mxu0
      %v937 = vpop.f32.mrb[0].mxu0
      %v938 = vadd.f32 0.0, %v937
      %v939 = vpop.f32.mrb[0].mxu0
      %940 = vmatprep.mubr.bf16.mxu0 0
      %941 = vmatmul.mubr.bf16.gmra.mrb[0].mxu0 %v604
      %v942 = vpop.f32.mrb[0].mxu0
      %v943 = vadd.f32 0.0, %v942
      %v944 = vpop.f32.mrb[0].mxu0
      %v945 = vpop.f32.mrb[0].mxu0
      %v946 = vadd.f32 0.0, %v945
      %v947 = vpop.f32.mrb[0].mxu0
      %948 = vmatprep.mubr.bf16.mxu0 0
      %949 = vmatmul.mubr.bf16.gmra.mrb[0].mxu0 %v607
      %v950 = vpop.f32.mrb[0].mxu0
      %v951 = vadd.f32 0.0, %v950
      %v952 = vpop.f32.mrb[0].mxu0
      %v953 = vpop.f32.mrb[0].mxu0
      %v954 = vadd.f32 0.0, %v953
      %v955 = vpop.f32.mrb[0].mxu0
      %956 = vmatprep.mubr.bf16.mxu0 0
      %957 = vmatmul.mubr.bf16.gmra.mrb[0].mxu0 %v610
      %v958 = vpop.f32.mrb[0].mxu0
      %v959 = vadd.f32 0.0, %v958
      %v960 = vpop.f32.mrb[0].mxu0
      %v961 = vpop.f32.mrb[0].mxu0
      %v962 = vadd.f32 0.0, %v961
      %v963 = vpop.f32.mrb[0].mxu0
      %964 = vmatprep.mubr.bf16.mxu0 0
      %965 = vmatmul.mubr.bf16.gmra.mrb[0].mxu0 %v613
      %v966 = vpop.f32.mrb[0].mxu0
      %v967 = vadd.f32 0.0, %v966
      %v968 = vpop.f32.mrb[0].mxu0
      %v969 = vpop.f32.mrb[0].mxu0
      %v970 = vadd.f32 0.0, %v969
      %v971 = vpop.f32.mrb[0].mxu0
      %972 = vmatprep.mubr.bf16.mxu0 0
      %973 = vmatmul.mubr.bf16.gmra.mrb[0].mxu0 %v616
      %v974 = vpop.f32.mrb[0].mxu0
      %v975 = vadd.f32 0.0, %v974
      %v976 = vpop.f32.mrb[0].mxu0
      %v977 = vpop.f32.mrb[0].mxu0
      %v978 = vadd.f32 0.0, %v977
      %v979 = vpop.f32.mrb[0].mxu0
      %980 = vmatprep.mubr.bf16.mxu0 0
      %981 = vmatmul.mubr.bf16.gmra.mrb[0].mxu0 %v619
      %v982 = vpop.f32.mrb[0].mxu0
      %v983 = vadd.f32 0.0, %v982
      %v984 = vpop.f32.mrb[0].mxu0
      %v985 = vpop.f32.mrb[0].mxu0
      %v986 = vadd.f32 0.0, %v985
      %v987 = vpop.f32.mrb[0].mxu0
      %988 = vmatprep.mubr.bf16.mxu0 0
      %989 = vmatmul.mubr.bf16.gmra.mrb[0].mxu0 %v622
      %v990 = vpop.f32.mrb[0].mxu0
      %v991 = vadd.f32 0.0, %v990
      %v992 = vpop.f32.mrb[0].mxu0
      %v993 = vpop.f32.mrb[0].mxu0
      %v994 = vadd.f32 0.0, %v993
      %v995 = vpop.f32.mrb[0].mxu0
      %996 = vmatprep.mubr.bf16.mxu0 0
      %997 = vmatmul.mubr.bf16.gmra.mrb[0].mxu0 %v625
      %v998 = vpop.f32.mrb[0].mxu0
      %v999 = vadd.f32 0.0, %v998
      %v1000 = vpop.f32.mrb[0].mxu0
      %v1001 = vpop.f32.mrb[0].mxu0
      %v1002 = vadd.f32 0.0, %v1001
      %v1003 = vpop.f32.mrb[0].mxu0
      %1004 = vmatprep.mubr.bf16.mxu0 0
      %1005 = vmatmul.mubr.bf16.gmra.mrb[0].mxu0 %v628
      %v1006 = vpop.f32.mrb[0].mxu0
      %v1007 = vadd.f32 0.0, %v1006
      %v1008 = vpop.f32.mrb[0].mxu0
      %v1009 = vpop.f32.mrb[0].mxu0
      %v1010 = vadd.f32 0.0, %v1009
      %v1011 = vpop.f32.mrb[0].mxu0
      %1012 = vmatprep.mubr.bf16.mxu0 0
      %1013 = vmatmul.mubr.bf16.gmra.mrb[0].mxu0 %v631
      %v1014 = vpop.f32.mrb[0].mxu0
      %v1015 = vadd.f32 0.0, %v1014
      %v1016 = vpop.f32.mrb[0].mxu0
      %v1017 = vpop.f32.mrb[0].mxu0
      %v1018 = vadd.f32 0.0, %v1017
      %v1019 = vpop.f32.mrb[0].mxu0
      %1020 = vmatprep.mubr.bf16.mxu0 0
      %1021 = vmatmul.mubr.bf16.gmra.mrb[0].mxu0 %v634
      %v1022 = vpop.f32.mrb[0].mxu0
      %v1023 = vadd.f32 0.0, %v1022
      %v1024 = vpop.f32.mrb[0].mxu0
      %v1025 = vpop.f32.mrb[0].mxu0
      %v1026 = vadd.f32 0.0, %v1025
      %v1027 = vpop.f32.mrb[0].mxu0
      %1028 = vmatprep.mubr.bf16.mxu0 0
      %1029 = vmatmul.mubr.bf16.gmra.mrb[0].mxu0 %v637
      %v1030 = vpop.f32.mrb[0].mxu0
      %v1031 = vadd.f32 0.0, %v1030
      %v1032 = vpop.f32.mrb[0].mxu0
      %v1033 = vpop.f32.mrb[0].mxu0
      %v1034 = vadd.f32 0.0, %v1033
      %v1035 = vpop.f32.mrb[0].mxu0
      %1036 = vmatprep.mubr.bf16.mxu0 0
      %1037 = vmatmul.mubr.bf16.gmra.mrb[0].mxu0 %v640
      %v1038 = vpop.f32.mrb[0].mxu0
      %v1039 = vadd.f32 0.0, %v1038
      %v1040 = vpop.f32.mrb[0].mxu0
      %v1041 = vpop.f32.mrb[0].mxu0
      %v1042 = vadd.f32 0.0, %v1041
      %v1043 = vpop.f32.mrb[0].mxu0
      %1044 = vmatprep.mubr.bf16.mxu0 0
      %1045 = vmatmul.mubr.bf16.gmra.mrb[0].mxu0 %v643
      %v1046 = vpop.f32.mrb[0].mxu0
      %v1047 = vadd.f32 0.0, %v1046
      %v1048 = vpop.f32.mrb[0].mxu0
      %v1049 = vpop.f32.mrb[0].mxu0
      %v1050 = vadd.f32 0.0, %v1049
      %v1051 = vpop.f32.mrb[0].mxu0
      %1052 = vmatprep.mubr.bf16.mxu0 0
      %1053 = vmatmul.mubr.bf16.gmra.mrb[0].mxu0 %v646
      %v1054 = vpop.f32.mrb[0].mxu0
      %v1055 = vadd.f32 0.0, %v1054
      %v1056 = vpop.f32.mrb[0].mxu0
      %v1057 = vpop.f32.mrb[0].mxu0
      %v1058 = vadd.f32 0.0, %v1057
      %v1059 = vpop.f32.mrb[0].mxu0
      %1060 = vmatprep.mubr.bf16.mxu0 0
      %1061 = vmatmul.mubr.bf16.gmra.mrb[0].mxu0 %v649
      %v1062 = vpop.f32.mrb[0].mxu0
      %v1063 = vadd.f32 0.0, %v1062
      %v1064 = vpop.f32.mrb[0].mxu0
      %v1065 = vpop.f32.mrb[0].mxu0
      %v1066 = vadd.f32 0.0, %v1065
      %v1067 = vpop.f32.mrb[0].mxu0
      %1068 = vmatprep.mubr.bf16.mxu0 0
      %1069 = vmatmul.mubr.bf16.gmra.mrb[0].mxu0 %v652
      %v1070 = vpop.f32.mrb[0].mxu0
      %v1071 = vadd.f32 0.0, %v1070
      %v1072 = vpop.f32.mrb[0].mxu0
      %v1073 = vpop.f32.mrb[0].mxu0
      %v1074 = vadd.f32 0.0, %v1073
      %v1075 = vpop.f32.mrb[0].mxu0
      %1076 = vdwg.mxu0
      %v1077 = vadd.f32 %v695, %v698
      %v1078 = vadd.f32 %v1077, %v703
      %v1079 = vadd.f32 %v1078, %v706
      %v1080 = vadd.f32 %v1079, %v711
      %v1081 = vadd.f32 %v1080, %v714
      %v1082 = vadd.f32 %v1081, %v719
      %v1083 = vadd.f32 %v1082, %v722
      %v1084 = vadd.f32 %v1083, %v727
      %v1085 = vadd.f32 %v1084, %v730
      %v1086 = vadd.f32 %v1085, %v735
      %v1087 = vadd.f32 %v1086, %v738
      %v1088 = vadd.f32 %v1087, %v743
      %v1089 = vadd.f32 %v1088, %v746
      %v1090 = vadd.f32 %v1089, %v751
      %v1091 = vadd.f32 %v1090, %v754
      %v1092 = vadd.f32 %v1091, %v759
      %v1093 = vadd.f32 %v1092, %v762
      %v1094 = vadd.f32 %v1093, %v767
      %v1095 = vadd.f32 %v1094, %v770
      %v1096 = vadd.f32 %v1095, %v775
      %v1097 = vadd.f32 %v1096, %v778
      %v1098 = vadd.f32 %v1097, %v783
      %v1099 = vadd.f32 %v1098, %v786
      %v1100 = vadd.f32 %v1099, %v791
      %v1101 = vadd.f32 %v1100, %v794
      %v1102 = vadd.f32 %v1101, %v799
      %v1103 = vadd.f32 %v1102, %v802
      %v1104 = vadd.f32 %v1103, %v807
      %v1105 = vadd.f32 %v1104, %v810
      %v1106 = vadd.f32 %v1105, %v815
      %v1107 = vadd.f32 %v1106, %v818
      %v1108 = vadd.f32 %v1107, %v823
      %v1109 = vadd.f32 %v1108, %v826
      %v1110 = vadd.f32 %v1109, %v831
      %v1111 = vadd.f32 %v1110, %v834
      %v1112 = vadd.f32 %v1111, %v839
      %v1113 = vadd.f32 %v1112, %v842
      %v1114 = vadd.f32 %v1113, %v847
      %v1115 = vadd.f32 %v1114, %v850
      %v1116 = vadd.f32 %v1115, %v855
      %v1117 = vadd.f32 %v1116, %v858
      %v1118 = vadd.f32 %v1117, %v863
      %v1119 = vadd.f32 %v1118, %v866
      %v1120 = vadd.f32 %v1119, %v871
      %v1121 = vadd.f32 %v1120, %v874
      %v1122 = vadd.f32 %v1121, %v879
      %v1123 = vadd.f32 %v1122, %v882
      %v1124 = vadd.f32 %v1123, %v887
      %v1125 = vadd.f32 %v1124, %v890
      %v1126 = vadd.f32 %v1125, %v895
      %v1127 = vadd.f32 %v1126, %v898
      %v1128 = vadd.f32 %v1127, %v903
      %v1129 = vadd.f32 %v1128, %v906
      %v1130 = vadd.f32 %v1129, %v911
      %v1131 = vadd.f32 %v1130, %v914
      %v1132 = vadd.f32 %v1131, %v919
      %v1133 = vadd.f32 %v1132, %v922
      %v1134 = vadd.f32 %v1133, %v927
      %v1135 = vadd.f32 %v1134, %v930
      %v1136 = vadd.f32 %v1135, %v935
      %v1137 = vadd.f32 %v1136, %v938
      %v1138 = vadd.f32 %v1137, %v943
      %v1139 = vadd.f32 %v1138, %v946
      %v1140 = vadd.f32 %v1139, %v951
      %v1141 = vadd.f32 %v1140, %v954
      %v1142 = vadd.f32 %v1141, %v959
      %v1143 = vadd.f32 %v1142, %v962
      %v1144 = vadd.f32 %v1143, %v967
      %v1145 = vadd.f32 %v1144, %v970
      %v1146 = vadd.f32 %v1145, %v975
      %v1147 = vadd.f32 %v1146, %v978
      %v1148 = vadd.f32 %v1147, %v983
      %v1149 = vadd.f32 %v1148, %v986
      %v1150 = vadd.f32 %v1149, %v991
      %v1151 = vadd.f32 %v1150, %v994
      %v1152 = vadd.f32 %v1151, %v999
      %v1153 = vadd.f32 %v1152, %v1002
      %v1154 = vadd.f32 %v1153, %v1007
      %v1155 = vadd.f32 %v1154, %v1010
      %v1156 = vadd.f32 %v1155, %v1015
      %v1157 = vadd.f32 %v1156, %v1018
      %v1158 = vadd.f32 %v1157, %v1023
      %v1159 = vadd.f32 %v1158, %v1026
      %v1160 = vadd.f32 %v1159, %v1031
      %v1161 = vadd.f32 %v1160, %v1034
      %v1162 = vadd.f32 %v1161, %v1039
      %v1163 = vadd.f32 %v1162, %v1042
      %v1164 = vadd.f32 %v1163, %v1047
      %v1165 = vadd.f32 %v1164, %v1050
      %v1166 = vadd.f32 %v1165, %v1055
      %v1167 = vadd.f32 %v1166, %v1058
      %v1168 = vadd.f32 %v1167, %v1063
      %v1169 = vadd.f32 %v1168, %v1066
      %v1170 = vadd.f32 %v1169, %v1071
      %v1171 = vadd.f32 %v1170, %v1074
      %v1172 = vrot.slane %v1171, 4
      %v1173 = vadd.f32 %v1171, %v1172
      %v1174 = vrot.slane %v1173, 2
      %v1175 = vadd.f32 %v1173, %v1174
      %v1176 = vrot.slane %v1175, 1
      %v1177 = vadd.f32 %v1175, %v1176
      %1178 = vst [vmem:[%s143] sm:$0x1] %v1177
      %v1179 = vmul.f32 %v695, %v695
      %v1180 = vmul.f32 %v698, %v698
      %v1181 = vmul.f32 %v703, %v703
      %v1182 = vmul.f32 %v706, %v706
      %v1183 = vmul.f32 %v711, %v711
      %v1184 = vmul.f32 %v714, %v714
      %v1185 = vmul.f32 %v719, %v719
      %v1186 = vmul.f32 %v722, %v722
      %v1187 = vmul.f32 %v727, %v727
      %v1188 = vmul.f32 %v730, %v730
      %v1189 = vmul.f32 %v735, %v735
      %v1190 = vmul.f32 %v738, %v738
      %v1191 = vmul.f32 %v743, %v743
      %v1192 = vmul.f32 %v746, %v746
      %v1193 = vmul.f32 %v751, %v751
      %v1194 = vmul.f32 %v754, %v754
      %v1195 = vmul.f32 %v759, %v759
      %v1196 = vmul.f32 %v762, %v762
      %v1197 = vmul.f32 %v767, %v767
      %v1198 = vmul.f32 %v770, %v770
      %v1199 = vmul.f32 %v775, %v775
      %v1200 = vmul.f32 %v778, %v778
      %v1201 = vmul.f32 %v783, %v783
      %v1202 = vmul.f32 %v786, %v786
      %v1203 = vmul.f32 %v791, %v791
      %v1204 = vmul.f32 %v794, %v794
      %v1205 = vmul.f32 %v799, %v799
      %v1206 = vmul.f32 %v802, %v802
      %v1207 = vmul.f32 %v807, %v807
      %v1208 = vmul.f32 %v810, %v810
      %v1209 = vmul.f32 %v815, %v815
      %v1210 = vmul.f32 %v818, %v818
      %v1211 = vmul.f32 %v823, %v823
      %v1212 = vmul.f32 %v826, %v826
      %v1213 = vmul.f32 %v831, %v831
      %v1214 = vmul.f32 %v834, %v834
      %v1215 = vmul.f32 %v839, %v839
      %v1216 = vmul.f32 %v842, %v842
      %v1217 = vmul.f32 %v847, %v847
      %v1218 = vmul.f32 %v850, %v850
      %v1219 = vmul.f32 %v855, %v855
      %v1220 = vmul.f32 %v858, %v858
      %v1221 = vmul.f32 %v863, %v863
      %v1222 = vmul.f32 %v866, %v866
      %v1223 = vmul.f32 %v871, %v871
      %v1224 = vmul.f32 %v874, %v874
      %v1225 = vmul.f32 %v879, %v879
      %v1226 = vmul.f32 %v882, %v882
      %v1227 = vmul.f32 %v887, %v887
      %v1228 = vmul.f32 %v890, %v890
      %v1229 = vmul.f32 %v895, %v895
      %v1230 = vmul.f32 %v898, %v898
      %v1231 = vmul.f32 %v903, %v903
      %v1232 = vmul.f32 %v906, %v906
      %v1233 = vmul.f32 %v911, %v911
      %v1234 = vmul.f32 %v914, %v914
      %v1235 = vmul.f32 %v919, %v919
      %v1236 = vmul.f32 %v922, %v922
      %v1237 = vmul.f32 %v927, %v927
      %v1238 = vmul.f32 %v930, %v930
      %v1239 = vmul.f32 %v935, %v935
      %v1240 = vmul.f32 %v938, %v938
      %v1241 = vmul.f32 %v943, %v943
      %v1242 = vmul.f32 %v946, %v946
      %v1243 = vmul.f32 %v951, %v951
      %v1244 = vmul.f32 %v954, %v954
      %v1245 = vmul.f32 %v959, %v959
      %v1246 = vmul.f32 %v962, %v962
      %v1247 = vmul.f32 %v967, %v967
      %v1248 = vmul.f32 %v970, %v970
      %v1249 = vmul.f32 %v975, %v975
      %v1250 = vmul.f32 %v978, %v978
      %v1251 = vmul.f32 %v983, %v983
      %v1252 = vmul.f32 %v986, %v986
      %v1253 = vmul.f32 %v991, %v991
      %v1254 = vmul.f32 %v994, %v994
      %v1255 = vmul.f32 %v999, %v999
      %v1256 = vmul.f32 %v1002, %v1002
      %v1257 = vmul.f32 %v1007, %v1007
      %v1258 = vmul.f32 %v1010, %v1010
      %v1259 = vmul.f32 %v1015, %v1015
      %v1260 = vmul.f32 %v1018, %v1018
      %v1261 = vmul.f32 %v1023, %v1023
      %v1262 = vmul.f32 %v1026, %v1026
      %v1263 = vmul.f32 %v1031, %v1031
      %v1264 = vmul.f32 %v1034, %v1034
      %v1265 = vmul.f32 %v1039, %v1039
      %v1266 = vmul.f32 %v1042, %v1042
      %v1267 = vmul.f32 %v1047, %v1047
      %v1268 = vmul.f32 %v1050, %v1050
      %v1269 = vmul.f32 %v1055, %v1055
      %v1270 = vmul.f32 %v1058, %v1058
      %v1271 = vmul.f32 %v1063, %v1063
      %v1272 = vmul.f32 %v1066, %v1066
      %v1273 = vmul.f32 %v1071, %v1071
      %v1274 = vmul.f32 %v1074, %v1074
      %v1275 = vadd.f32 %v1179, %v1180
      %v1276 = vadd.f32 %v1275, %v1181
      %v1277 = vadd.f32 %v1276, %v1182
      %v1278 = vadd.f32 %v1277, %v1183
      %v1279 = vadd.f32 %v1278, %v1184
      %v1280 = vadd.f32 %v1279, %v1185
      %v1281 = vadd.f32 %v1280, %v1186
      %v1282 = vadd.f32 %v1281, %v1187
      %v1283 = vadd.f32 %v1282, %v1188
      %v1284 = vadd.f32 %v1283, %v1189
      %v1285 = vadd.f32 %v1284, %v1190
      %v1286 = vadd.f32 %v1285, %v1191
      %v1287 = vadd.f32 %v1286, %v1192
      %v1288 = vadd.f32 %v1287, %v1193
      %v1289 = vadd.f32 %v1288, %v1194
      %v1290 = vadd.f32 %v1289, %v1195
      %v1291 = vadd.f32 %v1290, %v1196
      %v1292 = vadd.f32 %v1291, %v1197
      %v1293 = vadd.f32 %v1292, %v1198
      %v1294 = vadd.f32 %v1293, %v1199
      %v1295 = vadd.f32 %v1294, %v1200
      %v1296 = vadd.f32 %v1295, %v1201
      %v1297 = vadd.f32 %v1296, %v1202
      %v1298 = vadd.f32 %v1297, %v1203
      %v1299 = vadd.f32 %v1298, %v1204
      %v1300 = vadd.f32 %v1299, %v1205
      %v1301 = vadd.f32 %v1300, %v1206
      %v1302 = vadd.f32 %v1301, %v1207
      %v1303 = vadd.f32 %v1302, %v1208
      %v1304 = vadd.f32 %v1303, %v1209
      %v1305 = vadd.f32 %v1304, %v1210
      %v1306 = vadd.f32 %v1305, %v1211
      %v1307 = vadd.f32 %v1306, %v1212
      %v1308 = vadd.f32 %v1307, %v1213
      %v1309 = vadd.f32 %v1308, %v1214
      %v1310 = vadd.f32 %v1309, %v1215
      %v1311 = vadd.f32 %v1310, %v1216
      %v1312 = vadd.f32 %v1311, %v1217
      %v1313 = vadd.f32 %v1312, %v1218
      %v1314 = vadd.f32 %v1313, %v1219
      %v1315 = vadd.f32 %v1314, %v1220
      %v1316 = vadd.f32 %v1315, %v1221
      %v1317 = vadd.f32 %v1316, %v1222
      %v1318 = vadd.f32 %v1317, %v1223
      %v1319 = vadd.f32 %v1318, %v1224
      %v1320 = vadd.f32 %v1319, %v1225
      %v1321 = vadd.f32 %v1320, %v1226
      %v1322 = vadd.f32 %v1321, %v1227
      %v1323 = vadd.f32 %v1322, %v1228
      %v1324 = vadd.f32 %v1323, %v1229
      %v1325 = vadd.f32 %v1324, %v1230
      %v1326 = vadd.f32 %v1325, %v1231
      %v1327 = vadd.f32 %v1326, %v1232
      %v1328 = vadd.f32 %v1327, %v1233
      %v1329 = vadd.f32 %v1328, %v1234
      %v1330 = vadd.f32 %v1329, %v1235
      %v1331 = vadd.f32 %v1330, %v1236
      %v1332 = vadd.f32 %v1331, %v1237
      %v1333 = vadd.f32 %v1332, %v1238
      %v1334 = vadd.f32 %v1333, %v1239
      %v1335 = vadd.f32 %v1334, %v1240
      %v1336 = vadd.f32 %v1335, %v1241
      %v1337 = vadd.f32 %v1336, %v1242
      %v1338 = vadd.f32 %v1337, %v1243
      %v1339 = vadd.f32 %v1338, %v1244
      %v1340 = vadd.f32 %v1339, %v1245
      %v1341 = vadd.f32 %v1340, %v1246
      %v1342 = vadd.f32 %v1341, %v1247
      %v1343 = vadd.f32 %v1342, %v1248
      %v1344 = vadd.f32 %v1343, %v1249
      %v1345 = vadd.f32 %v1344, %v1250
      %v1346 = vadd.f32 %v1345, %v1251
      %v1347 = vadd.f32 %v1346, %v1252
      %v1348 = vadd.f32 %v1347, %v1253
      %v1349 = vadd.f32 %v1348, %v1254
      %v1350 = vadd.f32 %v1349, %v1255
      %v1351 = vadd.f32 %v1350, %v1256
      %v1352 = vadd.f32 %v1351, %v1257
      %v1353 = vadd.f32 %v1352, %v1258
      %v1354 = vadd.f32 %v1353, %v1259
      %v1355 = vadd.f32 %v1354, %v1260
      %v1356 = vadd.f32 %v1355, %v1261
      %v1357 = vadd.f32 %v1356, %v1262
      %v1358 = vadd.f32 %v1357, %v1263
      %v1359 = vadd.f32 %v1358, %v1264
      %v1360 = vadd.f32 %v1359, %v1265
      %v1361 = vadd.f32 %v1360, %v1266
      %v1362 = vadd.f32 %v1361, %v1267
      %v1363 = vadd.f32 %v1362, %v1268
      %v1364 = vadd.f32 %v1363, %v1269
      %v1365 = vadd.f32 %v1364, %v1270
      %v1366 = vadd.f32 %v1365, %v1271
      %v1367 = vadd.f32 %v1366, %v1272
      %v1368 = vadd.f32 %v1367, %v1273
      %v1369 = vadd.f32 %v1368, %v1274
      %v1370 = vrot.slane %v1369, 4
      %v1371 = vadd.f32 %v1369, %v1370
      %v1372 = vrot.slane %v1371, 2
      %v1373 = vadd.f32 %v1371, %v1372
      %v1374 = vrot.slane %v1373, 1
      %v1375 = vadd.f32 %v1373, %v1374
      %1376 = vst [vmem:[%s143 + $0x1] sm:$0x1] %v1375
      %p1377 = scmp.lt.s32.totalorder %s13, 1
      %s1378 = scalar_select %p1377, %s13, 1
      %s1379 = smul.addr %s1378, 2
      %s1380 = scalar_lea.vmem %s2, %s1379
      // Predicated region
      $region29: #{entry_encoder_forward.6} parent=27 // pred_check
        %p1381 = pneg %p78
      $region30: #{entry_encoder_forward.6} parent=27 // pred_check_branch
        %1383 = sbr.rel (%p1381) target = $region32
      $region31: #{entry_encoder_forward.6} parent=27 // pred_region
        _
      $region32: #{entry_encoder_forward.6} parent=27 // pred_fallthru
        _
    $region28: #{entry_encoder_forward.6} parent=5 // pred_fallthru
      _
    %p1384 = scmp.le.s32.totalorder 2, %s8
    // Predicated region
    $region33: #{entry_encoder_forward.6} parent=5 // pred_check
      %p1385 = pneg %p1384
    $region34: #{entry_encoder_forward.6} parent=5 // pred_check_branch
      %1387 = sbr.rel (%p1385) target = $region36
    $region35: #{entry_encoder_forward.6} parent=5 // pred_region
      %s1388 = ssub.s32 %s8, 2
      // Predicated region
      $region37: #{entry_encoder_forward.6} parent=35 // pred_check
        %p1389 = pneg %p84
      $region38: #{entry_encoder_forward.6} parent=35 // pred_check_branch
        %1391 = sbr.rel (%p1389) target = $region40
      $region39: #{entry_encoder_forward.6} parent=35 // pred_region
        %p1392 = scmp.lt.s32.totalorder %s14, 1
        %s1393 = scalar_select %p1392, %s14, 1
        %s1394 = smul.addr %s1393, 2
        %s1395 = scalar_lea.vmem %s2, %s1394
      $region40: #{entry_encoder_forward.6} parent=35 // pred_fallthru
        _
    $region36: #{entry_encoder_forward.6} parent=5 // pred_fallthru
      _
  $region6: #{entry_encoder_forward.6} parent=0 // loop_footer
    %s12 = sadd.s32 1, %s8
  $region7: #{entry_encoder_forward.6} parent=0 // loop_footer_branch
    %7 = sbr.rel target = $region3
  $region8: #{entry_encoder_forward.6} parent=0 // loop_exit
    _

// kernel: entry_encoder_forward.7
$region0: #{entry_encoder_forward.7}
  #allocation0 [shape = 'u32[]', space=smem, size = 0x4, offset = 0x4, fixed_abs, tag = 'smem constant byte address 0x4 - core index']
  #allocation1 [shape = 'u32[144,128]{1,0:T(1,128)}', space=vmem, size = 0x12000, scoped, tag = 'internal scratch']
  %s0 = inlined_call_operand.vmem [shape: bf16[1536,49], index: 0, kind: input, shape index: {}]
  %s1 = inlined_call_operand.vmem [shape: bf16[49,128], index: 1, kind: input, shape index: {}]
  %s2 = inlined_call_operand.vmem [shape: f32[1,128], index: 2, kind: input, shape index: {}]
  %s3 = inlined_call_operand.vmem [shape: f32[1,128], index: 3, kind: input, shape index: {}]
  %s4 = inlined_call_operand.vmem [shape: bf16[1536,128], index: 4, kind: output, shape index: {}]
  %s5 = sld [smem:[#allocation0]]
  $region49: #{entry_encoder_forward.7} parent=0
    _
  %s7 = ssub.s32 1, %s5
  %s8 = scalar_select 0, %s7, %s5
  loop: start=0, step=1, limit=4
  $region2: #{entry_encoder_forward.7} parent=0 // loop_pre_header
    _
  $region3: #{entry_encoder_forward.7} parent=0 // loop_header
    %s10 = sphi 0, %s14
    %p11 = scmp.ge.s32.totalorder %s10, 4
    %s20 = sphi 0, %s22
    %s23 = sphi 0, %s20
    %s24 = sphi 0, %s23
    %s40 = sphi 0, %s24
    %s44 = sphi 0, %s44
    %s46 = sphi 0, %s44
    %s47 = sphi 0, %s46
    %s61 = sphi 0, %s47
    %s65 = sphi 0, %s65
    %s67 = sphi 0, %s65
    %s68 = sphi 0, %s67
    %s82 = sphi 0, %s68
    %s86 = sphi 0, %s86
    %s88 = sphi 0, %s86
    %s89 = sphi 0, %s88
    %s103 = sphi 0, %s89
    %s109 = sphi 0, %s111
    %s112 = sphi 0, %s109
    %s113 = sphi 0, %s112
    %s129 = sphi 0, %s113
  $region4: #{entry_encoder_forward.7} parent=0 // loop_header_branch
    %13 = sbr.rel (%p11) target = $region8
  $region5: #{entry_encoder_forward.7} parent=0 // loop_body
    %s15 = ssub.s32 %s10, 1
    %s16 = ssub.s32 %s10, 2
    %s17 = sadd.s32 %s10, 1
    %s18 = ssub.s32 %s10, %s17
    %p19 = scmp.eq.s32.totalorder %s18, 0
    %s21 = sadd.s32 %s20, 1
    %s22 = scalar_select %p19, %s20, %s21
    %p25 = pneg %p19
    %p26 = scmp.eq.s32.totalorder %s10, 1
    %p27 = por %p25, %p26
    %p28 = scmp.ne.s32.totalorder %s20, %s23
    %p29 = scmp.eq.s32.totalorder %s10, 0
    %p30 = por %p28, %p29
    %p31 = scmp.ne.s32.totalorder %s20, %s23
    %p32 = scmp.eq.s32.totalorder %s15, 1
    %p33 = por %p31, %p32
    %p34 = scmp.ne.s32.totalorder %s23, %s24
    %p35 = scmp.eq.s32.totalorder %s15, 0
    %p36 = por %p34, %p35
    %p37 = scmp.ne.s32.totalorder %s23, %s24
    %p38 = scmp.eq.s32.totalorder %s16, 1
    %p39 = por %p37, %p38
    %p41 = scmp.ne.s32.totalorder %s24, %s40
    %p42 = scmp.eq.s32.totalorder %s16, 0
    %p43 = por %p41, %p42
    %s45 = sadd.s32 %s44, 1
    %p48 = scmp.eq.s32.totalorder %s10, 1
    %p49 = scmp.ne.s32.totalorder %s44, %s46
    %p50 = scmp.eq.s32.totalorder %s10, 0
    %p51 = por %p49, %p50
    %p52 = scmp.ne.s32.totalorder %s44, %s46
    %p53 = scmp.eq.s32.totalorder %s15, 1
    %p54 = por %p52, %p53
    %p55 = scmp.ne.s32.totalorder %s46, %s47
    %p56 = scmp.eq.s32.totalorder %s15, 0
    %p57 = por %p55, %p56
    %p58 = scmp.ne.s32.totalorder %s46, %s47
    %p59 = scmp.eq.s32.totalorder %s16, 1
    %p60 = por %p58, %p59
    %p62 = scmp.ne.s32.totalorder %s47, %s61
    %p63 = scmp.eq.s32.totalorder %s16, 0
    %p64 = por %p62, %p63
    %s66 = sadd.s32 %s65, 1
    %p69 = scmp.eq.s32.totalorder %s10, 1
    %p70 = scmp.ne.s32.totalorder %s65, %s67
    %p71 = scmp.eq.s32.totalorder %s10, 0
    %p72 = por %p70, %p71
    %p73 = scmp.ne.s32.totalorder %s65, %s67
    %p74 = scmp.eq.s32.totalorder %s15, 1
    %p75 = por %p73, %p74
    %p76 = scmp.ne.s32.totalorder %s67, %s68
    %p77 = scmp.eq.s32.totalorder %s15, 0
    %p78 = por %p76, %p77
    %p79 = scmp.ne.s32.totalorder %s67, %s68
    %p80 = scmp.eq.s32.totalorder %s16, 1
    %p81 = por %p79, %p80
    %p83 = scmp.ne.s32.totalorder %s68, %s82
    %p84 = scmp.eq.s32.totalorder %s16, 0
    %p85 = por %p83, %p84
    %s87 = sadd.s32 %s86, 1
    %p90 = scmp.eq.s32.totalorder %s10, 1
    %p91 = scmp.ne.s32.totalorder %s86, %s88
    %p92 = scmp.eq.s32.totalorder %s10, 0
    %p93 = por %p91, %p92
    %p94 = scmp.ne.s32.totalorder %s86, %s88
    %p95 = scmp.eq.s32.totalorder %s15, 1
    %p96 = por %p94, %p95
    %p97 = scmp.ne.s32.totalorder %s88, %s89
    %p98 = scmp.eq.s32.totalorder %s15, 0
    %p99 = por %p97, %p98
    %p100 = scmp.ne.s32.totalorder %s88, %s89
    %p101 = scmp.eq.s32.totalorder %s16, 1
    %p102 = por %p100, %p101
    %p104 = scmp.ne.s32.totalorder %s89, %s103
    %p105 = scmp.eq.s32.totalorder %s16, 0
    %p106 = por %p104, %p105
    %s107 = ssub.s32 %s10, %s17
    %p108 = scmp.eq.s32.totalorder %s107, 0
    %s110 = sadd.s32 %s109, 1
    %s111 = scalar_select %p108, %s109, %s110
    %p114 = pneg %p108
    %p115 = scmp.eq.s32.totalorder %s10, 1
    %p116 = por %p114, %p115
    %p117 = scmp.ne.s32.totalorder %s109, %s112
    %p118 = scmp.eq.s32.totalorder %s10, 0
    %p119 = por %p117, %p118
    %p120 = scmp.ne.s32.totalorder %s109, %s112
    %p121 = scmp.eq.s32.totalorder %s15, 1
    %p122 = por %p120, %p121
    %p123 = scmp.ne.s32.totalorder %s112, %s113
    %p124 = scmp.eq.s32.totalorder %s15, 0
    %p125 = por %p123, %p124
    %p126 = scmp.ne.s32.totalorder %s112, %s113
    %p127 = scmp.eq.s32.totalorder %s16, 1
    %p128 = por %p126, %p127
    %p130 = scmp.ne.s32.totalorder %s113, %s129
    %p131 = scmp.eq.s32.totalorder %s16, 0
    %p132 = por %p130, %p131
    %p133 = scmp.le.s32.totalorder 1, %s10
    %p134 = scmp.lt.s32.totalorder %s10, 3
    %p135 = pnand %p133, %p134
    %p136 = pneg %p135
    // Predicated region
    $region9: #{entry_encoder_forward.7} parent=5 // pred_check
      _
    $region10: #{entry_encoder_forward.7} parent=5 // pred_check_branch
      %138 = sbr.rel (%p135) target = $region12
    $region11: #{entry_encoder_forward.7} parent=5 // pred_region
      %s139 = ssub.s32 %s10, 1
      // Predicated region
      $region13: #{entry_encoder_forward.7} parent=11 // pred_check
        %p140 = pneg %p57
      $region14: #{entry_encoder_forward.7} parent=11 // pred_check_branch
        %142 = sbr.rel (%p140) target = $region16
      $region15: #{entry_encoder_forward.7} parent=11 // pred_region
        _
      $region16: #{entry_encoder_forward.7} parent=11 // pred_fallthru
        _
      // Predicated region
      $region17: #{entry_encoder_forward.7} parent=11 // pred_check
        %p143 = pneg %p78
      $region18: #{entry_encoder_forward.7} parent=11 // pred_check_branch
        %145 = sbr.rel (%p143) target = $region20
      $region19: #{entry_encoder_forward.7} parent=11 // pred_region
        _
      $region20: #{entry_encoder_forward.7} parent=11 // pred_fallthru
        _
      // Predicated region
      $region21: #{entry_encoder_forward.7} parent=11 // pred_check
        %p146 = pneg %p99
      $region22: #{entry_encoder_forward.7} parent=11 // pred_check_branch
        %148 = sbr.rel (%p146) target = $region24
      $region23: #{entry_encoder_forward.7} parent=11 // pred_region
        _
      $region24: #{entry_encoder_forward.7} parent=11 // pred_fallthru
        _
    $region12: #{entry_encoder_forward.7} parent=5 // pred_fallthru
      _
    %p149 = scmp.lt.s32.totalorder %s10, 2
    // Predicated region
    $region25: #{entry_encoder_forward.7} parent=5 // pred_check
      %p150 = pneg %p149
    $region26: #{entry_encoder_forward.7} parent=5 // pred_check_branch
      %152 = sbr.rel (%p150) target = $region28
    $region27: #{entry_encoder_forward.7} parent=5 // pred_region
      // Predicated region
      $region29: #{entry_encoder_forward.7} parent=27 // pred_check
        %p153 = pneg %p30
      $region30: #{entry_encoder_forward.7} parent=27 // pred_check_branch
        %155 = sbr.rel (%p153) target = $region32
      $region31: #{entry_encoder_forward.7} parent=27 // pred_region
        %s156 = smul.u32 96, %s10
        %p157 = scmp.lt.s32.totalorder %s156, 191
        %s158 = scalar_select %p157, %s156, 191
        %s159 = smul.addr %s158, 4
        %s160 = scalar_lea.vmem %s0, %s159
        %s161 = smul.u32 96, %s10
      $region32: #{entry_encoder_forward.7} parent=27 // pred_fallthru
        _
    $region28: #{entry_encoder_forward.7} parent=5 // pred_fallthru
      _
    %p162 = scmp.le.s32.totalorder 1, %s10
    %p163 = scmp.lt.s32.totalorder %s10, 3
    %p164 = pnand %p162, %p163
    %p165 = pneg %p164
    // Predicated region
    $region33: #{entry_encoder_forward.7} parent=5 // pred_check
      _
    $region34: #{entry_encoder_forward.7} parent=5 // pred_check_branch
      %167 = sbr.rel (%p164) target = $region36
    $region35: #{entry_encoder_forward.7} parent=5 // pred_region
      %s168 = ssub.s32 %s10, 1
      %s169 = smul.u32 96, %s15
      %p170 = scmp.lt.s32.totalorder %s169, 191
      %s171 = scalar_select %p170, %s169, 191
      %s172 = smul.addr %s171, 4
      %s173 = scalar_lea.vmem %s0, %s172
      %p174 = pneg %p36
      %p175 = pneg %p33
      %p176 = pneg %p57
      %p177 = pneg %p54
      %p178 = pneg %p78
      %p179 = pneg %p75
      %p180 = pneg %p99
      %p181 = pneg %p96
      %p182 = pneg %p125
      %p183 = pneg %p122
      %s184 = smul.u32 96, %s15
      %p185 = scmp.lt.s32.totalorder %s184, 191
      %s186 = scalar_select %p185, %s184, 191
      %s187 = smul.addr %s186, 4
      %s188 = scalar_lea.vmem %s4, %s187
      %s189 = smul.u32 96, %s15
      %p190 = scmp.lt.s32.totalorder %s189, 191
      %s191 = scalar_select %p190, %s189, 191
      %s192 = smul.addr %s191, 4
      %s193 = scalar_lea.vmem %s0, %s192
      %s194 = smul.u32 96, %s15
      %s195 = smul.u32 96, %s15
      %p196 = scmp.lt.s32.totalorder %s195, 191
      %s197 = scalar_select %p196, %s195, 191
      %s198 = smul.addr %s197, 4
      %s199 = scalar_lea.vmem %s4, %s198
      %s200 = smul.u32 96, %s15
      %v202 = vld [vmem:[%s193] sm:$0xf]
      %v203 = vld [vmem:[%s193 + $0x4] sm:$0xf]
      %v204 = vld [vmem:[%s193 + $0x8] sm:$0xf]
      %v205 = vld [vmem:[%s193 + $0xc] sm:$0xf]
      %v206 = vld [vmem:[%s193 + $0x10] sm:$0xf]
      %v207 = vld [vmem:[%s193 + $0x14] sm:$0xf]
      %v208 = vld [vmem:[%s193 + $0x18] sm:$0xf]
      %v209 = vld [vmem:[%s193 + $0x1c] sm:$0xf]
      %v210 = vld [vmem:[%s193 + $0x20] sm:$0xf]
      %v211 = vld [vmem:[%s193 + $0x24] sm:$0xf]
      %v212 = vld [vmem:[%s193 + $0x28] sm:$0xf]
      %v213 = vld [vmem:[%s193 + $0x2c] sm:$0xf]
      %v214 = vld [vmem:[%s193 + $0x30] sm:$0xf]
      %v215 = vld [vmem:[%s193 + $0x34] sm:$0xf]
      %v216 = vld [vmem:[%s193 + $0x38] sm:$0xf]
      %v217 = vld [vmem:[%s193 + $0x3c] sm:$0xf]
      %v218 = vld [vmem:[%s193 + $0x40] sm:$0xf]
      %v219 = vld [vmem:[%s193 + $0x44] sm:$0xf]
      %v220 = vld [vmem:[%s193 + $0x48] sm:$0xf]
      %v221 = vld [vmem:[%s193 + $0x4c] sm:$0xf]
      %v222 = vld [vmem:[%s193 + $0x50] sm:$0xf]
      %v223 = vld [vmem:[%s193 + $0x54] sm:$0xf]
      %v224 = vld [vmem:[%s193 + $0x58] sm:$0xf]
      %v225 = vld [vmem:[%s193 + $0x5c] sm:$0xf]
      %v226 = vld [vmem:[%s193 + $0x60] sm:$0xf]
      %v227 = vld [vmem:[%s193 + $0x64] sm:$0xf]
      %v228 = vld [vmem:[%s193 + $0x68] sm:$0xf]
      %v229 = vld [vmem:[%s193 + $0x6c] sm:$0xf]
      %v230 = vld [vmem:[%s193 + $0x70] sm:$0xf]
      %v231 = vld [vmem:[%s193 + $0x74] sm:$0xf]
      %v232 = vld [vmem:[%s193 + $0x78] sm:$0xf]
      %v233 = vld [vmem:[%s193 + $0x7c] sm:$0xf]
      %v234 = vld [vmem:[%s193 + $0x80] sm:$0xf]
      %v235 = vld [vmem:[%s193 + $0x84] sm:$0xf]
      %v236 = vld [vmem:[%s193 + $0x88] sm:$0xf]
      %v237 = vld [vmem:[%s193 + $0x8c] sm:$0xf]
      %v238 = vld [vmem:[%s193 + $0x90] sm:$0xf]
      %v239 = vld [vmem:[%s193 + $0x94] sm:$0xf]
      %v240 = vld [vmem:[%s193 + $0x98] sm:$0xf]
      %v241 = vld [vmem:[%s193 + $0x9c] sm:$0xf]
      %v242 = vld [vmem:[%s193 + $0xa0] sm:$0xf]
      %v243 = vld [vmem:[%s193 + $0xa4] sm:$0xf]
      %v244 = vld [vmem:[%s193 + $0xa8] sm:$0xf]
      %v245 = vld [vmem:[%s193 + $0xac] sm:$0xf]
      %v246 = vld [vmem:[%s193 + $0xb0] sm:$0xf]
      %v247 = vld [vmem:[%s193 + $0xb4] sm:$0xf]
      %v248 = vld [vmem:[%s193 + $0xb8] sm:$0xf]
      %v249 = vld [vmem:[%s193 + $0xbc] sm:$0xf]
      %v250 = vld [vmem:[%s193 + $0xc0] sm:$0xf]
      %v251 = vld [vmem:[%s193 + $0xc4] sm:$0xf]
      %v252 = vld [vmem:[%s193 + $0xc8] sm:$0xf]
      %v253 = vld [vmem:[%s193 + $0xcc] sm:$0xf]
      %v254 = vld [vmem:[%s193 + $0xd0] sm:$0xf]
      %v255 = vld [vmem:[%s193 + $0xd4] sm:$0xf]
      %v256 = vld [vmem:[%s193 + $0xd8] sm:$0xf]
      %v257 = vld [vmem:[%s193 + $0xdc] sm:$0xf]
      %v258 = vld [vmem:[%s193 + $0xe0] sm:$0xf]
      %v259 = vld [vmem:[%s193 + $0xe4] sm:$0xf]
      %v260 = vld [vmem:[%s193 + $0xe8] sm:$0xf]
      %v261 = vld [vmem:[%s193 + $0xec] sm:$0xf]
      %v262 = vld [vmem:[%s193 + $0xf0] sm:$0xf]
      %v263 = vld [vmem:[%s193 + $0xf4] sm:$0xf]
      %v264 = vld [vmem:[%s193 + $0xf8] sm:$0xf]
      %v265 = vld [vmem:[%s193 + $0xfc] sm:$0xf]
      %v266 = vld [vmem:[%s193 + $0x100] sm:$0xf]
      %v267 = vld [vmem:[%s193 + $0x104] sm:$0xf]
      %v268 = vld [vmem:[%s193 + $0x108] sm:$0xf]
      %v269 = vld [vmem:[%s193 + $0x10c] sm:$0xf]
      %v270 = vld [vmem:[%s193 + $0x110] sm:$0xf]
      %v271 = vld [vmem:[%s193 + $0x114] sm:$0xf]
      %v272 = vld [vmem:[%s193 + $0x118] sm:$0xf]
      %v273 = vld [vmem:[%s193 + $0x11c] sm:$0xf]
      %v274 = vld [vmem:[%s193 + $0x120] sm:$0xf]
      %v275 = vld [vmem:[%s193 + $0x124] sm:$0xf]
      %v276 = vld [vmem:[%s193 + $0x128] sm:$0xf]
      %v277 = vld [vmem:[%s193 + $0x12c] sm:$0xf]
      %v278 = vld [vmem:[%s193 + $0x130] sm:$0xf]
      %v279 = vld [vmem:[%s193 + $0x134] sm:$0xf]
      %v280 = vld [vmem:[%s193 + $0x138] sm:$0xf]
      %v281 = vld [vmem:[%s193 + $0x13c] sm:$0xf]
      %v282 = vld [vmem:[%s193 + $0x140] sm:$0xf]
      %v283 = vld [vmem:[%s193 + $0x144] sm:$0xf]
      %v284 = vld [vmem:[%s193 + $0x148] sm:$0xf]
      %v285 = vld [vmem:[%s193 + $0x14c] sm:$0xf]
      %v286 = vld [vmem:[%s193 + $0x150] sm:$0xf]
      %v287 = vld [vmem:[%s193 + $0x154] sm:$0xf]
      %v288 = vld [vmem:[%s193 + $0x158] sm:$0xf]
      %v289 = vld [vmem:[%s193 + $0x15c] sm:$0xf]
      %v290 = vld [vmem:[%s193 + $0x160] sm:$0xf]
      %v291 = vld [vmem:[%s193 + $0x164] sm:$0xf]
      %v292 = vld [vmem:[%s193 + $0x168] sm:$0xf]
      %v293 = vld [vmem:[%s193 + $0x16c] sm:$0xf]
      %v294 = vld [vmem:[%s193 + $0x170] sm:$0xf]
      %v295 = vld [vmem:[%s193 + $0x174] sm:$0xf]
      %v296 = vld [vmem:[%s193 + $0x178] sm:$0xf]
      %v297 = vld [vmem:[%s193 + $0x17c] sm:$0xf]
      %v298 = vld [vmem:[%s1] sm:$0xf]
      %v299 = vld [vmem:[%s1 + $0x4] sm:$0xf]
      %v300 = vld [vmem:[%s1 + $0x8] sm:$0xf]
      %v301 = vld [vmem:[%s1 + $0xc] sm:$0xf]
      %v302 = vld [vmem:[%s1 + $0x10] sm:$0xf]
      %v303 = vld [vmem:[%s1 + $0x14] sm:$0xf]
      %v304 = vld [vmem:[%s1 + $0x18] sm:$0x1]
      %v401 = vunpack.c.l.b16 %v202
      %v402 = vunpack.c.l.b16 %v203
      %v403 = vunpack.c.l.b16 %v204
      %v404 = vunpack.c.l.b16 %v205
      %v405 = vunpack.c.l.b16 %v206
      %v406 = vunpack.c.l.b16 %v207
      %v407 = vunpack.c.l.b16 %v208
      %v408 = vunpack.c.l.b16 %v209
      %v409 = vunpack.c.l.b16 %v210
      %v410 = vunpack.c.l.b16 %v211
      %v411 = vunpack.c.l.b16 %v212
      %v412 = vunpack.c.l.b16 %v213
      %v413 = vunpack.c.l.b16 %v214
      %v414 = vunpack.c.l.b16 %v215
      %v415 = vunpack.c.l.b16 %v216
      %v416 = vunpack.c.l.b16 %v217
      %v417 = vunpack.c.l.b16 %v218
      %v418 = vunpack.c.l.b16 %v219
      %v419 = vunpack.c.l.b16 %v220
      %v420 = vunpack.c.l.b16 %v221
      %v421 = vunpack.c.l.b16 %v222
      %v422 = vunpack.c.l.b16 %v223
      %v423 = vunpack.c.l.b16 %v224
      %v424 = vunpack.c.l.b16 %v225
      %v425 = vunpack.c.l.b16 %v226
      %v426 = vunpack.c.l.b16 %v227
      %v427 = vunpack.c.l.b16 %v228
      %v428 = vunpack.c.l.b16 %v229
      %v429 = vunpack.c.l.b16 %v230
      %v430 = vunpack.c.l.b16 %v231
      %v431 = vunpack.c.l.b16 %v232
      %v432 = vunpack.c.l.b16 %v233
      %v433 = vunpack.c.l.b16 %v234
      %v434 = vunpack.c.l.b16 %v235
      %v435 = vunpack.c.l.b16 %v236
      %v436 = vunpack.c.l.b16 %v237
      %v437 = vunpack.c.l.b16 %v238
      %v438 = vunpack.c.l.b16 %v239
      %v439 = vunpack.c.l.b16 %v240
      %v440 = vunpack.c.l.b16 %v241
      %v441 = vunpack.c.l.b16 %v242
      %v442 = vunpack.c.l.b16 %v243
      %v443 = vunpack.c.l.b16 %v244
      %v444 = vunpack.c.l.b16 %v245
      %v445 = vunpack.c.l.b16 %v246
      %v446 = vunpack.c.l.b16 %v247
      %v447 = vunpack.c.l.b16 %v248
      %v448 = vunpack.c.l.b16 %v249
      %v449 = vunpack.c.l.b16 %v250
      %v450 = vunpack.c.l.b16 %v251
      %v451 = vunpack.c.l.b16 %v252
      %v452 = vunpack.c.l.b16 %v253
      %v453 = vunpack.c.l.b16 %v254
      %v454 = vunpack.c.l.b16 %v255
      %v455 = vunpack.c.l.b16 %v256
      %v456 = vunpack.c.l.b16 %v257
      %v457 = vunpack.c.l.b16 %v258
      %v458 = vunpack.c.l.b16 %v259
      %v459 = vunpack.c.l.b16 %v260
      %v460 = vunpack.c.l.b16 %v261
      %v461 = vunpack.c.l.b16 %v262
      %v462 = vunpack.c.l.b16 %v263
      %v463 = vunpack.c.l.b16 %v264
      %v464 = vunpack.c.l.b16 %v265
      %v465 = vunpack.c.l.b16 %v266
      %v466 = vunpack.c.l.b16 %v267
      %v467 = vunpack.c.l.b16 %v268
      %v468 = vunpack.c.l.b16 %v269
      %v469 = vunpack.c.l.b16 %v270
      %v470 = vunpack.c.l.b16 %v271
      %v471 = vunpack.c.l.b16 %v272
      %v472 = vunpack.c.l.b16 %v273
      %v473 = vunpack.c.l.b16 %v274
      %v474 = vunpack.c.l.b16 %v275
      %v475 = vunpack.c.l.b16 %v276
      %v476 = vunpack.c.l.b16 %v277
      %v477 = vunpack.c.l.b16 %v278
      %v478 = vunpack.c.l.b16 %v279
      %v479 = vunpack.c.l.b16 %v280
      %v480 = vunpack.c.l.b16 %v281
      %v481 = vunpack.c.l.b16 %v282
      %v482 = vunpack.c.l.b16 %v283
      %v483 = vunpack.c.l.b16 %v284
      %v484 = vunpack.c.l.b16 %v285
      %v485 = vunpack.c.l.b16 %v286
      %v486 = vunpack.c.l.b16 %v287
      %v487 = vunpack.c.l.b16 %v288
      %v488 = vunpack.c.l.b16 %v289
      %v489 = vunpack.c.l.b16 %v290
      %v490 = vunpack.c.l.b16 %v291
      %v491 = vunpack.c.l.b16 %v292
      %v492 = vunpack.c.l.b16 %v293
      %v493 = vunpack.c.l.b16 %v294
      %v494 = vunpack.c.l.b16 %v295
      %v495 = vunpack.c.l.b16 %v296
      %v496 = vunpack.c.l.b16 %v297
      %v497 = vpack.c.b16 %v402, %v401
      %v498 = vpack.c.b16 %v404, %v403
      %v499 = vpack.c.b16 %v406, %v405
      %v500 = vpack.c.b16 %v408, %v407
      %v501 = vpack.c.b16 %v410, %v409
      %v502 = vpack.c.b16 %v412, %v411
      %v503 = vpack.c.b16 %v414, %v413
      %v504 = vpack.c.b16 %v416, %v415
      %v505 = vpack.c.b16 %v418, %v417
      %v506 = vpack.c.b16 %v420, %v419
      %v507 = vpack.c.b16 %v422, %v421
      %v508 = vpack.c.b16 %v424, %v423
      %v509 = vpack.c.b16 %v426, %v425
      %v510 = vpack.c.b16 %v428, %v427
      %v511 = vpack.c.b16 %v430, %v429
      %v512 = vpack.c.b16 %v432, %v431
      %v513 = vpack.c.b16 %v434, %v433
      %v514 = vpack.c.b16 %v436, %v435
      %v515 = vpack.c.b16 %v438, %v437
      %v516 = vpack.c.b16 %v440, %v439
      %v517 = vpack.c.b16 %v442, %v441
      %v518 = vpack.c.b16 %v444, %v443
      %v519 = vpack.c.b16 %v446, %v445
      %v520 = vpack.c.b16 %v448, %v447
      %v521 = vpack.c.b16 %v450, %v449
      %v522 = vpack.c.b16 %v452, %v451
      %v523 = vpack.c.b16 %v454, %v453
      %v524 = vpack.c.b16 %v456, %v455
      %v525 = vpack.c.b16 %v458, %v457
      %v526 = vpack.c.b16 %v460, %v459
      %v527 = vpack.c.b16 %v462, %v461
      %v528 = vpack.c.b16 %v464, %v463
      %v529 = vpack.c.b16 %v466, %v465
      %v530 = vpack.c.b16 %v468, %v467
      %v531 = vpack.c.b16 %v470, %v469
      %v532 = vpack.c.b16 %v472, %v471
      %v533 = vpack.c.b16 %v474, %v473
      %v534 = vpack.c.b16 %v476, %v475
      %v535 = vpack.c.b16 %v478, %v477
      %v536 = vpack.c.b16 %v480, %v479
      %v537 = vpack.c.b16 %v482, %v481
      %v538 = vpack.c.b16 %v484, %v483
      %v539 = vpack.c.b16 %v486, %v485
      %v540 = vpack.c.b16 %v488, %v487
      %v541 = vpack.c.b16 %v490, %v489
      %v542 = vpack.c.b16 %v492, %v491
      %v543 = vpack.c.b16 %v494, %v493
      %v544 = vpack.c.b16 %v496, %v495
      %v552 = vunpack.c.l.b16 %v298
      %v553 = vunpack.c.l.b16 %v299
      %v554 = vunpack.c.l.b16 %v300
      %v555 = vunpack.c.l.b16 %v301
      %v556 = vunpack.c.l.b16 %v302
      %v557 = vunpack.c.l.b16 %v303
      %v558 = vunpack.c.l.b16 %v304
      %v559 = vpack.c.b16 %v553, %v552
      %v560 = vpack.c.b16 %v555, %v554
      %v561 = vpack.c.b16 %v557, %v556
      %v562 = vpack.c.b16 %v558, %v558
      %vm566 = vcmask 400384
      %v568 = vsel %vm566, %v497, 0
      %v571 = vsel %vm566, %v498, 0
      %v574 = vsel %vm566, %v499, 0
      %v577 = vsel %vm566, %v500, 0
      %v580 = vsel %vm566, %v501, 0
      %v583 = vsel %vm566, %v502, 0
      %v586 = vsel %vm566, %v503, 0
      %v589 = vsel %vm566, %v504, 0
      %v592 = vsel %vm566, %v505, 0
      %v595 = vsel %vm566, %v506, 0
      %v598 = vsel %vm566, %v507, 0
      %v601 = vsel %vm566, %v508, 0
      %v604 = vsel %vm566, %v509, 0
      %v607 = vsel %vm566, %v510, 0
      %v610 = vsel %vm566, %v511, 0
      %v613 = vsel %vm566, %v512, 0
      %v616 = vsel %vm566, %v513, 0
      %v619 = vsel %vm566, %v514, 0
      %v622 = vsel %vm566, %v515, 0
      %v625 = vsel %vm566, %v516, 0
      %v628 = vsel %vm566, %v517, 0
      %v631 = vsel %vm566, %v518, 0
      %v634 = vsel %vm566, %v519, 0
      %v637 = vsel %vm566, %v520, 0
      %v640 = vsel %vm566, %v521, 0
      %v643 = vsel %vm566, %v522, 0
      %v646 = vsel %vm566, %v523, 0
      %v649 = vsel %vm566, %v524, 0
      %v652 = vsel %vm566, %v525, 0
      %v655 = vsel %vm566, %v526, 0
      %v658 = vsel %vm566, %v527, 0
      %v661 = vsel %vm566, %v528, 0
      %v664 = vsel %vm566, %v529, 0
      %v667 = vsel %vm566, %v530, 0
      %v670 = vsel %vm566, %v531, 0
      %v673 = vsel %vm566, %v532, 0
      %v676 = vsel %vm566, %v533, 0
      %v679 = vsel %vm566, %v534, 0
      %v682 = vsel %vm566, %v535, 0
      %v685 = vsel %vm566, %v536, 0
      %v688 = vsel %vm566, %v537, 0
      %v691 = vsel %vm566, %v538, 0
      %v694 = vsel %vm566, %v539, 0
      %v697 = vsel %vm566, %v540, 0
      %v700 = vsel %vm566, %v541, 0
      %v703 = vsel %vm566, %v542, 0
      %v706 = vsel %vm566, %v543, 0
      %v709 = vsel %vm566, %v544, 0
      %vm711 = vcmask 1040384
      %v712 = vsel 0, 4294967295, 65535
      %v713 = vsel %vm711, %v712, 0
      %v715 = vand.u32 %v562, %v713
      %717 = vmatprep.subr.bf16.mxu0 0
      %718 = vmatpush1.bf16.msra.mxu0 %v559
      %719 = vmatprep.subr.bf16.mxu0 0
      %720 = vmatpush1.bf16.msra.mxu0 %v560
      %721 = vmatprep.subr.bf16.mxu0 0
      %722 = vmatpush1.bf16.msra.mxu0 %v561
      %723 = vmatprep.subr.bf16.mxu0 0
      %724 = vmatpush1.bf16.msra.mxu0 %v715
      %725 = vmatprep.subr.bf16.mxu0 0
      %726 = vmatpush1.bf16.msra.mxu0 0
      %727 = vmatprep.subr.bf16.mxu0 0
      %728 = vmatpush1.bf16.msra.mxu0 0
      %729 = vmatprep.subr.bf16.mxu0 0
      %730 = vmatpush1.bf16.msra.mxu0 0
      %731 = vmatprep.subr.bf16.mxu0 0
      %732 = vmatpush1.bf16.msra.mxu0 0
      %733 = vmatprep.subr.bf16.mxu0 0
      %734 = vmatpush1.bf16.msra.mxu0 0
      %735 = vmatprep.subr.bf16.mxu0 0
      %736 = vmatpush1.bf16.msra.mxu0 0
      %737 = vmatprep.subr.bf16.mxu0 0
      %738 = vmatpush1.bf16.msra.mxu0 0
      %739 = vmatprep.subr.bf16.mxu0 0
      %740 = vmatpush1.bf16.msra.mxu0 0
      %741 = vmatprep.subr.bf16.mxu0 0
      %742 = vmatpush1.bf16.msra.mxu0 0
      %743 = vmatprep.subr.bf16.mxu0 0
      %744 = vmatpush1.bf16.msra.mxu0 0
      %745 = vmatprep.subr.bf16.mxu0 0
      %746 = vmatpush1.bf16.msra.mxu0 0
      %747 = vmatprep.subr.bf16.mxu0 0
      %748 = vmatpush1.bf16.msra.mxu0 0
      %749 = vmatprep.mubr.bf16.mxu0 0
      %750 = vmatmul.mubr.bf16.gmra.mrb[0].mxu0 %v568
      %v751 = vpop.f32.mrb[0].mxu0
      %v752 = vadd.f32 0.0, %v751
      %v753 = vpop.f32.mrb[0].mxu0
      %v754 = vpop.f32.mrb[0].mxu0
      %v755 = vadd.f32 0.0, %v754
      %v756 = vpop.f32.mrb[0].mxu0
      %757 = vmatprep.mubr.bf16.mxu0 0
      %758 = vmatmul.mubr.bf16.gmra.mrb[0].mxu0 %v571
      %v759 = vpop.f32.mrb[0].mxu0
      %v760 = vadd.f32 0.0, %v759
      %v761 = vpop.f32.mrb[0].mxu0
      %v762 = vpop.f32.mrb[0].mxu0
      %v763 = vadd.f32 0.0, %v762
      %v764 = vpop.f32.mrb[0].mxu0
      %765 = vmatprep.mubr.bf16.mxu0 0
      %766 = vmatmul.mubr.bf16.gmra.mrb[0].mxu0 %v574
      %v767 = vpop.f32.mrb[0].mxu0
      %v768 = vadd.f32 0.0, %v767
      %v769 = vpop.f32.mrb[0].mxu0
      %v770 = vpop.f32.mrb[0].mxu0
      %v771 = vadd.f32 0.0, %v770
      %v772 = vpop.f32.mrb[0].mxu0
      %773 = vmatprep.mubr.bf16.mxu0 0
      %774 = vmatmul.mubr.bf16.gmra.mrb[0].mxu0 %v577
      %v775 = vpop.f32.mrb[0].mxu0
      %v776 = vadd.f32 0.0, %v775
      %v777 = vpop.f32.mrb[0].mxu0
      %v778 = vpop.f32.mrb[0].mxu0
      %v779 = vadd.f32 0.0, %v778
      %v780 = vpop.f32.mrb[0].mxu0
      %781 = vmatprep.mubr.bf16.mxu0 0
      %782 = vmatmul.mubr.bf16.gmra.mrb[0].mxu0 %v580
      %v783 = vpop.f32.mrb[0].mxu0
      %v784 = vadd.f32 0.0, %v783
      %v785 = vpop.f32.mrb[0].mxu0
      %v786 = vpop.f32.mrb[0].mxu0
      %v787 = vadd.f32 0.0, %v786
      %v788 = vpop.f32.mrb[0].mxu0
      %789 = vmatprep.mubr.bf16.mxu0 0
      %790 = vmatmul.mubr.bf16.gmra.mrb[0].mxu0 %v583
      %v791 = vpop.f32.mrb[0].mxu0
      %v792 = vadd.f32 0.0, %v791
      %v793 = vpop.f32.mrb[0].mxu0
      %v794 = vpop.f32.mrb[0].mxu0
      %v795 = vadd.f32 0.0, %v794
      %v796 = vpop.f32.mrb[0].mxu0
      %797 = vmatprep.mubr.bf16.mxu0 0
      %798 = vmatmul.mubr.bf16.gmra.mrb[0].mxu0 %v586
      %v799 = vpop.f32.mrb[0].mxu0
      %v800 = vadd.f32 0.0, %v799
      %v801 = vpop.f32.mrb[0].mxu0
      %v802 = vpop.f32.mrb[0].mxu0
      %v803 = vadd.f32 0.0, %v802
      %v804 = vpop.f32.mrb[0].mxu0
      %805 = vmatprep.mubr.bf16.mxu0 0
      %806 = vmatmul.mubr.bf16.gmra.mrb[0].mxu0 %v589
      %v807 = vpop.f32.mrb[0].mxu0
      %v808 = vadd.f32 0.0, %v807
      %v809 = vpop.f32.mrb[0].mxu0
      %v810 = vpop.f32.mrb[0].mxu0
      %v811 = vadd.f32 0.0, %v810
      %v812 = vpop.f32.mrb[0].mxu0
      %813 = vmatprep.mubr.bf16.mxu0 0
      %814 = vmatmul.mubr.bf16.gmra.mrb[0].mxu0 %v592
      %v815 = vpop.f32.mrb[0].mxu0
      %v816 = vadd.f32 0.0, %v815
      %v817 = vpop.f32.mrb[0].mxu0
      %v818 = vpop.f32.mrb[0].mxu0
      %v819 = vadd.f32 0.0, %v818
      %v820 = vpop.f32.mrb[0].mxu0
      %821 = vmatprep.mubr.bf16.mxu0 0
      %822 = vmatmul.mubr.bf16.gmra.mrb[0].mxu0 %v595
      %v823 = vpop.f32.mrb[0].mxu0
      %v824 = vadd.f32 0.0, %v823
      %v825 = vpop.f32.mrb[0].mxu0
      %v826 = vpop.f32.mrb[0].mxu0
      %v827 = vadd.f32 0.0, %v826
      %v828 = vpop.f32.mrb[0].mxu0
      %829 = vmatprep.mubr.bf16.mxu0 0
      %830 = vmatmul.mubr.bf16.gmra.mrb[0].mxu0 %v598
      %v831 = vpop.f32.mrb[0].mxu0
      %v832 = vadd.f32 0.0, %v831
      %v833 = vpop.f32.mrb[0].mxu0
      %v834 = vpop.f32.mrb[0].mxu0
      %v835 = vadd.f32 0.0, %v834
      %v836 = vpop.f32.mrb[0].mxu0
      %837 = vmatprep.mubr.bf16.mxu0 0
      %838 = vmatmul.mubr.bf16.gmra.mrb[0].mxu0 %v601
      %v839 = vpop.f32.mrb[0].mxu0
      %v840 = vadd.f32 0.0, %v839
      %v841 = vpop.f32.mrb[0].mxu0
      %v842 = vpop.f32.mrb[0].mxu0
      %v843 = vadd.f32 0.0, %v842
      %v844 = vpop.f32.mrb[0].mxu0
      %845 = vmatprep.mubr.bf16.mxu0 0
      %846 = vmatmul.mubr.bf16.gmra.mrb[0].mxu0 %v604
      %v847 = vpop.f32.mrb[0].mxu0
      %v848 = vadd.f32 0.0, %v847
      %v849 = vpop.f32.mrb[0].mxu0
      %v850 = vpop.f32.mrb[0].mxu0
      %v851 = vadd.f32 0.0, %v850
      %v852 = vpop.f32.mrb[0].mxu0
      %853 = vmatprep.mubr.bf16.mxu0 0
      %854 = vmatmul.mubr.bf16.gmra.mrb[0].mxu0 %v607
      %v855 = vpop.f32.mrb[0].mxu0
      %v856 = vadd.f32 0.0, %v855
      %v857 = vpop.f32.mrb[0].mxu0
      %v858 = vpop.f32.mrb[0].mxu0
      %v859 = vadd.f32 0.0, %v858
      %v860 = vpop.f32.mrb[0].mxu0
      %861 = vmatprep.mubr.bf16.mxu0 0
      %862 = vmatmul.mubr.bf16.gmra.mrb[0].mxu0 %v610
      %v863 = vpop.f32.mrb[0].mxu0
      %v864 = vadd.f32 0.0, %v863
      %v865 = vpop.f32.mrb[0].mxu0
      %v866 = vpop.f32.mrb[0].mxu0
      %v867 = vadd.f32 0.0, %v866
      %v868 = vpop.f32.mrb[0].mxu0
      %869 = vmatprep.mubr.bf16.mxu0 0
      %870 = vmatmul.mubr.bf16.gmra.mrb[0].mxu0 %v613
      %v871 = vpop.f32.mrb[0].mxu0
      %v872 = vadd.f32 0.0, %v871
      %v873 = vpop.f32.mrb[0].mxu0
      %v874 = vpop.f32.mrb[0].mxu0
      %v875 = vadd.f32 0.0, %v874
      %v876 = vpop.f32.mrb[0].mxu0
      %877 = vmatprep.mubr.bf16.mxu0 0
      %878 = vmatmul.mubr.bf16.gmra.mrb[0].mxu0 %v616
      %v879 = vpop.f32.mrb[0].mxu0
      %v880 = vadd.f32 0.0, %v879
      %v881 = vpop.f32.mrb[0].mxu0
      %v882 = vpop.f32.mrb[0].mxu0
      %v883 = vadd.f32 0.0, %v882
      %v884 = vpop.f32.mrb[0].mxu0
      %885 = vmatprep.mubr.bf16.mxu0 0
      %886 = vmatmul.mubr.bf16.gmra.mrb[0].mxu0 %v619
      %v887 = vpop.f32.mrb[0].mxu0
      %v888 = vadd.f32 0.0, %v887
      %v889 = vpop.f32.mrb[0].mxu0
      %v890 = vpop.f32.mrb[0].mxu0
      %v891 = vadd.f32 0.0, %v890
      %v892 = vpop.f32.mrb[0].mxu0
      %893 = vmatprep.mubr.bf16.mxu0 0
      %894 = vmatmul.mubr.bf16.gmra.mrb[0].mxu0 %v622
      %v895 = vpop.f32.mrb[0].mxu0
      %v896 = vadd.f32 0.0, %v895
      %v897 = vpop.f32.mrb[0].mxu0
      %v898 = vpop.f32.mrb[0].mxu0
      %v899 = vadd.f32 0.0, %v898
      %v900 = vpop.f32.mrb[0].mxu0
      %901 = vmatprep.mubr.bf16.mxu0 0
      %902 = vmatmul.mubr.bf16.gmra.mrb[0].mxu0 %v625
      %v903 = vpop.f32.mrb[0].mxu0
      %v904 = vadd.f32 0.0, %v903
      %v905 = vpop.f32.mrb[0].mxu0
      %v906 = vpop.f32.mrb[0].mxu0
      %v907 = vadd.f32 0.0, %v906
      %v908 = vpop.f32.mrb[0].mxu0
      %909 = vmatprep.mubr.bf16.mxu0 0
      %910 = vmatmul.mubr.bf16.gmra.mrb[0].mxu0 %v628
      %v911 = vpop.f32.mrb[0].mxu0
      %v912 = vadd.f32 0.0, %v911
      %v913 = vpop.f32.mrb[0].mxu0
      %v914 = vpop.f32.mrb[0].mxu0
      %v915 = vadd.f32 0.0, %v914
      %v916 = vpop.f32.mrb[0].mxu0
      %917 = vmatprep.mubr.bf16.mxu0 0
      %918 = vmatmul.mubr.bf16.gmra.mrb[0].mxu0 %v631
      %v919 = vpop.f32.mrb[0].mxu0
      %v920 = vadd.f32 0.0, %v919
      %v921 = vpop.f32.mrb[0].mxu0
      %v922 = vpop.f32.mrb[0].mxu0
      %v923 = vadd.f32 0.0, %v922
      %v924 = vpop.f32.mrb[0].mxu0
      %925 = vmatprep.mubr.bf16.mxu0 0
      %926 = vmatmul.mubr.bf16.gmra.mrb[0].mxu0 %v634
      %v927 = vpop.f32.mrb[0].mxu0
      %v928 = vadd.f32 0.0, %v927
      %v929 = vpop.f32.mrb[0].mxu0
      %v930 = vpop.f32.mrb[0].mxu0
      %v931 = vadd.f32 0.0, %v930
      %v932 = vpop.f32.mrb[0].mxu0
      %933 = vmatprep.mubr.bf16.mxu0 0
      %934 = vmatmul.mubr.bf16.gmra.mrb[0].mxu0 %v637
      %v935 = vpop.f32.mrb[0].mxu0
      %v936 = vadd.f32 0.0, %v935
      %v937 = vpop.f32.mrb[0].mxu0
      %v938 = vpop.f32.mrb[0].mxu0
      %v939 = vadd.f32 0.0, %v938
      %v940 = vpop.f32.mrb[0].mxu0
      %941 = vmatprep.mubr.bf16.mxu0 0
      %942 = vmatmul.mubr.bf16.gmra.mrb[0].mxu0 %v640
      %v943 = vpop.f32.mrb[0].mxu0
      %v944 = vadd.f32 0.0, %v943
      %v945 = vpop.f32.mrb[0].mxu0
      %v946 = vpop.f32.mrb[0].mxu0
      %v947 = vadd.f32 0.0, %v946
      %v948 = vpop.f32.mrb[0].mxu0
      %949 = vmatprep.mubr.bf16.mxu0 0
      %950 = vmatmul.mubr.bf16.gmra.mrb[0].mxu0 %v643
      %v951 = vpop.f32.mrb[0].mxu0
      %v952 = vadd.f32 0.0, %v951
      %v953 = vpop.f32.mrb[0].mxu0
      %v954 = vpop.f32.mrb[0].mxu0
      %v955 = vadd.f32 0.0, %v954
      %v956 = vpop.f32.mrb[0].mxu0
      %957 = vmatprep.mubr.bf16.mxu0 0
      %958 = vmatmul.mubr.bf16.gmra.mrb[0].mxu0 %v646
      %v959 = vpop.f32.mrb[0].mxu0
      %v960 = vadd.f32 0.0, %v959
      %v961 = vpop.f32.mrb[0].mxu0
      %v962 = vpop.f32.mrb[0].mxu0
      %v963 = vadd.f32 0.0, %v962
      %v964 = vpop.f32.mrb[0].mxu0
      %965 = vmatprep.mubr.bf16.mxu0 0
      %966 = vmatmul.mubr.bf16.gmra.mrb[0].mxu0 %v649
      %v967 = vpop.f32.mrb[0].mxu0
      %v968 = vadd.f32 0.0, %v967
      %v969 = vpop.f32.mrb[0].mxu0
      %v970 = vpop.f32.mrb[0].mxu0
      %v971 = vadd.f32 0.0, %v970
      %v972 = vpop.f32.mrb[0].mxu0
      %973 = vmatprep.mubr.bf16.mxu0 0
      %974 = vmatmul.mubr.bf16.gmra.mrb[0].mxu0 %v652
      %v975 = vpop.f32.mrb[0].mxu0
      %v976 = vadd.f32 0.0, %v975
      %v977 = vpop.f32.mrb[0].mxu0
      %v978 = vpop.f32.mrb[0].mxu0
      %v979 = vadd.f32 0.0, %v978
      %v980 = vpop.f32.mrb[0].mxu0
      %981 = vmatprep.mubr.bf16.mxu0 0
      %982 = vmatmul.mubr.bf16.gmra.mrb[0].mxu0 %v655
      %v983 = vpop.f32.mrb[0].mxu0
      %v984 = vadd.f32 0.0, %v983
      %v985 = vpop.f32.mrb[0].mxu0
      %v986 = vpop.f32.mrb[0].mxu0
      %v987 = vadd.f32 0.0, %v986
      %v988 = vpop.f32.mrb[0].mxu0
      %989 = vmatprep.mubr.bf16.mxu0 0
      %990 = vmatmul.mubr.bf16.gmra.mrb[0].mxu0 %v658
      %v991 = vpop.f32.mrb[0].mxu0
      %v992 = vadd.f32 0.0, %v991
      %v993 = vpop.f32.mrb[0].mxu0
      %v994 = vpop.f32.mrb[0].mxu0
      %v995 = vadd.f32 0.0, %v994
      %v996 = vpop.f32.mrb[0].mxu0
      %997 = vmatprep.mubr.bf16.mxu0 0
      %998 = vmatmul.mubr.bf16.gmra.mrb[0].mxu0 %v661
      %v999 = vpop.f32.mrb[0].mxu0
      %v1000 = vadd.f32 0.0, %v999
      %v1001 = vpop.f32.mrb[0].mxu0
      %v1002 = vpop.f32.mrb[0].mxu0
      %v1003 = vadd.f32 0.0, %v1002
      %v1004 = vpop.f32.mrb[0].mxu0
      %1005 = vmatprep.mubr.bf16.mxu0 0
      %1006 = vmatmul.mubr.bf16.gmra.mrb[0].mxu0 %v664
      %v1007 = vpop.f32.mrb[0].mxu0
      %v1008 = vadd.f32 0.0, %v1007
      %v1009 = vpop.f32.mrb[0].mxu0
      %v1010 = vpop.f32.mrb[0].mxu0
      %v1011 = vadd.f32 0.0, %v1010
      %v1012 = vpop.f32.mrb[0].mxu0
      %1013 = vmatprep.mubr.bf16.mxu0 0
      %1014 = vmatmul.mubr.bf16.gmra.mrb[0].mxu0 %v667
      %v1015 = vpop.f32.mrb[0].mxu0
      %v1016 = vadd.f32 0.0, %v1015
      %v1017 = vpop.f32.mrb[0].mxu0
      %v1018 = vpop.f32.mrb[0].mxu0
      %v1019 = vadd.f32 0.0, %v1018
      %v1020 = vpop.f32.mrb[0].mxu0
      %1021 = vmatprep.mubr.bf16.mxu0 0
      %1022 = vmatmul.mubr.bf16.gmra.mrb[0].mxu0 %v670
      %v1023 = vpop.f32.mrb[0].mxu0
      %v1024 = vadd.f32 0.0, %v1023
      %v1025 = vpop.f32.mrb[0].mxu0
      %v1026 = vpop.f32.mrb[0].mxu0
      %v1027 = vadd.f32 0.0, %v1026
      %v1028 = vpop.f32.mrb[0].mxu0
      %1029 = vmatprep.mubr.bf16.mxu0 0
      %1030 = vmatmul.mubr.bf16.gmra.mrb[0].mxu0 %v673
      %v1031 = vpop.f32.mrb[0].mxu0
      %v1032 = vadd.f32 0.0, %v1031
      %v1033 = vpop.f32.mrb[0].mxu0
      %v1034 = vpop.f32.mrb[0].mxu0
      %v1035 = vadd.f32 0.0, %v1034
      %v1036 = vpop.f32.mrb[0].mxu0
      %1037 = vmatprep.mubr.bf16.mxu0 0
      %1038 = vmatmul.mubr.bf16.gmra.mrb[0].mxu0 %v676
      %v1039 = vpop.f32.mrb[0].mxu0
      %v1040 = vadd.f32 0.0, %v1039
      %v1041 = vpop.f32.mrb[0].mxu0
      %v1042 = vpop.f32.mrb[0].mxu0
      %v1043 = vadd.f32 0.0, %v1042
      %v1044 = vpop.f32.mrb[0].mxu0
      %1045 = vmatprep.mubr.bf16.mxu0 0
      %1046 = vmatmul.mubr.bf16.gmra.mrb[0].mxu0 %v679
      %v1047 = vpop.f32.mrb[0].mxu0
      %v1048 = vadd.f32 0.0, %v1047
      %v1049 = vpop.f32.mrb[0].mxu0
      %v1050 = vpop.f32.mrb[0].mxu0
      %v1051 = vadd.f32 0.0, %v1050
      %v1052 = vpop.f32.mrb[0].mxu0
      %1053 = vmatprep.mubr.bf16.mxu0 0
      %1054 = vmatmul.mubr.bf16.gmra.mrb[0].mxu0 %v682
      %v1055 = vpop.f32.mrb[0].mxu0
      %v1056 = vadd.f32 0.0, %v1055
      %v1057 = vpop.f32.mrb[0].mxu0
      %v1058 = vpop.f32.mrb[0].mxu0
      %v1059 = vadd.f32 0.0, %v1058
      %v1060 = vpop.f32.mrb[0].mxu0
      %1061 = vmatprep.mubr.bf16.mxu0 0
      %1062 = vmatmul.mubr.bf16.gmra.mrb[0].mxu0 %v685
      %v1063 = vpop.f32.mrb[0].mxu0
      %v1064 = vadd.f32 0.0, %v1063
      %v1065 = vpop.f32.mrb[0].mxu0
      %v1066 = vpop.f32.mrb[0].mxu0
      %v1067 = vadd.f32 0.0, %v1066
      %v1068 = vpop.f32.mrb[0].mxu0
      %1069 = vmatprep.mubr.bf16.mxu0 0
      %1070 = vmatmul.mubr.bf16.gmra.mrb[0].mxu0 %v688
      %v1071 = vpop.f32.mrb[0].mxu0
      %v1072 = vadd.f32 0.0, %v1071
      %v1073 = vpop.f32.mrb[0].mxu0
      %v1074 = vpop.f32.mrb[0].mxu0
      %v1075 = vadd.f32 0.0, %v1074
      %v1076 = vpop.f32.mrb[0].mxu0
      %1077 = vmatprep.mubr.bf16.mxu0 0
      %1078 = vmatmul.mubr.bf16.gmra.mrb[0].mxu0 %v691
      %v1079 = vpop.f32.mrb[0].mxu0
      %v1080 = vadd.f32 0.0, %v1079
      %v1081 = vpop.f32.mrb[0].mxu0
      %v1082 = vpop.f32.mrb[0].mxu0
      %v1083 = vadd.f32 0.0, %v1082
      %v1084 = vpop.f32.mrb[0].mxu0
      %1085 = vmatprep.mubr.bf16.mxu0 0
      %1086 = vmatmul.mubr.bf16.gmra.mrb[0].mxu0 %v694
      %v1087 = vpop.f32.mrb[0].mxu0
      %v1088 = vadd.f32 0.0, %v1087
      %v1089 = vpop.f32.mrb[0].mxu0
      %v1090 = vpop.f32.mrb[0].mxu0
      %v1091 = vadd.f32 0.0, %v1090
      %v1092 = vpop.f32.mrb[0].mxu0
      %1093 = vmatprep.mubr.bf16.mxu0 0
      %1094 = vmatmul.mubr.bf16.gmra.mrb[0].mxu0 %v697
      %v1095 = vpop.f32.mrb[0].mxu0
      %v1096 = vadd.f32 0.0, %v1095
      %v1097 = vpop.f32.mrb[0].mxu0
      %v1098 = vpop.f32.mrb[0].mxu0
      %v1099 = vadd.f32 0.0, %v1098
      %v1100 = vpop.f32.mrb[0].mxu0
      %1101 = vmatprep.mubr.bf16.mxu0 0
      %1102 = vmatmul.mubr.bf16.gmra.mrb[0].mxu0 %v700
      %v1103 = vpop.f32.mrb[0].mxu0
      %v1104 = vadd.f32 0.0, %v1103
      %v1105 = vpop.f32.mrb[0].mxu0
      %v1106 = vpop.f32.mrb[0].mxu0
      %v1107 = vadd.f32 0.0, %v1106
      %v1108 = vpop.f32.mrb[0].mxu0
      %1109 = vmatprep.mubr.bf16.mxu0 0
      %1110 = vmatmul.mubr.bf16.gmra.mrb[0].mxu0 %v703
      %v1111 = vpop.f32.mrb[0].mxu0
      %v1112 = vadd.f32 0.0, %v1111
      %v1113 = vpop.f32.mrb[0].mxu0
      %v1114 = vpop.f32.mrb[0].mxu0
      %v1115 = vadd.f32 0.0, %v1114
      %v1116 = vpop.f32.mrb[0].mxu0
      %1117 = vmatprep.mubr.bf16.mxu0 0
      %1118 = vmatmul.mubr.bf16.gmra.mrb[0].mxu0 %v706
      %v1119 = vpop.f32.mrb[0].mxu0
      %v1120 = vadd.f32 0.0, %v1119
      %v1121 = vpop.f32.mrb[0].mxu0
      %v1122 = vpop.f32.mrb[0].mxu0
      %v1123 = vadd.f32 0.0, %v1122
      %v1124 = vpop.f32.mrb[0].mxu0
      %1125 = vmatprep.mubr.bf16.mxu0 0
      %1126 = vmatmul.mubr.bf16.gmra.mrb[0].mxu0 %v709
      %v1127 = vpop.f32.mrb[0].mxu0
      %v1128 = vadd.f32 0.0, %v1127
      %v1129 = vpop.f32.mrb[0].mxu0
      %v1130 = vpop.f32.mrb[0].mxu0
      %v1131 = vadd.f32 0.0, %v1130
      %v1132 = vpop.f32.mrb[0].mxu0
      %1133 = vdwg.mxu0
      %v1134 = vld [vmem:[%s2] sm:$0x1]
      %v1136 = vlaneseq
      %v1137 = vshrl.u32 %v1136, 7
      %v1138 = vsub.s32 0, %v1137
      %v1139 = vrot.slane %v1134, %v1138
      %v1141 = vmul.f32 %v752, %v1139
      %v1142 = vmul.f32 %v755, %v1139
      %v1143 = vmul.f32 %v760, %v1139
      %v1144 = vmul.f32 %v763, %v1139
      %v1145 = vmul.f32 %v768, %v1139
      %v1146 = vmul.f32 %v771, %v1139
      %v1147 = vmul.f32 %v776, %v1139
      %v1148 = vmul.f32 %v779, %v1139
      %v1149 = vmul.f32 %v784, %v1139
      %v1150 = vmul.f32 %v787, %v1139
      %v1151 = vmul.f32 %v792, %v1139
      %v1152 = vmul.f32 %v795, %v1139
      %v1153 = vmul.f32 %v800, %v1139
      %v1154 = vmul.f32 %v803, %v1139
      %v1155 = vmul.f32 %v808, %v1139
      %v1156 = vmul.f32 %v811, %v1139
      %v1157 = vmul.f32 %v816, %v1139
      %v1158 = vmul.f32 %v819, %v1139
      %v1159 = vmul.f32 %v824, %v1139
      %v1160 = vmul.f32 %v827, %v1139
      %v1161 = vmul.f32 %v832, %v1139
      %v1162 = vmul.f32 %v835, %v1139
      %v1163 = vmul.f32 %v840, %v1139
      %v1164 = vmul.f32 %v843, %v1139
      %v1165 = vmul.f32 %v848, %v1139
      %v1166 = vmul.f32 %v851, %v1139
      %v1167 = vmul.f32 %v856, %v1139
      %v1168 = vmul.f32 %v859, %v1139
      %v1169 = vmul.f32 %v864, %v1139
      %v1170 = vmul.f32 %v867, %v1139
      %v1171 = vmul.f32 %v872, %v1139
      %v1172 = vmul.f32 %v875, %v1139
      %v1173 = vmul.f32 %v880, %v1139
      %v1174 = vmul.f32 %v883, %v1139
      %v1175 = vmul.f32 %v888, %v1139
      %v1176 = vmul.f32 %v891, %v1139
      %v1177 = vmul.f32 %v896, %v1139
      %v1178 = vmul.f32 %v899, %v1139
      %v1179 = vmul.f32 %v904, %v1139
      %v1180 = vmul.f32 %v907, %v1139
      %v1181 = vmul.f32 %v912, %v1139
      %v1182 = vmul.f32 %v915, %v1139
      %v1183 = vmul.f32 %v920, %v1139
      %v1184 = vmul.f32 %v923, %v1139
      %v1185 = vmul.f32 %v928, %v1139
      %v1186 = vmul.f32 %v931, %v1139
      %v1187 = vmul.f32 %v936, %v1139
      %v1188 = vmul.f32 %v939, %v1139
      %v1189 = vmul.f32 %v944, %v1139
      %v1190 = vmul.f32 %v947, %v1139
      %v1191 = vmul.f32 %v952, %v1139
      %v1192 = vmul.f32 %v955, %v1139
      %v1193 = vmul.f32 %v960, %v1139
      %v1194 = vmul.f32 %v963, %v1139
      %v1195 = vmul.f32 %v968, %v1139
      %v1196 = vmul.f32 %v971, %v1139
      %v1197 = vmul.f32 %v976, %v1139
      %v1198 = vmul.f32 %v979, %v1139
      %v1199 = vmul.f32 %v984, %v1139
      %v1200 = vmul.f32 %v987, %v1139
      %v1201 = vmul.f32 %v992, %v1139
      %v1202 = vmul.f32 %v995, %v1139
      %v1203 = vmul.f32 %v1000, %v1139
      %v1204 = vmul.f32 %v1003, %v1139
      %v1205 = vmul.f32 %v1008, %v1139
      %v1206 = vmul.f32 %v1011, %v1139
      %v1207 = vmul.f32 %v1016, %v1139
      %v1208 = vmul.f32 %v1019, %v1139
      %v1209 = vmul.f32 %v1024, %v1139
      %v1210 = vmul.f32 %v1027, %v1139
      %v1211 = vmul.f32 %v1032, %v1139
      %v1212 = vmul.f32 %v1035, %v1139
      %v1213 = vmul.f32 %v1040, %v1139
      %v1214 = vmul.f32 %v1043, %v1139
      %v1215 = vmul.f32 %v1048, %v1139
      %v1216 = vmul.f32 %v1051, %v1139
      %v1217 = vmul.f32 %v1056, %v1139
      %v1218 = vmul.f32 %v1059, %v1139
      %v1219 = vmul.f32 %v1064, %v1139
      %v1220 = vmul.f32 %v1067, %v1139
      %v1221 = vmul.f32 %v1072, %v1139
      %v1222 = vmul.f32 %v1075, %v1139
      %v1223 = vmul.f32 %v1080, %v1139
      %v1224 = vmul.f32 %v1083, %v1139
      %v1225 = vmul.f32 %v1088, %v1139
      %v1226 = vmul.f32 %v1091, %v1139
      %v1227 = vmul.f32 %v1096, %v1139
      %v1228 = vmul.f32 %v1099, %v1139
      %v1229 = vmul.f32 %v1104, %v1139
      %v1230 = vmul.f32 %v1107, %v1139
      %v1231 = vmul.f32 %v1112, %v1139
      %v1232 = vmul.f32 %v1115, %v1139
      %v1233 = vmul.f32 %v1120, %v1139
      %v1234 = vmul.f32 %v1123, %v1139
      %v1235 = vmul.f32 %v1128, %v1139
      %v1236 = vmul.f32 %v1131, %v1139
      %v1237 = vld [vmem:[%s3] sm:$0x1]
      %v1239 = vlaneseq
      %v1240 = vshrl.u32 %v1239, 7
      %v1241 = vsub.s32 0, %v1240
      %v1242 = vrot.slane %v1237, %v1241
      %v1244 = vadd.f32 %v1141, %v1242
      %v1245 = vadd.f32 %v1142, %v1242
      %v1246 = vadd.f32 %v1143, %v1242
      %v1247 = vadd.f32 %v1144, %v1242
      %v1248 = vadd.f32 %v1145, %v1242
      %v1249 = vadd.f32 %v1146, %v1242
      %v1250 = vadd.f32 %v1147, %v1242
      %v1251 = vadd.f32 %v1148, %v1242
      %v1252 = vadd.f32 %v1149, %v1242
      %v1253 = vadd.f32 %v1150, %v1242
      %v1254 = vadd.f32 %v1151, %v1242
      %v1255 = vadd.f32 %v1152, %v1242
      %v1256 = vadd.f32 %v1153, %v1242
      %v1257 = vadd.f32 %v1154, %v1242
      %v1258 = vadd.f32 %v1155, %v1242
      %v1259 = vadd.f32 %v1156, %v1242
      %v1260 = vadd.f32 %v1157, %v1242
      %v1261 = vadd.f32 %v1158, %v1242
      %v1262 = vadd.f32 %v1159, %v1242
      %v1263 = vadd.f32 %v1160, %v1242
      %v1264 = vadd.f32 %v1161, %v1242
      %v1265 = vadd.f32 %v1162, %v1242
      %v1266 = vadd.f32 %v1163, %v1242
      %v1267 = vadd.f32 %v1164, %v1242
      %v1268 = vadd.f32 %v1165, %v1242
      %v1269 = vadd.f32 %v1166, %v1242
      %v1270 = vadd.f32 %v1167, %v1242
      %v1271 = vadd.f32 %v1168, %v1242
      %v1272 = vadd.f32 %v1169, %v1242
      %v1273 = vadd.f32 %v1170, %v1242
      %v1274 = vadd.f32 %v1171, %v1242
      %v1275 = vadd.f32 %v1172, %v1242
      %v1276 = vadd.f32 %v1173, %v1242
      %v1277 = vadd.f32 %v1174, %v1242
      %v1278 = vadd.f32 %v1175, %v1242
      %v1279 = vadd.f32 %v1176, %v1242
      %v1280 = vadd.f32 %v1177, %v1242
      %v1281 = vadd.f32 %v1178, %v1242
      %v1282 = vadd.f32 %v1179, %v1242
      %v1283 = vadd.f32 %v1180, %v1242
      %v1284 = vadd.f32 %v1181, %v1242
      %v1285 = vadd.f32 %v1182, %v1242
      %v1286 = vadd.f32 %v1183, %v1242
      %v1287 = vadd.f32 %v1184, %v1242
      %v1288 = vadd.f32 %v1185, %v1242
      %v1289 = vadd.f32 %v1186, %v1242
      %v1290 = vadd.f32 %v1187, %v1242
      %v1291 = vadd.f32 %v1188, %v1242
      %v1292 = vadd.f32 %v1189, %v1242
      %v1293 = vadd.f32 %v1190, %v1242
      %v1294 = vadd.f32 %v1191, %v1242
      %v1295 = vadd.f32 %v1192, %v1242
      %v1296 = vadd.f32 %v1193, %v1242
      %v1297 = vadd.f32 %v1194, %v1242
      %v1298 = vadd.f32 %v1195, %v1242
      %v1299 = vadd.f32 %v1196, %v1242
      %v1300 = vadd.f32 %v1197, %v1242
      %v1301 = vadd.f32 %v1198, %v1242
      %v1302 = vadd.f32 %v1199, %v1242
      %v1303 = vadd.f32 %v1200, %v1242
      %v1304 = vadd.f32 %v1201, %v1242
      %v1305 = vadd.f32 %v1202, %v1242
      %v1306 = vadd.f32 %v1203, %v1242
      %v1307 = vadd.f32 %v1204, %v1242
      %v1308 = vadd.f32 %v1205, %v1242
      %v1309 = vadd.f32 %v1206, %v1242
      %v1310 = vadd.f32 %v1207, %v1242
      %v1311 = vadd.f32 %v1208, %v1242
      %v1312 = vadd.f32 %v1209, %v1242
      %v1313 = vadd.f32 %v1210, %v1242
      %v1314 = vadd.f32 %v1211, %v1242
      %v1315 = vadd.f32 %v1212, %v1242
      %v1316 = vadd.f32 %v1213, %v1242
      %v1317 = vadd.f32 %v1214, %v1242
      %v1318 = vadd.f32 %v1215, %v1242
      %v1319 = vadd.f32 %v1216, %v1242
      %v1320 = vadd.f32 %v1217, %v1242
      %v1321 = vadd.f32 %v1218, %v1242
      %v1322 = vadd.f32 %v1219, %v1242
      %v1323 = vadd.f32 %v1220, %v1242
      %v1324 = vadd.f32 %v1221, %v1242
      %v1325 = vadd.f32 %v1222, %v1242
      %v1326 = vadd.f32 %v1223, %v1242
      %v1327 = vadd.f32 %v1224, %v1242
      %v1328 = vadd.f32 %v1225, %v1242
      %v1329 = vadd.f32 %v1226, %v1242
      %v1330 = vadd.f32 %v1227, %v1242
      %v1331 = vadd.f32 %v1228, %v1242
      %v1332 = vadd.f32 %v1229, %v1242
      %v1333 = vadd.f32 %v1230, %v1242
      %v1334 = vadd.f32 %v1231, %v1242
      %v1335 = vadd.f32 %v1232, %v1242
      %v1336 = vadd.f32 %v1233, %v1242
      %v1337 = vadd.f32 %v1234, %v1242
      %v1338 = vadd.f32 %v1235, %v1242
      %v1339 = vadd.f32 %v1236, %v1242
      %v1340 = vmax.f32 %v1244, 0.0
      %v1341 = vmax.f32 %v1245, 0.0
      %v1342 = vmax.f32 %v1246, 0.0
      %v1343 = vmax.f32 %v1247, 0.0
      %v1344 = vmax.f32 %v1248, 0.0
      %v1345 = vmax.f32 %v1249, 0.0
      %v1346 = vmax.f32 %v1250, 0.0
      %v1347 = vmax.f32 %v1251, 0.0
      %v1348 = vmax.f32 %v1252, 0.0
      %v1349 = vmax.f32 %v1253, 0.0
      %v1350 = vmax.f32 %v1254, 0.0
      %v1351 = vmax.f32 %v1255, 0.0
      %v1352 = vmax.f32 %v1256, 0.0
      %v1353 = vmax.f32 %v1257, 0.0
      %v1354 = vmax.f32 %v1258, 0.0
      %v1355 = vmax.f32 %v1259, 0.0
      %v1356 = vmax.f32 %v1260, 0.0
      %v1357 = vmax.f32 %v1261, 0.0
      %v1358 = vmax.f32 %v1262, 0.0
      %v1359 = vmax.f32 %v1263, 0.0
      %v1360 = vmax.f32 %v1264, 0.0
      %v1361 = vmax.f32 %v1265, 0.0
      %v1362 = vmax.f32 %v1266, 0.0
      %v1363 = vmax.f32 %v1267, 0.0
      %v1364 = vmax.f32 %v1268, 0.0
      %v1365 = vmax.f32 %v1269, 0.0
      %v1366 = vmax.f32 %v1270, 0.0
      %v1367 = vmax.f32 %v1271, 0.0
      %v1368 = vmax.f32 %v1272, 0.0
      %v1369 = vmax.f32 %v1273, 0.0
      %v1370 = vmax.f32 %v1274, 0.0
      %v1371 = vmax.f32 %v1275, 0.0
      %v1372 = vmax.f32 %v1276, 0.0
      %v1373 = vmax.f32 %v1277, 0.0
      %v1374 = vmax.f32 %v1278, 0.0
      %v1375 = vmax.f32 %v1279, 0.0
      %v1376 = vmax.f32 %v1280, 0.0
      %v1377 = vmax.f32 %v1281, 0.0
      %v1378 = vmax.f32 %v1282, 0.0
      %v1379 = vmax.f32 %v1283, 0.0
      %v1380 = vmax.f32 %v1284, 0.0
      %v1381 = vmax.f32 %v1285, 0.0
      %v1382 = vmax.f32 %v1286, 0.0
      %v1383 = vmax.f32 %v1287, 0.0
      %v1384 = vmax.f32 %v1288, 0.0
      %v1385 = vmax.f32 %v1289, 0.0
      %v1386 = vmax.f32 %v1290, 0.0
      %v1387 = vmax.f32 %v1291, 0.0
      %v1388 = vmax.f32 %v1292, 0.0
      %v1389 = vmax.f32 %v1293, 0.0
      %v1390 = vmax.f32 %v1294, 0.0
      %v1391 = vmax.f32 %v1295, 0.0
      %v1392 = vmax.f32 %v1296, 0.0
      %v1393 = vmax.f32 %v1297, 0.0
      %v1394 = vmax.f32 %v1298, 0.0
      %v1395 = vmax.f32 %v1299, 0.0
      %v1396 = vmax.f32 %v1300, 0.0
      %v1397 = vmax.f32 %v1301, 0.0
      %v1398 = vmax.f32 %v1302, 0.0
      %v1399 = vmax.f32 %v1303, 0.0
      %v1400 = vmax.f32 %v1304, 0.0
      %v1401 = vmax.f32 %v1305, 0.0
      %v1402 = vmax.f32 %v1306, 0.0
      %v1403 = vmax.f32 %v1307, 0.0
      %v1404 = vmax.f32 %v1308, 0.0
      %v1405 = vmax.f32 %v1309, 0.0
      %v1406 = vmax.f32 %v1310, 0.0
      %v1407 = vmax.f32 %v1311, 0.0
      %v1408 = vmax.f32 %v1312, 0.0
      %v1409 = vmax.f32 %v1313, 0.0
      %v1410 = vmax.f32 %v1314, 0.0
      %v1411 = vmax.f32 %v1315, 0.0
      %v1412 = vmax.f32 %v1316, 0.0
      %v1413 = vmax.f32 %v1317, 0.0
      %v1414 = vmax.f32 %v1318, 0.0
      %v1415 = vmax.f32 %v1319, 0.0
      %v1416 = vmax.f32 %v1320, 0.0
      %v1417 = vmax.f32 %v1321, 0.0
      %v1418 = vmax.f32 %v1322, 0.0
      %v1419 = vmax.f32 %v1323, 0.0
      %v1420 = vmax.f32 %v1324, 0.0
      %v1421 = vmax.f32 %v1325, 0.0
      %v1422 = vmax.f32 %v1326, 0.0
      %v1423 = vmax.f32 %v1327, 0.0
      %v1424 = vmax.f32 %v1328, 0.0
      %v1425 = vmax.f32 %v1329, 0.0
      %v1426 = vmax.f32 %v1330, 0.0
      %v1427 = vmax.f32 %v1331, 0.0
      %v1428 = vmax.f32 %v1332, 0.0
      %v1429 = vmax.f32 %v1333, 0.0
      %v1430 = vmax.f32 %v1334, 0.0
      %v1431 = vmax.f32 %v1335, 0.0
      %v1432 = vmax.f32 %v1336, 0.0
      %v1433 = vmax.f32 %v1337, 0.0
      %v1434 = vmax.f32 %v1338, 0.0
      %v1435 = vmax.f32 %v1339, 0.0
      %v1436 = vpack.c.bf16 %v1341, %v1340
      %v1437 = vpack.c.bf16 %v1343, %v1342
      %v1438 = vpack.c.bf16 %v1345, %v1344
      %v1439 = vpack.c.bf16 %v1347, %v1346
      %v1440 = vpack.c.bf16 %v1349, %v1348
      %v1441 = vpack.c.bf16 %v1351, %v1350
      %v1442 = vpack.c.bf16 %v1353, %v1352
      %v1443 = vpack.c.bf16 %v1355, %v1354
      %v1444 = vpack.c.bf16 %v1357, %v1356
      %v1445 = vpack.c.bf16 %v1359, %v1358
      %v1446 = vpack.c.bf16 %v1361, %v1360
      %v1447 = vpack.c.bf16 %v1363, %v1362
      %v1448 = vpack.c.bf16 %v1365, %v1364
      %v1449 = vpack.c.bf16 %v1367, %v1366
      %v1450 = vpack.c.bf16 %v1369, %v1368
      %v1451 = vpack.c.bf16 %v1371, %v1370
      %v1452 = vpack.c.bf16 %v1373, %v1372
      %v1453 = vpack.c.bf16 %v1375, %v1374
      %v1454 = vpack.c.bf16 %v1377, %v1376
      %v1455 = vpack.c.bf16 %v1379, %v1378
      %v1456 = vpack.c.bf16 %v1381, %v1380
      %v1457 = vpack.c.bf16 %v1383, %v1382
      %v1458 = vpack.c.bf16 %v1385, %v1384
      %v1459 = vpack.c.bf16 %v1387, %v1386
      %v1460 = vpack.c.bf16 %v1389, %v1388
      %v1461 = vpack.c.bf16 %v1391, %v1390
      %v1462 = vpack.c.bf16 %v1393, %v1392
      %v1463 = vpack.c.bf16 %v1395, %v1394
      %v1464 = vpack.c.bf16 %v1397, %v1396
      %v1465 = vpack.c.bf16 %v1399, %v1398
      %v1466 = vpack.c.bf16 %v1401, %v1400
      %v1467 = vpack.c.bf16 %v1403, %v1402
      %v1468 = vpack.c.bf16 %v1405, %v1404
      %v1469 = vpack.c.bf16 %v1407, %v1406
      %v1470 = vpack.c.bf16 %v1409, %v1408
      %v1471 = vpack.c.bf16 %v1411, %v1410
      %v1472 = vpack.c.bf16 %v1413, %v1412
      %v1473 = vpack.c.bf16 %v1415, %v1414
      %v1474 = vpack.c.bf16 %v1417, %v1416
      %v1475 = vpack.c.bf16 %v1419, %v1418
      %v1476 = vpack.c.bf16 %v1421, %v1420
      %v1477 = vpack.c.bf16 %v1423, %v1422
      %v1478 = vpack.c.bf16 %v1425, %v1424
      %v1479 = vpack.c.bf16 %v1427, %v1426
      %v1480 = vpack.c.bf16 %v1429, %v1428
      %v1481 = vpack.c.bf16 %v1431, %v1430
      %v1482 = vpack.c.bf16 %v1433, %v1432
      %v1483 = vpack.c.bf16 %v1435, %v1434
      %v1532 = vunpack.c.l.b16 %v1436
      %v1533 = vunpack.c.h.b16 %v1436
      %v1534 = vunpack.c.l.b16 %v1437
      %v1535 = vunpack.c.h.b16 %v1437
      %v1536 = vunpack.c.l.b16 %v1438
      %v1537 = vunpack.c.h.b16 %v1438
      %v1538 = vunpack.c.l.b16 %v1439
      %v1539 = vunpack.c.h.b16 %v1439
      %v1540 = vunpack.c.l.b16 %v1440
      %v1541 = vunpack.c.h.b16 %v1440
      %v1542 = vunpack.c.l.b16 %v1441
      %v1543 = vunpack.c.h.b16 %v1441
      %v1544 = vunpack.c.l.b16 %v1442
      %v1545 = vunpack.c.h.b16 %v1442
      %v1546 = vunpack.c.l.b16 %v1443
      %v1547 = vunpack.c.h.b16 %v1443
      %v1548 = vunpack.c.l.b16 %v1444
      %v1549 = vunpack.c.h.b16 %v1444
      %v1550 = vunpack.c.l.b16 %v1445
      %v1551 = vunpack.c.h.b16 %v1445
      %v1552 = vunpack.c.l.b16 %v1446
      %v1553 = vunpack.c.h.b16 %v1446
      %v1554 = vunpack.c.l.b16 %v1447
      %v1555 = vunpack.c.h.b16 %v1447
      %v1556 = vunpack.c.l.b16 %v1448
      %v1557 = vunpack.c.h.b16 %v1448
      %v1558 = vunpack.c.l.b16 %v1449
      %v1559 = vunpack.c.h.b16 %v1449
      %v1560 = vunpack.c.l.b16 %v1450
      %v1561 = vunpack.c.h.b16 %v1450
      %v1562 = vunpack.c.l.b16 %v1451
      %v1563 = vunpack.c.h.b16 %v1451
      %v1564 = vunpack.c.l.b16 %v1452
      %v1565 = vunpack.c.h.b16 %v1452
      %v1566 = vunpack.c.l.b16 %v1453
      %v1567 = vunpack.c.h.b16 %v1453
      %v1568 = vunpack.c.l.b16 %v1454
      %v1569 = vunpack.c.h.b16 %v1454
      %v1570 = vunpack.c.l.b16 %v1455
      %v1571 = vunpack.c.h.b16 %v1455
      %v1572 = vunpack.c.l.b16 %v1456
      %v1573 = vunpack.c.h.b16 %v1456
      %v1574 = vunpack.c.l.b16 %v1457
      %v1575 = vunpack.c.h.b16 %v1457
      %v1576 = vunpack.c.l.b16 %v1458
      %v1577 = vunpack.c.h.b16 %v1458
      %v1578 = vunpack.c.l.b16 %v1459
      %v1579 = vunpack.c.h.b16 %v1459
      %v1580 = vunpack.c.l.b16 %v1460
      %v1581 = vunpack.c.h.b16 %v1460
      %v1582 = vunpack.c.l.b16 %v1461
      %v1583 = vunpack.c.h.b16 %v1461
      %v1584 = vunpack.c.l.b16 %v1462
      %v1585 = vunpack.c.h.b16 %v1462
      %v1586 = vunpack.c.l.b16 %v1463
      %v1587 = vunpack.c.h.b16 %v1463
      %v1588 = vunpack.c.l.b16 %v1464
      %v1589 = vunpack.c.h.b16 %v1464
      %v1590 = vunpack.c.l.b16 %v1465
      %v1591 = vunpack.c.h.b16 %v1465
      %v1592 = vunpack.c.l.b16 %v1466
      %v1593 = vunpack.c.h.b16 %v1466
      %v1594 = vunpack.c.l.b16 %v1467
      %v1595 = vunpack.c.h.b16 %v1467
      %v1596 = vunpack.c.l.b16 %v1468
      %v1597 = vunpack.c.h.b16 %v1468
      %v1598 = vunpack.c.l.b16 %v1469
      %v1599 = vunpack.c.h.b16 %v1469
      %v1600 = vunpack.c.l.b16 %v1470
      %v1601 = vunpack.c.h.b16 %v1470
      %v1602 = vunpack.c.l.b16 %v1471
      %v1603 = vunpack.c.h.b16 %v1471
      %v1604 = vunpack.c.l.b16 %v1472
      %v1605 = vunpack.c.h.b16 %v1472
      %v1606 = vunpack.c.l.b16 %v1473
      %v1607 = vunpack.c.h.b16 %v1473
      %v1608 = vunpack.c.l.b16 %v1474
      %v1609 = vunpack.c.h.b16 %v1474
      %v1610 = vunpack.c.l.b16 %v1475
      %v1611 = vunpack.c.h.b16 %v1475
      %v1612 = vunpack.c.l.b16 %v1476
      %v1613 = vunpack.c.h.b16 %v1476
      %v1614 = vunpack.c.l.b16 %v1477
      %v1615 = vunpack.c.h.b16 %v1477
      %v1616 = vunpack.c.l.b16 %v1478
      %v1617 = vunpack.c.h.b16 %v1478
      %v1618 = vunpack.c.l.b16 %v1479
      %v1619 = vunpack.c.h.b16 %v1479
      %v1620 = vunpack.c.l.b16 %v1480
      %v1621 = vunpack.c.h.b16 %v1480
      %v1622 = vunpack.c.l.b16 %v1481
      %v1623 = vunpack.c.h.b16 %v1481
      %v1624 = vunpack.c.l.b16 %v1482
      %v1625 = vunpack.c.h.b16 %v1482
      %v1626 = vunpack.c.l.b16 %v1483
      %v1627 = vunpack.c.h.b16 %v1483
      %v1628 = vpack.c.b16 %v1532, %v1532
      %v1629 = vpack.c.b16 %v1533, %v1533
      %v1630 = vpack.c.b16 %v1534, %v1534
      %v1631 = vpack.c.b16 %v1535, %v1535
      %v1632 = vpack.c.b16 %v1536, %v1536
      %v1633 = vpack.c.b16 %v1537, %v1537
      %v1634 = vpack.c.b16 %v1538, %v1538
      %v1635 = vpack.c.b16 %v1539, %v1539
      %v1636 = vpack.c.b16 %v1540, %v1540
      %v1637 = vpack.c.b16 %v1541, %v1541
      %v1638 = vpack.c.b16 %v1542, %v1542
      %v1639 = vpack.c.b16 %v1543, %v1543
      %v1640 = vpack.c.b16 %v1544, %v1544
      %v1641 = vpack.c.b16 %v1545, %v1545
      %v1642 = vpack.c.b16 %v1546, %v1546
      %v1643 = vpack.c.b16 %v1547, %v1547
      %v1644 = vpack.c.b16 %v1548, %v1548
      %v1645 = vpack.c.b16 %v1549, %v1549
      %v1646 = vpack.c.b16 %v1550, %v1550
      %v1647 = vpack.c.b16 %v1551, %v1551
      %v1648 = vpack.c.b16 %v1552, %v1552
      %v1649 = vpack.c.b16 %v1553, %v1553
      %v1650 = vpack.c.b16 %v1554, %v1554
      %v1651 = vpack.c.b16 %v1555, %v1555
      %v1652 = vpack.c.b16 %v1556, %v1556
      %v1653 = vpack.c.b16 %v1557, %v1557
      %v1654 = vpack.c.b16 %v1558, %v1558
      %v1655 = vpack.c.b16 %v1559, %v1559
      %v1656 = vpack.c.b16 %v1560, %v1560
      %v1657 = vpack.c.b16 %v1561, %v1561
      %v1658 = vpack.c.b16 %v1562, %v1562
      %v1659 = vpack.c.b16 %v1563, %v1563
      %v1660 = vpack.c.b16 %v1564, %v1564
      %v1661 = vpack.c.b16 %v1565, %v1565
      %v1662 = vpack.c.b16 %v1566, %v1566
      %v1663 = vpack.c.b16 %v1567, %v1567
      %v1664 = vpack.c.b16 %v1568, %v1568
      %v1665 = vpack.c.b16 %v1569, %v1569
      %v1666 = vpack.c.b16 %v1570, %v1570
      %v1667 = vpack.c.b16 %v1571, %v1571
      %v1668 = vpack.c.b16 %v1572, %v1572
      %v1669 = vpack.c.b16 %v1573, %v1573
      %v1670 = vpack.c.b16 %v1574, %v1574
      %v1671 = vpack.c.b16 %v1575, %v1575
      %v1672 = vpack.c.b16 %v1576, %v1576
      %v1673 = vpack.c.b16 %v1577, %v1577
      %v1674 = vpack.c.b16 %v1578, %v1578
      %v1675 = vpack.c.b16 %v1579, %v1579
      %v1676 = vpack.c.b16 %v1580, %v1580
      %v1677 = vpack.c.b16 %v1581, %v1581
      %v1678 = vpack.c.b16 %v1582, %v1582
      %v1679 = vpack.c.b16 %v1583, %v1583
      %v1680 = vpack.c.b16 %v1584, %v1584
      %v1681 = vpack.c.b16 %v1585, %v1585
      %v1682 = vpack.c.b16 %v1586, %v1586
      %v1683 = vpack.c.b16 %v1587, %v1587
      %v1684 = vpack.c.b16 %v1588, %v1588
      %v1685 = vpack.c.b16 %v1589, %v1589
      %v1686 = vpack.c.b16 %v1590, %v1590
      %v1687 = vpack.c.b16 %v1591, %v1591
      %v1688 = vpack.c.b16 %v1592, %v1592
      %v1689 = vpack.c.b16 %v1593, %v1593
      %v1690 = vpack.c.b16 %v1594, %v1594
      %v1691 = vpack.c.b16 %v1595, %v1595
      %v1692 = vpack.c.b16 %v1596, %v1596
      %v1693 = vpack.c.b16 %v1597, %v1597
      %v1694 = vpack.c.b16 %v1598, %v1598
      %v1695 = vpack.c.b16 %v1599, %v1599
      %v1696 = vpack.c.b16 %v1600, %v1600
      %v1697 = vpack.c.b16 %v1601, %v1601
      %v1698 = vpack.c.b16 %v1602, %v1602
      %v1699 = vpack.c.b16 %v1603, %v1603
      %v1700 = vpack.c.b16 %v1604, %v1604
      %v1701 = vpack.c.b16 %v1605, %v1605
      %v1702 = vpack.c.b16 %v1606, %v1606
      %v1703 = vpack.c.b16 %v1607, %v1607
      %v1704 = vpack.c.b16 %v1608, %v1608
      %v1705 = vpack.c.b16 %v1609, %v1609
      %v1706 = vpack.c.b16 %v1610, %v1610
      %v1707 = vpack.c.b16 %v1611, %v1611
      %v1708 = vpack.c.b16 %v1612, %v1612
      %v1709 = vpack.c.b16 %v1613, %v1613
      %v1710 = vpack.c.b16 %v1614, %v1614
      %v1711 = vpack.c.b16 %v1615, %v1615
      %v1712 = vpack.c.b16 %v1616, %v1616
      %v1713 = vpack.c.b16 %v1617, %v1617
      %v1714 = vpack.c.b16 %v1618, %v1618
      %v1715 = vpack.c.b16 %v1619, %v1619
      %v1716 = vpack.c.b16 %v1620, %v1620
      %v1717 = vpack.c.b16 %v1621, %v1621
      %v1718 = vpack.c.b16 %v1622, %v1622
      %v1719 = vpack.c.b16 %v1623, %v1623
      %v1720 = vpack.c.b16 %v1624, %v1624
      %v1721 = vpack.c.b16 %v1625, %v1625
      %v1722 = vpack.c.b16 %v1626, %v1626
      %v1723 = vpack.c.b16 %v1627, %v1627
      %1820 = vst [vmem:[%s199] sm:$0xf] %v1628
      %1821 = vst [vmem:[%s199 + $0x4] sm:$0xf] %v1629
      %1822 = vst [vmem:[%s199 + $0x8] sm:$0xf] %v1630
      %1823 = vst [vmem:[%s199 + $0xc] sm:$0xf] %v1631
      %1824 = vst [vmem:[%s199 + $0x10] sm:$0xf] %v1632
      %1825 = vst [vmem:[%s199 + $0x14] sm:$0xf] %v1633
      %1826 = vst [vmem:[%s199 + $0x18] sm:$0xf] %v1634
      %1827 = vst [vmem:[%s199 + $0x1c] sm:$0xf] %v1635
      %1828 = vst [vmem:[%s199 + $0x20] sm:$0xf] %v1636
      %1829 = vst [vmem:[%s199 + $0x24] sm:$0xf] %v1637
      %1830 = vst [vmem:[%s199 + $0x28] sm:$0xf] %v1638
      %1831 = vst [vmem:[%s199 + $0x2c] sm:$0xf] %v1639
      %1832 = vst [vmem:[%s199 + $0x30] sm:$0xf] %v1640
      %1833 = vst [vmem:[%s199 + $0x34] sm:$0xf] %v1641
      %1834 = vst [vmem:[%s199 + $0x38] sm:$0xf] %v1642
      %1835 = vst [vmem:[%s199 + $0x3c] sm:$0xf] %v1643
      %1836 = vst [vmem:[%s199 + $0x40] sm:$0xf] %v1644
      %1837 = vst [vmem:[%s199 + $0x44] sm:$0xf] %v1645
      %1838 = vst [vmem:[%s199 + $0x48] sm:$0xf] %v1646
      %1839 = vst [vmem:[%s199 + $0x4c] sm:$0xf] %v1647
      %1840 = vst [vmem:[%s199 + $0x50] sm:$0xf] %v1648
      %1841 = vst [vmem:[%s199 + $0x54] sm:$0xf] %v1649
      %1842 = vst [vmem:[%s199 + $0x58] sm:$0xf] %v1650
      %1843 = vst [vmem:[%s199 + $0x5c] sm:$0xf] %v1651
      %1844 = vst [vmem:[%s199 + $0x60] sm:$0xf] %v1652
      %1845 = vst [vmem:[%s199 + $0x64] sm:$0xf] %v1653
      %1846 = vst [vmem:[%s199 + $0x68] sm:$0xf] %v1654
      %1847 = vst [vmem:[%s199 + $0x6c] sm:$0xf] %v1655
      %1848 = vst [vmem:[%s199 + $0x70] sm:$0xf] %v1656
      %1849 = vst [vmem:[%s199 + $0x74] sm:$0xf] %v1657
      %1850 = vst [vmem:[%s199 + $0x78] sm:$0xf] %v1658
      %1851 = vst [vmem:[%s199 + $0x7c] sm:$0xf] %v1659
      %1852 = vst [vmem:[%s199 + $0x80] sm:$0xf] %v1660
      %1853 = vst [vmem:[%s199 + $0x84] sm:$0xf] %v1661
      %1854 = vst [vmem:[%s199 + $0x88] sm:$0xf] %v1662
      %1855 = vst [vmem:[%s199 + $0x8c] sm:$0xf] %v1663
      %1856 = vst [vmem:[%s199 + $0x90] sm:$0xf] %v1664
      %1857 = vst [vmem:[%s199 + $0x94] sm:$0xf] %v1665
      %1858 = vst [vmem:[%s199 + $0x98] sm:$0xf] %v1666
      %1859 = vst [vmem:[%s199 + $0x9c] sm:$0xf] %v1667
      %1860 = vst [vmem:[%s199 + $0xa0] sm:$0xf] %v1668
      %1861 = vst [vmem:[%s199 + $0xa4] sm:$0xf] %v1669
      %1862 = vst [vmem:[%s199 + $0xa8] sm:$0xf] %v1670
      %1863 = vst [vmem:[%s199 + $0xac] sm:$0xf] %v1671
      %1864 = vst [vmem:[%s199 + $0xb0] sm:$0xf] %v1672
      %1865 = vst [vmem:[%s199 + $0xb4] sm:$0xf] %v1673
      %1866 = vst [vmem:[%s199 + $0xb8] sm:$0xf] %v1674
      %1867 = vst [vmem:[%s199 + $0xbc] sm:$0xf] %v1675
      %1868 = vst [vmem:[%s199 + $0xc0] sm:$0xf] %v1676
      %1869 = vst [vmem:[%s199 + $0xc4] sm:$0xf] %v1677
      %1870 = vst [vmem:[%s199 + $0xc8] sm:$0xf] %v1678
      %1871 = vst [vmem:[%s199 + $0xcc] sm:$0xf] %v1679
      %1872 = vst [vmem:[%s199 + $0xd0] sm:$0xf] %v1680
      %1873 = vst [vmem:[%s199 + $0xd4] sm:$0xf] %v1681
      %1874 = vst [vmem:[%s199 + $0xd8] sm:$0xf] %v1682
      %1875 = vst [vmem:[%s199 + $0xdc] sm:$0xf] %v1683
      %1876 = vst [vmem:[%s199 + $0xe0] sm:$0xf] %v1684
      %1877 = vst [vmem:[%s199 + $0xe4] sm:$0xf] %v1685
      %1878 = vst [vmem:[%s199 + $0xe8] sm:$0xf] %v1686
      %1879 = vst [vmem:[%s199 + $0xec] sm:$0xf] %v1687
      %1880 = vst [vmem:[%s199 + $0xf0] sm:$0xf] %v1688
      %1881 = vst [vmem:[%s199 + $0xf4] sm:$0xf] %v1689
      %1882 = vst [vmem:[%s199 + $0xf8] sm:$0xf] %v1690
      %1883 = vst [vmem:[%s199 + $0xfc] sm:$0xf] %v1691
      %1884 = vst [vmem:[%s199 + $0x100] sm:$0xf] %v1692
      %1885 = vst [vmem:[%s199 + $0x104] sm:$0xf] %v1693
      %1886 = vst [vmem:[%s199 + $0x108] sm:$0xf] %v1694
      %1887 = vst [vmem:[%s199 + $0x10c] sm:$0xf] %v1695
      %1888 = vst [vmem:[%s199 + $0x110] sm:$0xf] %v1696
      %1889 = vst [vmem:[%s199 + $0x114] sm:$0xf] %v1697
      %1890 = vst [vmem:[%s199 + $0x118] sm:$0xf] %v1698
      %1891 = vst [vmem:[%s199 + $0x11c] sm:$0xf] %v1699
      %1892 = vst [vmem:[%s199 + $0x120] sm:$0xf] %v1700
      %1893 = vst [vmem:[%s199 + $0x124] sm:$0xf] %v1701
      %1894 = vst [vmem:[%s199 + $0x128] sm:$0xf] %v1702
      %1895 = vst [vmem:[%s199 + $0x12c] sm:$0xf] %v1703
      %1896 = vst [vmem:[%s199 + $0x130] sm:$0xf] %v1704
      %1897 = vst [vmem:[%s199 + $0x134] sm:$0xf] %v1705
      %1898 = vst [vmem:[%s199 + $0x138] sm:$0xf] %v1706
      %1899 = vst [vmem:[%s199 + $0x13c] sm:$0xf] %v1707
      %1900 = vst [vmem:[%s199 + $0x140] sm:$0xf] %v1708
      %1901 = vst [vmem:[%s199 + $0x144] sm:$0xf] %v1709
      %1902 = vst [vmem:[%s199 + $0x148] sm:$0xf] %v1710
      %1903 = vst [vmem:[%s199 + $0x14c] sm:$0xf] %v1711
      %1904 = vst [vmem:[%s199 + $0x150] sm:$0xf] %v1712
      %1905 = vst [vmem:[%s199 + $0x154] sm:$0xf] %v1713
      %1906 = vst [vmem:[%s199 + $0x158] sm:$0xf] %v1714
      %1907 = vst [vmem:[%s199 + $0x15c] sm:$0xf] %v1715
      %1908 = vst [vmem:[%s199 + $0x160] sm:$0xf] %v1716
      %1909 = vst [vmem:[%s199 + $0x164] sm:$0xf] %v1717
      %1910 = vst [vmem:[%s199 + $0x168] sm:$0xf] %v1718
      %1911 = vst [vmem:[%s199 + $0x16c] sm:$0xf] %v1719
      %1912 = vst [vmem:[%s199 + $0x170] sm:$0xf] %v1720
      %1913 = vst [vmem:[%s199 + $0x174] sm:$0xf] %v1721
      %1914 = vst [vmem:[%s199 + $0x178] sm:$0xf] %v1722
      %1915 = vst [vmem:[%s199 + $0x17c] sm:$0xf] %v1723
      %s1916 = smul.u32 96, %s15
      %p1917 = scmp.lt.s32.totalorder %s1916, 191
      %s1918 = scalar_select %p1917, %s1916, 191
      %s1919 = smul.addr %s1918, 4
      %s1920 = scalar_lea.vmem %s4, %s1919
      // Predicated region
      $region37: #{entry_encoder_forward.7} parent=35 // pred_check
        %p1921 = pneg %p122
      $region38: #{entry_encoder_forward.7} parent=35 // pred_check_branch
        %1923 = sbr.rel (%p1921) target = $region40
      $region39: #{entry_encoder_forward.7} parent=35 // pred_region
        %s1924 = smul.u32 96, %s15
      $region40: #{entry_encoder_forward.7} parent=35 // pred_fallthru
        _
    $region36: #{entry_encoder_forward.7} parent=5 // pred_fallthru
      _
    %p1925 = scmp.le.s32.totalorder 2, %s10
    // Predicated region
    $region41: #{entry_encoder_forward.7} parent=5 // pred_check
      %p1926 = pneg %p1925
    $region42: #{entry_encoder_forward.7} parent=5 // pred_check_branch
      %1928 = sbr.rel (%p1926) target = $region44
    $region43: #{entry_encoder_forward.7} parent=5 // pred_region
      %s1929 = ssub.s32 %s10, 2
      // Predicated region
      $region45: #{entry_encoder_forward.7} parent=43 // pred_check
        %p1930 = pneg %p128
      $region46: #{entry_encoder_forward.7} parent=43 // pred_check_branch
        %1932 = sbr.rel (%p1930) target = $region48
      $region47: #{entry_encoder_forward.7} parent=43 // pred_region
        %s1933 = smul.u32 96, %s16
        %p1934 = scmp.lt.s32.totalorder %s1933, 191
        %s1935 = scalar_select %p1934, %s1933, 191
        %s1936 = smul.addr %s1935, 4
        %s1937 = scalar_lea.vmem %s4, %s1936
      $region48: #{entry_encoder_forward.7} parent=43 // pred_fallthru
        _
    $region44: #{entry_encoder_forward.7} parent=5 // pred_fallthru
      _
  $region6: #{entry_encoder_forward.7} parent=0 // loop_footer
    %s14 = sadd.s32 1, %s10
  $region7: #{entry_encoder_forward.7} parent=0 // loop_footer_branch
    %9 = sbr.rel target = $region3
  $region8: #{entry_encoder_forward.7} parent=0 // loop_exit
    _

// kernel: entry_encoder_forward.8
$region0: #{entry_encoder_forward.8}
  #allocation0 [shape = 'u32[]', space=smem, size = 0x4, offset = 0x4, fixed_abs, tag = 'smem constant byte address 0x4 - core index']
  #allocation1 [shape = 'u32[144,128]{1,0:T(1,128)}', space=vmem, size = 0x12000, scoped, tag = 'internal scratch']
  %s0 = inlined_call_operand.vmem [shape: bf16[6,18,9,128], index: 0, kind: input, shape index: {}]
  %s1 = inlined_call_operand.vmem [shape: bf16[6,18,9,128], index: 1, kind: input, shape index: {}]
  %s2 = inlined_call_operand.vmem [shape: bf16[6,8,8,128], index: 2, kind: output, shape index: {}]
  %s3 = sld [smem:[#allocation0]]
  $region41: #{entry_encoder_forward.8} parent=0
    _
  %s5 = ssub.s32 1, %s3
  %s6 = scalar_select 0, %s5, %s3
  loop: start=0, step=1, limit=8
  $region2: #{entry_encoder_forward.8} parent=0 // loop_pre_header
    _
  $region3: #{entry_encoder_forward.8} parent=0 // loop_header
    %s8 = sphi 0, %s12
    %p9 = scmp.ge.s32.totalorder %s8, 8
    %s18 = sphi 0, %s20
    %s21 = sphi 0, %s18
    %s22 = sphi 0, %s21
    %s38 = sphi 0, %s22
    %s44 = sphi 0, %s46
    %s47 = sphi 0, %s44
    %s48 = sphi 0, %s47
    %s64 = sphi 0, %s48
    %s70 = sphi 0, %s72
    %s73 = sphi 0, %s70
    %s74 = sphi 0, %s73
    %s90 = sphi 0, %s74
  $region4: #{entry_encoder_forward.8} parent=0 // loop_header_branch
    %11 = sbr.rel (%p9) target = $region8
  $region5: #{entry_encoder_forward.8} parent=0 // loop_body
    %s13 = ssub.s32 %s8, 1
    %s14 = ssub.s32 %s8, 2
    %s15 = sadd.s32 %s8, 1
    %s16 = ssub.s32 %s8, %s15
    %p17 = scmp.eq.s32.totalorder %s16, 0
    %s19 = sadd.s32 %s18, 1
    %s20 = scalar_select %p17, %s18, %s19
    %p23 = pneg %p17
    %p24 = scmp.eq.s32.totalorder %s8, 5
    %p25 = por %p23, %p24
    %p26 = scmp.ne.s32.totalorder %s18, %s21
    %p27 = scmp.eq.s32.totalorder %s8, 0
    %p28 = por %p26, %p27
    %p29 = scmp.ne.s32.totalorder %s18, %s21
    %p30 = scmp.eq.s32.totalorder %s13, 5
    %p31 = por %p29, %p30
    %p32 = scmp.ne.s32.totalorder %s21, %s22
    %p33 = scmp.eq.s32.totalorder %s13, 0
    %p34 = por %p32, %p33
    %p35 = scmp.ne.s32.totalorder %s21, %s22
    %p36 = scmp.eq.s32.totalorder %s14, 5
    %p37 = por %p35, %p36
    %p39 = scmp.ne.s32.totalorder %s22, %s38
    %p40 = scmp.eq.s32.totalorder %s14, 0
    %p41 = por %p39, %p40
    %s42 = ssub.s32 %s8, %s15
    %p43 = scmp.eq.s32.totalorder %s42, 0
    %s45 = sadd.s32 %s44, 1
    %s46 = scalar_select %p43, %s44, %s45
    %p49 = pneg %p43
    %p50 = scmp.eq.s32.totalorder %s8, 5
    %p51 = por %p49, %p50
    %p52 = scmp.ne.s32.totalorder %s44, %s47
    %p53 = scmp.eq.s32.totalorder %s8, 0
    %p54 = por %p52, %p53
    %p55 = scmp.ne.s32.totalorder %s44, %s47
    %p56 = scmp.eq.s32.totalorder %s13, 5
    %p57 = por %p55, %p56
    %p58 = scmp.ne.s32.totalorder %s47, %s48
    %p59 = scmp.eq.s32.totalorder %s13, 0
    %p60 = por %p58, %p59
    %p61 = scmp.ne.s32.totalorder %s47, %s48
    %p62 = scmp.eq.s32.totalorder %s14, 5
    %p63 = por %p61, %p62
    %p65 = scmp.ne.s32.totalorder %s48, %s64
    %p66 = scmp.eq.s32.totalorder %s14, 0
    %p67 = por %p65, %p66
    %s68 = ssub.s32 %s8, %s15
    %p69 = scmp.eq.s32.totalorder %s68, 0
    %s71 = sadd.s32 %s70, 1
    %s72 = scalar_select %p69, %s70, %s71
    %p75 = pneg %p69
    %p76 = scmp.eq.s32.totalorder %s8, 5
    %p77 = por %p75, %p76
    %p78 = scmp.ne.s32.totalorder %s70, %s73
    %p79 = scmp.eq.s32.totalorder %s8, 0
    %p80 = por %p78, %p79
    %p81 = scmp.ne.s32.totalorder %s70, %s73
    %p82 = scmp.eq.s32.totalorder %s13, 5
    %p83 = por %p81, %p82
    %p84 = scmp.ne.s32.totalorder %s73, %s74
    %p85 = scmp.eq.s32.totalorder %s13, 0
    %p86 = por %p84, %p85
    %p87 = scmp.ne.s32.totalorder %s73, %s74
    %p88 = scmp.eq.s32.totalorder %s14, 5
    %p89 = por %p87, %p88
    %p91 = scmp.ne.s32.totalorder %s74, %s90
    %p92 = scmp.eq.s32.totalorder %s14, 0
    %p93 = por %p91, %p92
    %p94 = scmp.le.s32.totalorder 1, %s8
    %p95 = scmp.lt.s32.totalorder %s8, 7
    %p96 = pnand %p94, %p95
    %p97 = pneg %p96
    // Predicated region
    $region9: #{entry_encoder_forward.8} parent=5 // pred_check
      _
    $region10: #{entry_encoder_forward.8} parent=5 // pred_check_branch
      %99 = sbr.rel (%p96) target = $region12
    $region11: #{entry_encoder_forward.8} parent=5 // pred_region
      %s100 = ssub.s32 %s8, 1
    $region12: #{entry_encoder_forward.8} parent=5 // pred_fallthru
      _
    %p101 = scmp.lt.s32.totalorder %s8, 6
    // Predicated region
    $region13: #{entry_encoder_forward.8} parent=5 // pred_check
      %p102 = pneg %p101
    $region14: #{entry_encoder_forward.8} parent=5 // pred_check_branch
      %104 = sbr.rel (%p102) target = $region16
    $region15: #{entry_encoder_forward.8} parent=5 // pred_region
      // Predicated region
      $region17: #{entry_encoder_forward.8} parent=15 // pred_check
        %p105 = pneg %p28
      $region18: #{entry_encoder_forward.8} parent=15 // pred_check_branch
        %107 = sbr.rel (%p105) target = $region20
      $region19: #{entry_encoder_forward.8} parent=15 // pred_region
        %p108 = scmp.lt.s32.totalorder %s8, 5
        %s109 = scalar_select %p108, %s8, 5
        %s110 = smul.addr %s109, 36
        %s111 = smul.addr %s110, 4
        %s112 = scalar_lea.vmem %s0, %s111
      $region20: #{entry_encoder_forward.8} parent=15 // pred_fallthru
        _
      // Predicated region
      $region21: #{entry_encoder_forward.8} parent=15 // pred_check
        %p113 = pneg %p54
      $region22: #{entry_encoder_forward.8} parent=15 // pred_check_branch
        %115 = sbr.rel (%p113) target = $region24
      $region23: #{entry_encoder_forward.8} parent=15 // pred_region
        %p116 = scmp.lt.s32.totalorder %s8, 5
        %s117 = scalar_select %p116, %s8, 5
        %s118 = smul.addr %s117, 36
        %s119 = smul.addr %s118, 4
        %s120 = scalar_lea.vmem %s1, %s119
      $region24: #{entry_encoder_forward.8} parent=15 // pred_fallthru
        _
    $region16: #{entry_encoder_forward.8} parent=5 // pred_fallthru
      _
    %p121 = scmp.le.s32.totalorder 1, %s8
    %p122 = scmp.lt.s32.totalorder %s8, 7
    %p123 = pnand %p121, %p122
    %p124 = pneg %p123
    // Predicated region
    $region25: #{entry_encoder_forward.8} parent=5 // pred_check
      _
    $region26: #{entry_encoder_forward.8} parent=5 // pred_check_branch
      %126 = sbr.rel (%p123) target = $region28
    $region27: #{entry_encoder_forward.8} parent=5 // pred_region
      %s127 = ssub.s32 %s8, 1
      %p128 = scmp.lt.s32.totalorder %s13, 5
      %s129 = scalar_select %p128, %s13, 5
      %s130 = smul.addr %s129, 36
      %s131 = smul.addr %s130, 4
      %s132 = scalar_lea.vmem %s0, %s131
      %p133 = pneg %p34
      %p134 = pneg %p31
      %p135 = scmp.lt.s32.totalorder %s13, 5
      %s136 = scalar_select %p135, %s13, 5
      %s137 = smul.addr %s136, 36
      %s138 = smul.addr %s137, 4
      %s139 = scalar_lea.vmem %s1, %s138
      %p140 = pneg %p60
      %p141 = pneg %p57
      %p142 = pneg %p86
      %p143 = pneg %p83
      %p144 = scmp.lt.s32.totalorder %s13, 5
      %s145 = scalar_select %p144, %s13, 5
      %s146 = smul.addr %s145, 8
      %s147 = smul.addr %s146, 4
      %s148 = scalar_lea.vmem %s2, %s147
      %p149 = scmp.lt.s32.totalorder %s13, 5
      %s150 = scalar_select %p149, %s13, 5
      %s151 = smul.addr %s150, 36
      %s152 = smul.addr %s151, 4
      %s153 = scalar_lea.vmem %s0, %s152
      %p154 = scmp.lt.s32.totalorder %s13, 5
      %s155 = scalar_select %p154, %s13, 5
      %s156 = smul.addr %s155, 36
      %s157 = smul.addr %s156, 4
      %s158 = scalar_lea.vmem %s1, %s157
      %p159 = scmp.lt.s32.totalorder %s13, 5
      %s160 = scalar_select %p159, %s13, 5
      %s161 = smul.addr %s160, 8
      %s162 = smul.addr %s161, 4
      %s163 = scalar_lea.vmem %s2, %s162
      %v164 = vld [vmem:[%s153] sm:$0xf]
      %v165 = vld [vmem:[%s153 + $0x4] sm:$0x1]
      %v166 = vld [vmem:[%s153 + $0x8] sm:$0xf]
      %v167 = vld [vmem:[%s153 + $0xc] sm:$0x1]
      %v168 = vld [vmem:[%s153 + $0x10] sm:$0xf]
      %v169 = vld [vmem:[%s153 + $0x14] sm:$0x1]
      %v170 = vld [vmem:[%s153 + $0x18] sm:$0xf]
      %v171 = vld [vmem:[%s153 + $0x1c] sm:$0x1]
      %v172 = vld [vmem:[%s153 + $0x20] sm:$0xf]
      %v173 = vld [vmem:[%s153 + $0x24] sm:$0x1]
      %v174 = vld [vmem:[%s153 + $0x28] sm:$0xf]
      %v175 = vld [vmem:[%s153 + $0x2c] sm:$0x1]
      %v176 = vld [vmem:[%s153 + $0x30] sm:$0xf]
      %v177 = vld [vmem:[%s153 + $0x34] sm:$0x1]
      %v178 = vld [vmem:[%s153 + $0x38] sm:$0xf]
      %v179 = vld [vmem:[%s153 + $0x3c] sm:$0x1]
      %v180 = vld [vmem:[%s153 + $0x40] sm:$0xf]
      %v181 = vld [vmem:[%s153 + $0x44] sm:$0x1]
      %v182 = vld [vmem:[%s153 + $0x48] sm:$0xf]
      %v183 = vld [vmem:[%s153 + $0x4c] sm:$0x1]
      %v184 = vld [vmem:[%s153 + $0x50] sm:$0xf]
      %v185 = vld [vmem:[%s153 + $0x54] sm:$0x1]
      %v186 = vld [vmem:[%s153 + $0x58] sm:$0xf]
      %v187 = vld [vmem:[%s153 + $0x5c] sm:$0x1]
      %v188 = vld [vmem:[%s153 + $0x60] sm:$0xf]
      %v189 = vld [vmem:[%s153 + $0x64] sm:$0x1]
      %v190 = vld [vmem:[%s153 + $0x68] sm:$0xf]
      %v191 = vld [vmem:[%s153 + $0x6c] sm:$0x1]
      %v192 = vld [vmem:[%s153 + $0x70] sm:$0xf]
      %v193 = vld [vmem:[%s153 + $0x74] sm:$0x1]
      %v194 = vld [vmem:[%s153 + $0x78] sm:$0xf]
      %v195 = vld [vmem:[%s153 + $0x7c] sm:$0x1]
      %v196 = vld [vmem:[%s153 + $0x80] sm:$0xf]
      %v197 = vld [vmem:[%s153 + $0x84] sm:$0x1]
      %v198 = vld [vmem:[%s158] sm:$0xf]
      %v199 = vld [vmem:[%s158 + $0x8] sm:$0xf]
      %v200 = vld [vmem:[%s158 + $0x10] sm:$0xf]
      %v201 = vld [vmem:[%s158 + $0x18] sm:$0xf]
      %v202 = vld [vmem:[%s158 + $0x20] sm:$0xf]
      %v203 = vld [vmem:[%s158 + $0x28] sm:$0xf]
      %v204 = vld [vmem:[%s158 + $0x30] sm:$0xf]
      %v205 = vld [vmem:[%s158 + $0x38] sm:$0xf]
      %v206 = vld [vmem:[%s158 + $0x40] sm:$0xf]
      %v207 = vld [vmem:[%s158 + $0x48] sm:$0xf]
      %v208 = vld [vmem:[%s158 + $0x50] sm:$0xf]
      %v209 = vld [vmem:[%s158 + $0x58] sm:$0xf]
      %v210 = vld [vmem:[%s158 + $0x60] sm:$0xf]
      %v211 = vld [vmem:[%s158 + $0x68] sm:$0xf]
      %v212 = vld [vmem:[%s158 + $0x70] sm:$0xf]
      %v213 = vld [vmem:[%s158 + $0x78] sm:$0xf]
      %v214 = vld [vmem:[%s158 + $0x80] sm:$0xf]
      %v215 = vmax.bf16 %v164, %v198
      %v216 = vmax.bf16 %v166, %v199
      %v217 = vmax.bf16 %v168, %v200
      %v218 = vmax.bf16 %v170, %v201
      %v219 = vmax.bf16 %v172, %v202
      %v220 = vmax.bf16 %v174, %v203
      %v221 = vmax.bf16 %v176, %v204
      %v222 = vmax.bf16 %v178, %v205
      %v223 = vmax.bf16 %v180, %v206
      %v224 = vmax.bf16 %v182, %v207
      %v225 = vmax.bf16 %v184, %v208
      %v226 = vmax.bf16 %v186, %v209
      %v227 = vmax.bf16 %v188, %v210
      %v228 = vmax.bf16 %v190, %v211
      %v229 = vmax.bf16 %v192, %v212
      %v230 = vmax.bf16 %v194, %v213
      %v231 = vmax.bf16 %v196, %v214
      %vm232 = vsmask.f32 3328
      %vm233 = vsmask.f32 7440
      %vm234 = vmor %vm232, %vm233
      %v236 = vshrl.u32 %v164, 16
      %v238 = vrot.slane %v236, 4
      %v239 = vshll.u32 %v164, 16
      %v241 = vrot.slane %v239, 5
      %v242 = vor.u32 %v238, %v241
      %v243 = vrot.slane %v242, 4
      %v245 = vshll.u32 %v165, 16
      %v247 = vrot.slane %v245, 5
      %v248 = vsel %vm234, %v243, %v247
      %v250 = vshrl.u32 %v166, 16
      %v252 = vrot.slane %v250, 4
      %v253 = vshll.u32 %v166, 16
      %v255 = vrot.slane %v253, 5
      %v256 = vor.u32 %v252, %v255
      %v257 = vrot.slane %v256, 4
      %v259 = vshll.u32 %v167, 16
      %v261 = vrot.slane %v259, 5
      %v262 = vsel %vm234, %v257, %v261
      %v264 = vshrl.u32 %v168, 16
      %v266 = vrot.slane %v264, 4
      %v267 = vshll.u32 %v168, 16
      %v269 = vrot.slane %v267, 5
      %v270 = vor.u32 %v266, %v269
      %v271 = vrot.slane %v270, 4
      %v273 = vshll.u32 %v169, 16
      %v275 = vrot.slane %v273, 5
      %v276 = vsel %vm234, %v271, %v275
      %v278 = vshrl.u32 %v170, 16
      %v280 = vrot.slane %v278, 4
      %v281 = vshll.u32 %v170, 16
      %v283 = vrot.slane %v281, 5
      %v284 = vor.u32 %v280, %v283
      %v285 = vrot.slane %v284, 4
      %v287 = vshll.u32 %v171, 16
      %v289 = vrot.slane %v287, 5
      %v290 = vsel %vm234, %v285, %v289
      %v292 = vshrl.u32 %v172, 16
      %v294 = vrot.slane %v292, 4
      %v295 = vshll.u32 %v172, 16
      %v297 = vrot.slane %v295, 5
      %v298 = vor.u32 %v294, %v297
      %v299 = vrot.slane %v298, 4
      %v301 = vshll.u32 %v173, 16
      %v303 = vrot.slane %v301, 5
      %v304 = vsel %vm234, %v299, %v303
      %v306 = vshrl.u32 %v174, 16
      %v308 = vrot.slane %v306, 4
      %v309 = vshll.u32 %v174, 16
      %v311 = vrot.slane %v309, 5
      %v312 = vor.u32 %v308, %v311
      %v313 = vrot.slane %v312, 4
      %v315 = vshll.u32 %v175, 16
      %v317 = vrot.slane %v315, 5
      %v318 = vsel %vm234, %v313, %v317
      %v320 = vshrl.u32 %v176, 16
      %v322 = vrot.slane %v320, 4
      %v323 = vshll.u32 %v176, 16
      %v325 = vrot.slane %v323, 5
      %v326 = vor.u32 %v322, %v325
      %v327 = vrot.slane %v326, 4
      %v329 = vshll.u32 %v177, 16
      %v331 = vrot.slane %v329, 5
      %v332 = vsel %vm234, %v327, %v331
      %v334 = vshrl.u32 %v178, 16
      %v336 = vrot.slane %v334, 4
      %v337 = vshll.u32 %v178, 16
      %v339 = vrot.slane %v337, 5
      %v340 = vor.u32 %v336, %v339
      %v341 = vrot.slane %v340, 4
      %v343 = vshll.u32 %v179, 16
      %v345 = vrot.slane %v343, 5
      %v346 = vsel %vm234, %v341, %v345
      %v348 = vshrl.u32 %v180, 16
      %v350 = vrot.slane %v348, 4
      %v351 = vshll.u32 %v180, 16
      %v353 = vrot.slane %v351, 5
      %v354 = vor.u32 %v350, %v353
      %v355 = vrot.slane %v354, 4
      %v357 = vshll.u32 %v181, 16
      %v359 = vrot.slane %v357, 5
      %v360 = vsel %vm234, %v355, %v359
      %v362 = vshrl.u32 %v182, 16
      %v364 = vrot.slane %v362, 4
      %v365 = vshll.u32 %v182, 16
      %v367 = vrot.slane %v365, 5
      %v368 = vor.u32 %v364, %v367
      %v369 = vrot.slane %v368, 4
      %v371 = vshll.u32 %v183, 16
      %v373 = vrot.slane %v371, 5
      %v374 = vsel %vm234, %v369, %v373
      %v376 = vshrl.u32 %v184, 16
      %v378 = vrot.slane %v376, 4
      %v379 = vshll.u32 %v184, 16
      %v381 = vrot.slane %v379, 5
      %v382 = vor.u32 %v378, %v381
      %v383 = vrot.slane %v382, 4
      %v385 = vshll.u32 %v185, 16
      %v387 = vrot.slane %v385, 5
      %v388 = vsel %vm234, %v383, %v387
      %v390 = vshrl.u32 %v186, 16
      %v392 = vrot.slane %v390, 4
      %v393 = vshll.u32 %v186, 16
      %v395 = vrot.slane %v393, 5
      %v396 = vor.u32 %v392, %v395
      %v397 = vrot.slane %v396, 4
      %v399 = vshll.u32 %v187, 16
      %v401 = vrot.slane %v399, 5
      %v402 = vsel %vm234, %v397, %v401
      %v404 = vshrl.u32 %v188, 16
      %v406 = vrot.slane %v404, 4
      %v407 = vshll.u32 %v188, 16
      %v409 = vrot.slane %v407, 5
      %v410 = vor.u32 %v406, %v409
      %v411 = vrot.slane %v410, 4
      %v413 = vshll.u32 %v189, 16
      %v415 = vrot.slane %v413, 5
      %v416 = vsel %vm234, %v411, %v415
      %v418 = vshrl.u32 %v190, 16
      %v420 = vrot.slane %v418, 4
      %v421 = vshll.u32 %v190, 16
      %v423 = vrot.slane %v421, 5
      %v424 = vor.u32 %v420, %v423
      %v425 = vrot.slane %v424, 4
      %v427 = vshll.u32 %v191, 16
      %v429 = vrot.slane %v427, 5
      %v430 = vsel %vm234, %v425, %v429
      %v432 = vshrl.u32 %v192, 16
      %v434 = vrot.slane %v432, 4
      %v435 = vshll.u32 %v192, 16
      %v437 = vrot.slane %v435, 5
      %v438 = vor.u32 %v434, %v437
      %v439 = vrot.slane %v438, 4
      %v441 = vshll.u32 %v193, 16
      %v443 = vrot.slane %v441, 5
      %v444 = vsel %vm234, %v439, %v443
      %v446 = vshrl.u32 %v194, 16
      %v448 = vrot.slane %v446, 4
      %v449 = vshll.u32 %v194, 16
      %v451 = vrot.slane %v449, 5
      %v452 = vor.u32 %v448, %v451
      %v453 = vrot.slane %v452, 4
      %v455 = vshll.u32 %v195, 16
      %v457 = vrot.slane %v455, 5
      %v458 = vsel %vm234, %v453, %v457
      %v460 = vshrl.u32 %v196, 16
      %v462 = vrot.slane %v460, 4
      %v463 = vshll.u32 %v196, 16
      %v465 = vrot.slane %v463, 5
      %v466 = vor.u32 %v462, %v465
      %v467 = vrot.slane %v466, 4
      %v469 = vshll.u32 %v197, 16
      %v471 = vrot.slane %v469, 5
      %v472 = vsel %vm234, %v467, %v471
      %v490 = vmax.bf16 %v215, %v248
      %v491 = vmax.bf16 %v216, %v262
      %v492 = vmax.bf16 %v217, %v276
      %v493 = vmax.bf16 %v218, %v290
      %v494 = vmax.bf16 %v219, %v304
      %v495 = vmax.bf16 %v220, %v318
      %v496 = vmax.bf16 %v221, %v332
      %v497 = vmax.bf16 %v222, %v346
      %v498 = vmax.bf16 %v223, %v360
      %v499 = vmax.bf16 %v224, %v374
      %v500 = vmax.bf16 %v225, %v388
      %v501 = vmax.bf16 %v226, %v402
      %v502 = vmax.bf16 %v227, %v416
      %v503 = vmax.bf16 %v228, %v430
      %v504 = vmax.bf16 %v229, %v444
      %v505 = vmax.bf16 %v230, %v458
      %v506 = vmax.bf16 %v231, %v472
      %v507 = vmax.bf16 %v490, %v491
      %v508 = vmax.bf16 %v492, %v493
      %v509 = vmax.bf16 %v494, %v495
      %v510 = vmax.bf16 %v496, %v497
      %v511 = vmax.bf16 %v498, %v499
      %v512 = vmax.bf16 %v500, %v501
      %v513 = vmax.bf16 %v502, %v503
      %v514 = vmax.bf16 %v504, %v505
      %v515 = vmax.bf16 %v507, %v492
      %v516 = vmax.bf16 %v508, %v494
      %v517 = vmax.bf16 %v509, %v496
      %v518 = vmax.bf16 %v510, %v498
      %v519 = vmax.bf16 %v511, %v500
      %v520 = vmax.bf16 %v512, %v502
      %v521 = vmax.bf16 %v513, %v504
      %v522 = vmax.bf16 %v514, %v506
      %523 = vst [vmem:[%s163] sm:$0xf] %v515
      %524 = vst [vmem:[%s163 + $0x4] sm:$0xf] %v516
      %525 = vst [vmem:[%s163 + $0x8] sm:$0xf] %v517
      %526 = vst [vmem:[%s163 + $0xc] sm:$0xf] %v518
      %527 = vst [vmem:[%s163 + $0x10] sm:$0xf] %v519
      %528 = vst [vmem:[%s163 + $0x14] sm:$0xf] %v520
      %529 = vst [vmem:[%s163 + $0x18] sm:$0xf] %v521
      %530 = vst [vmem:[%s163 + $0x1c] sm:$0xf] %v522
      %p531 = scmp.lt.s32.totalorder %s13, 5
      %s532 = scalar_select %p531, %s13, 5
      %s533 = smul.addr %s532, 8
      %s534 = smul.addr %s533, 4
      %s535 = scalar_lea.vmem %s2, %s534
      // Predicated region
      $region29: #{entry_encoder_forward.8} parent=27 // pred_check
        %p536 = pneg %p83
      $region30: #{entry_encoder_forward.8} parent=27 // pred_check_branch
        %538 = sbr.rel (%p536) target = $region32
      $region31: #{entry_encoder_forward.8} parent=27 // pred_region
        _
      $region32: #{entry_encoder_forward.8} parent=27 // pred_fallthru
        _
    $region28: #{entry_encoder_forward.8} parent=5 // pred_fallthru
      _
    %p539 = scmp.le.s32.totalorder 2, %s8
    // Predicated region
    $region33: #{entry_encoder_forward.8} parent=5 // pred_check
      %p540 = pneg %p539
    $region34: #{entry_encoder_forward.8} parent=5 // pred_check_branch
      %542 = sbr.rel (%p540) target = $region36
    $region35: #{entry_encoder_forward.8} parent=5 // pred_region
      %s543 = ssub.s32 %s8, 2
      // Predicated region
      $region37: #{entry_encoder_forward.8} parent=35 // pred_check
        %p544 = pneg %p89
      $region38: #{entry_encoder_forward.8} parent=35 // pred_check_branch
        %546 = sbr.rel (%p544) target = $region40
      $region39: #{entry_encoder_forward.8} parent=35 // pred_region
        %p547 = scmp.lt.s32.totalorder %s14, 5
        %s548 = scalar_select %p547, %s14, 5
        %s549 = smul.addr %s548, 8
        %s550 = smul.addr %s549, 4
        %s551 = scalar_lea.vmem %s2, %s550
      $region40: #{entry_encoder_forward.8} parent=35 // pred_fallthru
        _
    $region36: #{entry_encoder_forward.8} parent=5 // pred_fallthru
      _
  $region6: #{entry_encoder_forward.8} parent=0 // loop_footer
    %s12 = sadd.s32 1, %s8
  $region7: #{entry_encoder_forward.8} parent=0 // loop_footer_branch
    %7 = sbr.rel target = $region3
  $region8: #{entry_encoder_forward.8} parent=0 // loop_exit
    _

// kernel: entry_encoder_forward.9
$region0: #{entry_encoder_forward.9}
  #allocation0 [shape = 'u32[]', space=smem, size = 0x4, offset = 0x4, fixed_abs, tag = 'smem constant byte address 0x4 - core index']
  #allocation1 [shape = 'u32[144,128]{1,0:T(1,128)}', space=vmem, size = 0x12000, scoped, tag = 'internal scratch']
  %s0 = inlined_call_operand.vmem [shape: bf16[384,72], index: 0, kind: input, shape index: {}]
  %s1 = inlined_call_operand.vmem [shape: bf16[72,128], index: 1, kind: input, shape index: {}]
  %s2 = inlined_call_operand.vmem [shape: f32[2,2,128], index: 2, kind: output, shape index: {}]
  %s3 = sld [smem:[#allocation0]]
  $region41: #{entry_encoder_forward.9} parent=0
    _
  %s5 = ssub.s32 1, %s3
  %s6 = scalar_select 0, %s5, %s3
  loop: start=0, step=1, limit=4
  $region2: #{entry_encoder_forward.9} parent=0 // loop_pre_header
    _
  $region3: #{entry_encoder_forward.9} parent=0 // loop_header
    %s8 = sphi 0, %s12
    %p9 = scmp.ge.s32.totalorder %s8, 4
    %s18 = sphi 0, %s20
    %s21 = sphi 0, %s18
    %s22 = sphi 0, %s21
    %s38 = sphi 0, %s22
    %s42 = sphi 0, %s42
    %s44 = sphi 0, %s42
    %s45 = sphi 0, %s44
    %s59 = sphi 0, %s45
    %s65 = sphi 0, %s67
    %s68 = sphi 0, %s65
    %s69 = sphi 0, %s68
    %s85 = sphi 0, %s69
  $region4: #{entry_encoder_forward.9} parent=0 // loop_header_branch
    %11 = sbr.rel (%p9) target = $region8
  $region5: #{entry_encoder_forward.9} parent=0 // loop_body
    %s13 = ssub.s32 %s8, 1
    %s14 = ssub.s32 %s8, 2
    %s15 = sadd.s32 %s8, 1
    %s16 = ssub.s32 %s8, %s15
    %p17 = scmp.eq.s32.totalorder %s16, 0
    %s19 = sadd.s32 %s18, 1
    %s20 = scalar_select %p17, %s18, %s19
    %p23 = pneg %p17
    %p24 = scmp.eq.s32.totalorder %s8, 1
    %p25 = por %p23, %p24
    %p26 = scmp.ne.s32.totalorder %s18, %s21
    %p27 = scmp.eq.s32.totalorder %s8, 0
    %p28 = por %p26, %p27
    %p29 = scmp.ne.s32.totalorder %s18, %s21
    %p30 = scmp.eq.s32.totalorder %s13, 1
    %p31 = por %p29, %p30
    %p32 = scmp.ne.s32.totalorder %s21, %s22
    %p33 = scmp.eq.s32.totalorder %s13, 0
    %p34 = por %p32, %p33
    %p35 = scmp.ne.s32.totalorder %s21, %s22
    %p36 = scmp.eq.s32.totalorder %s14, 1
    %p37 = por %p35, %p36
    %p39 = scmp.ne.s32.totalorder %s22, %s38
    %p40 = scmp.eq.s32.totalorder %s14, 0
    %p41 = por %p39, %p40
    %s43 = sadd.s32 %s42, 1
    %p46 = scmp.eq.s32.totalorder %s8, 1
    %p47 = scmp.ne.s32.totalorder %s42, %s44
    %p48 = scmp.eq.s32.totalorder %s8, 0
    %p49 = por %p47, %p48
    %p50 = scmp.ne.s32.totalorder %s42, %s44
    %p51 = scmp.eq.s32.totalorder %s13, 1
    %p52 = por %p50, %p51
    %p53 = scmp.ne.s32.totalorder %s44, %s45
    %p54 = scmp.eq.s32.totalorder %s13, 0
    %p55 = por %p53, %p54
    %p56 = scmp.ne.s32.totalorder %s44, %s45
    %p57 = scmp.eq.s32.totalorder %s14, 1
    %p58 = por %p56, %p57
    %p60 = scmp.ne.s32.totalorder %s45, %s59
    %p61 = scmp.eq.s32.totalorder %s14, 0
    %p62 = por %p60, %p61
    %s63 = ssub.s32 %s8, %s15
    %p64 = scmp.eq.s32.totalorder %s63, 0
    %s66 = sadd.s32 %s65, 1
    %s67 = scalar_select %p64, %s65, %s66
    %p70 = pneg %p64
    %p71 = scmp.eq.s32.totalorder %s8, 1
    %p72 = por %p70, %p71
    %p73 = scmp.ne.s32.totalorder %s65, %s68
    %p74 = scmp.eq.s32.totalorder %s8, 0
    %p75 = por %p73, %p74
    %p76 = scmp.ne.s32.totalorder %s65, %s68
    %p77 = scmp.eq.s32.totalorder %s13, 1
    %p78 = por %p76, %p77
    %p79 = scmp.ne.s32.totalorder %s68, %s69
    %p80 = scmp.eq.s32.totalorder %s13, 0
    %p81 = por %p79, %p80
    %p82 = scmp.ne.s32.totalorder %s68, %s69
    %p83 = scmp.eq.s32.totalorder %s14, 1
    %p84 = por %p82, %p83
    %p86 = scmp.ne.s32.totalorder %s69, %s85
    %p87 = scmp.eq.s32.totalorder %s14, 0
    %p88 = por %p86, %p87
    %p89 = scmp.le.s32.totalorder 1, %s8
    %p90 = scmp.lt.s32.totalorder %s8, 3
    %p91 = pnand %p89, %p90
    %p92 = pneg %p91
    // Predicated region
    $region9: #{entry_encoder_forward.9} parent=5 // pred_check
      _
    $region10: #{entry_encoder_forward.9} parent=5 // pred_check_branch
      %94 = sbr.rel (%p91) target = $region12
    $region11: #{entry_encoder_forward.9} parent=5 // pred_region
      %s95 = ssub.s32 %s8, 1
      // Predicated region
      $region13: #{entry_encoder_forward.9} parent=11 // pred_check
        %p96 = pneg %p55
      $region14: #{entry_encoder_forward.9} parent=11 // pred_check_branch
        %98 = sbr.rel (%p96) target = $region16
      $region15: #{entry_encoder_forward.9} parent=11 // pred_region
        _
      $region16: #{entry_encoder_forward.9} parent=11 // pred_fallthru
        _
    $region12: #{entry_encoder_forward.9} parent=5 // pred_fallthru
      _
    %p99 = scmp.lt.s32.totalorder %s8, 2
    // Predicated region
    $region17: #{entry_encoder_forward.9} parent=5 // pred_check
      %p100 = pneg %p99
    $region18: #{entry_encoder_forward.9} parent=5 // pred_check_branch
      %102 = sbr.rel (%p100) target = $region20
    $region19: #{entry_encoder_forward.9} parent=5 // pred_region
      // Predicated region
      $region21: #{entry_encoder_forward.9} parent=19 // pred_check
        %p103 = pneg %p28
      $region22: #{entry_encoder_forward.9} parent=19 // pred_check_branch
        %105 = sbr.rel (%p103) target = $region24
      $region23: #{entry_encoder_forward.9} parent=19 // pred_region
        %s106 = smul.u32 24, %s8
        %p107 = scmp.lt.s32.totalorder %s106, 47
        %s108 = scalar_select %p107, %s106, 47
        %s109 = smul.addr %s108, 4
        %s110 = scalar_lea.vmem %s0, %s109
        %s111 = smul.u32 24, %s8
      $region24: #{entry_encoder_forward.9} parent=19 // pred_fallthru
        _
    $region20: #{entry_encoder_forward.9} parent=5 // pred_fallthru
      _
    %p112 = scmp.le.s32.totalorder 1, %s8
    %p113 = scmp.lt.s32.totalorder %s8, 3
    %p114 = pnand %p112, %p113
    %p115 = pneg %p114
    // Predicated region
    $region25: #{entry_encoder_forward.9} parent=5 // pred_check
      _
    $region26: #{entry_encoder_forward.9} parent=5 // pred_check_branch
      %117 = sbr.rel (%p114) target = $region28
    $region27: #{entry_encoder_forward.9} parent=5 // pred_region
      %s118 = ssub.s32 %s8, 1
      %s119 = smul.u32 24, %s13
      %p120 = scmp.lt.s32.totalorder %s119, 47
      %s121 = scalar_select %p120, %s119, 47
      %s122 = smul.addr %s121, 4
      %s123 = scalar_lea.vmem %s0, %s122
      %p124 = pneg %p34
      %p125 = pneg %p31
      %p126 = pneg %p55
      %p127 = pneg %p52
      %p128 = pneg %p81
      %p129 = pneg %p78
      %p130 = scmp.lt.s32.totalorder %s13, 1
      %s131 = scalar_select %p130, %s13, 1
      %s132 = smul.addr %s131, 2
      %s133 = scalar_lea.vmem %s2, %s132
      %s134 = smul.u32 24, %s13
      %p135 = scmp.lt.s32.totalorder %s134, 47
      %s136 = scalar_select %p135, %s134, 47
      %s137 = smul.addr %s136, 4
      %s138 = scalar_lea.vmem %s0, %s137
      %s139 = smul.u32 24, %s13
      %p140 = scmp.lt.s32.totalorder %s13, 1
      %s141 = scalar_select %p140, %s13, 1
      %s142 = smul.addr %s141, 2
      %s143 = scalar_lea.vmem %s2, %s142
      %v145 = vld [vmem:[%s138] sm:$0xf]
      %v146 = vld [vmem:[%s138 + $0x4] sm:$0xf]
      %v147 = vld [vmem:[%s138 + $0x8] sm:$0xf]
      %v148 = vld [vmem:[%s138 + $0xc] sm:$0xf]
      %v149 = vld [vmem:[%s138 + $0x10] sm:$0xf]
      %v150 = vld [vmem:[%s138 + $0x14] sm:$0xf]
      %v151 = vld [vmem:[%s138 + $0x18] sm:$0xf]
      %v152 = vld [vmem:[%s138 + $0x1c] sm:$0xf]
      %v153 = vld [vmem:[%s138 + $0x20] sm:$0xf]
      %v154 = vld [vmem:[%s138 + $0x24] sm:$0xf]
      %v155 = vld [vmem:[%s138 + $0x28] sm:$0xf]
      %v156 = vld [vmem:[%s138 + $0x2c] sm:$0xf]
      %v157 = vld [vmem:[%s138 + $0x30] sm:$0xf]
      %v158 = vld [vmem:[%s138 + $0x34] sm:$0xf]
      %v159 = vld [vmem:[%s138 + $0x38] sm:$0xf]
      %v160 = vld [vmem:[%s138 + $0x3c] sm:$0xf]
      %v161 = vld [vmem:[%s138 + $0x40] sm:$0xf]
      %v162 = vld [vmem:[%s138 + $0x44] sm:$0xf]
      %v163 = vld [vmem:[%s138 + $0x48] sm:$0xf]
      %v164 = vld [vmem:[%s138 + $0x4c] sm:$0xf]
      %v165 = vld [vmem:[%s138 + $0x50] sm:$0xf]
      %v166 = vld [vmem:[%s138 + $0x54] sm:$0xf]
      %v167 = vld [vmem:[%s138 + $0x58] sm:$0xf]
      %v168 = vld [vmem:[%s138 + $0x5c] sm:$0xf]
      %v169 = vld [vmem:[%s1] sm:$0xf]
      %v170 = vld [vmem:[%s1 + $0x4] sm:$0xf]
      %v171 = vld [vmem:[%s1 + $0x8] sm:$0xf]
      %v172 = vld [vmem:[%s1 + $0xc] sm:$0xf]
      %v173 = vld [vmem:[%s1 + $0x10] sm:$0xf]
      %v174 = vld [vmem:[%s1 + $0x14] sm:$0xf]
      %v175 = vld [vmem:[%s1 + $0x18] sm:$0xf]
      %v176 = vld [vmem:[%s1 + $0x1c] sm:$0xf]
      %v177 = vld [vmem:[%s1 + $0x20] sm:$0xf]
      %v202 = vunpack.c.l.b16 %v145
      %v203 = vunpack.c.l.b16 %v146
      %v204 = vunpack.c.l.b16 %v147
      %v205 = vunpack.c.l.b16 %v148
      %v206 = vunpack.c.l.b16 %v149
      %v207 = vunpack.c.l.b16 %v150
      %v208 = vunpack.c.l.b16 %v151
      %v209 = vunpack.c.l.b16 %v152
      %v210 = vunpack.c.l.b16 %v153
      %v211 = vunpack.c.l.b16 %v154
      %v212 = vunpack.c.l.b16 %v155
      %v213 = vunpack.c.l.b16 %v156
      %v214 = vunpack.c.l.b16 %v157
      %v215 = vunpack.c.l.b16 %v158
      %v216 = vunpack.c.l.b16 %v159
      %v217 = vunpack.c.l.b16 %v160
      %v218 = vunpack.c.l.b16 %v161
      %v219 = vunpack.c.l.b16 %v162
      %v220 = vunpack.c.l.b16 %v163
      %v221 = vunpack.c.l.b16 %v164
      %v222 = vunpack.c.l.b16 %v165
      %v223 = vunpack.c.l.b16 %v166
      %v224 = vunpack.c.l.b16 %v167
      %v225 = vunpack.c.l.b16 %v168
      %v226 = vpack.c.b16 %v203, %v202
      %v227 = vpack.c.b16 %v205, %v204
      %v228 = vpack.c.b16 %v207, %v206
      %v229 = vpack.c.b16 %v209, %v208
      %v230 = vpack.c.b16 %v211, %v210
      %v231 = vpack.c.b16 %v213, %v212
      %v232 = vpack.c.b16 %v215, %v214
      %v233 = vpack.c.b16 %v217, %v216
      %v234 = vpack.c.b16 %v219, %v218
      %v235 = vpack.c.b16 %v221, %v220
      %v236 = vpack.c.b16 %v223, %v222
      %v237 = vpack.c.b16 %v225, %v224
      %v247 = vunpack.c.l.b16 %v169
      %v248 = vunpack.c.l.b16 %v170
      %v249 = vunpack.c.l.b16 %v171
      %v250 = vunpack.c.l.b16 %v172
      %v251 = vunpack.c.l.b16 %v173
      %v252 = vunpack.c.l.b16 %v174
      %v253 = vunpack.c.l.b16 %v175
      %v254 = vunpack.c.l.b16 %v176
      %v255 = vunpack.c.l.b16 %v177
      %v256 = vpack.c.b16 %v248, %v247
      %v257 = vpack.c.b16 %v250, %v249
      %v258 = vpack.c.b16 %v252, %v251
      %v259 = vpack.c.b16 %v254, %v253
      %v260 = vpack.c.b16 %v255, %v255
      %vm265 = vcmask 588800
      %v267 = vsel %vm265, %v226, 0
      %v270 = vsel %vm265, %v227, 0
      %v273 = vsel %vm265, %v228, 0
      %v276 = vsel %vm265, %v229, 0
      %v279 = vsel %vm265, %v230, 0
      %v282 = vsel %vm265, %v231, 0
      %v285 = vsel %vm265, %v232, 0
      %v288 = vsel %vm265, %v233, 0
      %v291 = vsel %vm265, %v234, 0
      %v294 = vsel %vm265, %v235, 0
      %v297 = vsel %vm265, %v236, 0
      %v300 = vsel %vm265, %v237, 0
      %vm302 = vcmask 1043456
      %v304 = vsel %vm302, %v260, 0
      %306 = vmatprep.subr.bf16.mxu0 0
      %307 = vmatpush1.bf16.msra.mxu0 %v256
      %308 = vmatprep.subr.bf16.mxu0 0
      %309 = vmatpush1.bf16.msra.mxu0 %v257
      %310 = vmatprep.subr.bf16.mxu0 0
      %311 = vmatpush1.bf16.msra.mxu0 %v258
      %312 = vmatprep.subr.bf16.mxu0 0
      %313 = vmatpush1.bf16.msra.mxu0 %v259
      %314 = vmatprep.subr.bf16.mxu0 0
      %315 = vmatpush1.bf16.msra.mxu0 %v304
      %316 = vmatprep.subr.bf16.mxu0 0
      %317 = vmatpush1.bf16.msra.mxu0 0
      %318 = vmatprep.subr.bf16.mxu0 0
      %319 = vmatpush1.bf16.msra.mxu0 0
      %320 = vmatprep.subr.bf16.mxu0 0
      %321 = vmatpush1.bf16.msra.mxu0 0
      %322 = vmatprep.subr.bf16.mxu0 0
      %323 = vmatpush1.bf16.msra.mxu0 0
      %324 = vmatprep.subr.bf16.mxu0 0
      %325 = vmatpush1.bf16.msra.mxu0 0
      %326 = vmatprep.subr.bf16.mxu0 0
      %327 = vmatpush1.bf16.msra.mxu0 0
      %328 = vmatprep.subr.bf16.mxu0 0
      %329 = vmatpush1.bf16.msra.mxu0 0
      %330 = vmatprep.subr.bf16.mxu0 0
      %331 = vmatpush1.bf16.msra.mxu0 0
      %332 = vmatprep.subr.bf16.mxu0 0
      %333 = vmatpush1.bf16.msra.mxu0 0
      %334 = vmatprep.subr.bf16.mxu0 0
      %335 = vmatpush1.bf16.msra.mxu0 0
      %336 = vmatprep.subr.bf16.mxu0 0
      %337 = vmatpush1.bf16.msra.mxu0 0
      %338 = vmatprep.mubr.bf16.mxu0 0
      %339 = vmatmul.mubr.bf16.gmra.mrb[0].mxu0 %v267
      %v340 = vpop.f32.mrb[0].mxu0
      %v341 = vadd.f32 0.0, %v340
      %v342 = vpop.f32.mrb[0].mxu0
      %v343 = vpop.f32.mrb[0].mxu0
      %v344 = vadd.f32 0.0, %v343
      %v345 = vpop.f32.mrb[0].mxu0
      %346 = vmatprep.mubr.bf16.mxu0 0
      %347 = vmatmul.mubr.bf16.gmra.mrb[0].mxu0 %v270
      %v348 = vpop.f32.mrb[0].mxu0
      %v349 = vadd.f32 0.0, %v348
      %v350 = vpop.f32.mrb[0].mxu0
      %v351 = vpop.f32.mrb[0].mxu0
      %v352 = vadd.f32 0.0, %v351
      %v353 = vpop.f32.mrb[0].mxu0
      %354 = vmatprep.mubr.bf16.mxu0 0
      %355 = vmatmul.mubr.bf16.gmra.mrb[0].mxu0 %v273
      %v356 = vpop.f32.mrb[0].mxu0
      %v357 = vadd.f32 0.0, %v356
      %v358 = vpop.f32.mrb[0].mxu0
      %v359 = vpop.f32.mrb[0].mxu0
      %v360 = vadd.f32 0.0, %v359
      %v361 = vpop.f32.mrb[0].mxu0
      %362 = vmatprep.mubr.bf16.mxu0 0
      %363 = vmatmul.mubr.bf16.gmra.mrb[0].mxu0 %v276
      %v364 = vpop.f32.mrb[0].mxu0
      %v365 = vadd.f32 0.0, %v364
      %v366 = vpop.f32.mrb[0].mxu0
      %v367 = vpop.f32.mrb[0].mxu0
      %v368 = vadd.f32 0.0, %v367
      %v369 = vpop.f32.mrb[0].mxu0
      %370 = vmatprep.mubr.bf16.mxu0 0
      %371 = vmatmul.mubr.bf16.gmra.mrb[0].mxu0 %v279
      %v372 = vpop.f32.mrb[0].mxu0
      %v373 = vadd.f32 0.0, %v372
      %v374 = vpop.f32.mrb[0].mxu0
      %v375 = vpop.f32.mrb[0].mxu0
      %v376 = vadd.f32 0.0, %v375
      %v377 = vpop.f32.mrb[0].mxu0
      %378 = vmatprep.mubr.bf16.mxu0 0
      %379 = vmatmul.mubr.bf16.gmra.mrb[0].mxu0 %v282
      %v380 = vpop.f32.mrb[0].mxu0
      %v381 = vadd.f32 0.0, %v380
      %v382 = vpop.f32.mrb[0].mxu0
      %v383 = vpop.f32.mrb[0].mxu0
      %v384 = vadd.f32 0.0, %v383
      %v385 = vpop.f32.mrb[0].mxu0
      %386 = vmatprep.mubr.bf16.mxu0 0
      %387 = vmatmul.mubr.bf16.gmra.mrb[0].mxu0 %v285
      %v388 = vpop.f32.mrb[0].mxu0
      %v389 = vadd.f32 0.0, %v388
      %v390 = vpop.f32.mrb[0].mxu0
      %v391 = vpop.f32.mrb[0].mxu0
      %v392 = vadd.f32 0.0, %v391
      %v393 = vpop.f32.mrb[0].mxu0
      %394 = vmatprep.mubr.bf16.mxu0 0
      %395 = vmatmul.mubr.bf16.gmra.mrb[0].mxu0 %v288
      %v396 = vpop.f32.mrb[0].mxu0
      %v397 = vadd.f32 0.0, %v396
      %v398 = vpop.f32.mrb[0].mxu0
      %v399 = vpop.f32.mrb[0].mxu0
      %v400 = vadd.f32 0.0, %v399
      %v401 = vpop.f32.mrb[0].mxu0
      %402 = vmatprep.mubr.bf16.mxu0 0
      %403 = vmatmul.mubr.bf16.gmra.mrb[0].mxu0 %v291
      %v404 = vpop.f32.mrb[0].mxu0
      %v405 = vadd.f32 0.0, %v404
      %v406 = vpop.f32.mrb[0].mxu0
      %v407 = vpop.f32.mrb[0].mxu0
      %v408 = vadd.f32 0.0, %v407
      %v409 = vpop.f32.mrb[0].mxu0
      %410 = vmatprep.mubr.bf16.mxu0 0
      %411 = vmatmul.mubr.bf16.gmra.mrb[0].mxu0 %v294
      %v412 = vpop.f32.mrb[0].mxu0
      %v413 = vadd.f32 0.0, %v412
      %v414 = vpop.f32.mrb[0].mxu0
      %v415 = vpop.f32.mrb[0].mxu0
      %v416 = vadd.f32 0.0, %v415
      %v417 = vpop.f32.mrb[0].mxu0
      %418 = vmatprep.mubr.bf16.mxu0 0
      %419 = vmatmul.mubr.bf16.gmra.mrb[0].mxu0 %v297
      %v420 = vpop.f32.mrb[0].mxu0
      %v421 = vadd.f32 0.0, %v420
      %v422 = vpop.f32.mrb[0].mxu0
      %v423 = vpop.f32.mrb[0].mxu0
      %v424 = vadd.f32 0.0, %v423
      %v425 = vpop.f32.mrb[0].mxu0
      %426 = vmatprep.mubr.bf16.mxu0 0
      %427 = vmatmul.mubr.bf16.gmra.mrb[0].mxu0 %v300
      %v428 = vpop.f32.mrb[0].mxu0
      %v429 = vadd.f32 0.0, %v428
      %v430 = vpop.f32.mrb[0].mxu0
      %v431 = vpop.f32.mrb[0].mxu0
      %v432 = vadd.f32 0.0, %v431
      %v433 = vpop.f32.mrb[0].mxu0
      %434 = vdwg.mxu0
      %v435 = vadd.f32 %v341, %v344
      %v436 = vadd.f32 %v435, %v349
      %v437 = vadd.f32 %v436, %v352
      %v438 = vadd.f32 %v437, %v357
      %v439 = vadd.f32 %v438, %v360
      %v440 = vadd.f32 %v439, %v365
      %v441 = vadd.f32 %v440, %v368
      %v442 = vadd.f32 %v441, %v373
      %v443 = vadd.f32 %v442, %v376
      %v444 = vadd.f32 %v443, %v381
      %v445 = vadd.f32 %v444, %v384
      %v446 = vadd.f32 %v445, %v389
      %v447 = vadd.f32 %v446, %v392
      %v448 = vadd.f32 %v447, %v397
      %v449 = vadd.f32 %v448, %v400
      %v450 = vadd.f32 %v449, %v405
      %v451 = vadd.f32 %v450, %v408
      %v452 = vadd.f32 %v451, %v413
      %v453 = vadd.f32 %v452, %v416
      %v454 = vadd.f32 %v453, %v421
      %v455 = vadd.f32 %v454, %v424
      %v456 = vadd.f32 %v455, %v429
      %v457 = vadd.f32 %v456, %v432
      %v458 = vrot.slane %v457, 4
      %v459 = vadd.f32 %v457, %v458
      %v460 = vrot.slane %v459, 2
      %v461 = vadd.f32 %v459, %v460
      %v462 = vrot.slane %v461, 1
      %v463 = vadd.f32 %v461, %v462
      %464 = vst [vmem:[%s143] sm:$0x1] %v463
      %v465 = vmul.f32 %v341, %v341
      %v466 = vmul.f32 %v344, %v344
      %v467 = vmul.f32 %v349, %v349
      %v468 = vmul.f32 %v352, %v352
      %v469 = vmul.f32 %v357, %v357
      %v470 = vmul.f32 %v360, %v360
      %v471 = vmul.f32 %v365, %v365
      %v472 = vmul.f32 %v368, %v368
      %v473 = vmul.f32 %v373, %v373
      %v474 = vmul.f32 %v376, %v376
      %v475 = vmul.f32 %v381, %v381
      %v476 = vmul.f32 %v384, %v384
      %v477 = vmul.f32 %v389, %v389
      %v478 = vmul.f32 %v392, %v392
      %v479 = vmul.f32 %v397, %v397
      %v480 = vmul.f32 %v400, %v400
      %v481 = vmul.f32 %v405, %v405
      %v482 = vmul.f32 %v408, %v408
      %v483 = vmul.f32 %v413, %v413
      %v484 = vmul.f32 %v416, %v416
      %v485 = vmul.f32 %v421, %v421
      %v486 = vmul.f32 %v424, %v424
      %v487 = vmul.f32 %v429, %v429
      %v488 = vmul.f32 %v432, %v432
      %v489 = vadd.f32 %v465, %v466
      %v490 = vadd.f32 %v489, %v467
      %v491 = vadd.f32 %v490, %v468
      %v492 = vadd.f32 %v491, %v469
      %v493 = vadd.f32 %v492, %v470
      %v494 = vadd.f32 %v493, %v471
      %v495 = vadd.f32 %v494, %v472
      %v496 = vadd.f32 %v495, %v473
      %v497 = vadd.f32 %v496, %v474
      %v498 = vadd.f32 %v497, %v475
      %v499 = vadd.f32 %v498, %v476
      %v500 = vadd.f32 %v499, %v477
      %v501 = vadd.f32 %v500, %v478
      %v502 = vadd.f32 %v501, %v479
      %v503 = vadd.f32 %v502, %v480
      %v504 = vadd.f32 %v503, %v481
      %v505 = vadd.f32 %v504, %v482
      %v506 = vadd.f32 %v505, %v483
      %v507 = vadd.f32 %v506, %v484
      %v508 = vadd.f32 %v507, %v485
      %v509 = vadd.f32 %v508, %v486
      %v510 = vadd.f32 %v509, %v487
      %v511 = vadd.f32 %v510, %v488
      %v512 = vrot.slane %v511, 4
      %v513 = vadd.f32 %v511, %v512
      %v514 = vrot.slane %v513, 2
      %v515 = vadd.f32 %v513, %v514
      %v516 = vrot.slane %v515, 1
      %v517 = vadd.f32 %v515, %v516
      %518 = vst [vmem:[%s143 + $0x1] sm:$0x1] %v517
      %p519 = scmp.lt.s32.totalorder %s13, 1
      %s520 = scalar_select %p519, %s13, 1
      %s521 = smul.addr %s520, 2
      %s522 = scalar_lea.vmem %s2, %s521
      // Predicated region
      $region29: #{entry_encoder_forward.9} parent=27 // pred_check
        %p523 = pneg %p78
      $region30: #{entry_encoder_forward.9} parent=27 // pred_check_branch
        %525 = sbr.rel (%p523) target = $region32
      $region31: #{entry_encoder_forward.9} parent=27 // pred_region
        _
      $region32: #{entry_encoder_forward.9} parent=27 // pred_fallthru
        _
    $region28: #{entry_encoder_forward.9} parent=5 // pred_fallthru
      _
    %p526 = scmp.le.s32.totalorder 2, %s8
    // Predicated region
    $region33: #{entry_encoder_forward.9} parent=5 // pred_check
      %p527 = pneg %p526
    $region34: #{entry_encoder_forward.9} parent=5 // pred_check_branch
      %529 = sbr.rel (%p527) target = $region36
    $region35: #{entry_encoder_forward.9} parent=5 // pred_region
      %s530 = ssub.s32 %s8, 2
      // Predicated region
      $region37: #{entry_encoder_forward.9} parent=35 // pred_check
        %p531 = pneg %p84
      $region38: #{entry_encoder_forward.9} parent=35 // pred_check_branch
        %533 = sbr.rel (%p531) target = $region40
      $region39: #{entry_encoder_forward.9} parent=35 // pred_region
        %p534 = scmp.lt.s32.totalorder %s14, 1
        %s535 = scalar_select %p534, %s14, 1
        %s536 = smul.addr %s535, 2
        %s537 = scalar_lea.vmem %s2, %s536
      $region40: #{entry_encoder_forward.9} parent=35 // pred_fallthru
        _
    $region36: #{entry_encoder_forward.9} parent=5 // pred_fallthru
      _
  $region6: #{entry_encoder_forward.9} parent=0 // loop_footer
    %s12 = sadd.s32 1, %s8
  $region7: #{entry_encoder_forward.9} parent=0 // loop_footer_branch
    %7 = sbr.rel target = $region3
  $region8: #{entry_encoder_forward.9} parent=0 // loop_exit
    _

// kernel: entry_encoder_forward.10
$region0: #{entry_encoder_forward.10}
  #allocation0 [shape = 'u32[]', space=smem, size = 0x4, offset = 0x4, fixed_abs, tag = 'smem constant byte address 0x4 - core index']
  #allocation1 [shape = 'u32[144,128]{1,0:T(1,128)}', space=vmem, size = 0x12000, scoped, tag = 'internal scratch']
  %s0 = inlined_call_operand.vmem [shape: bf16[384,72], index: 0, kind: input, shape index: {}]
  %s1 = inlined_call_operand.vmem [shape: bf16[72,128], index: 1, kind: input, shape index: {}]
  %s2 = inlined_call_operand.vmem [shape: f32[1,128], index: 2, kind: input, shape index: {}]
  %s3 = inlined_call_operand.vmem [shape: f32[1,128], index: 3, kind: input, shape index: {}]
  %s4 = inlined_call_operand.vmem [shape: bf16[384,128], index: 4, kind: output, shape index: {}]
  %s5 = sld [smem:[#allocation0]]
  $region49: #{entry_encoder_forward.10} parent=0
    _
  %s7 = ssub.s32 1, %s5
  %s8 = scalar_select 0, %s7, %s5
  loop: start=0, step=1, limit=4
  $region2: #{entry_encoder_forward.10} parent=0 // loop_pre_header
    _
  $region3: #{entry_encoder_forward.10} parent=0 // loop_header
    %s10 = sphi 0, %s14
    %p11 = scmp.ge.s32.totalorder %s10, 4
    %s20 = sphi 0, %s22
    %s23 = sphi 0, %s20
    %s24 = sphi 0, %s23
    %s40 = sphi 0, %s24
    %s44 = sphi 0, %s44
    %s46 = sphi 0, %s44
    %s47 = sphi 0, %s46
    %s61 = sphi 0, %s47
    %s65 = sphi 0, %s65
    %s67 = sphi 0, %s65
    %s68 = sphi 0, %s67
    %s82 = sphi 0, %s68
    %s86 = sphi 0, %s86
    %s88 = sphi 0, %s86
    %s89 = sphi 0, %s88
    %s103 = sphi 0, %s89
    %s109 = sphi 0, %s111
    %s112 = sphi 0, %s109
    %s113 = sphi 0, %s112
    %s129 = sphi 0, %s113
  $region4: #{entry_encoder_forward.10} parent=0 // loop_header_branch
    %13 = sbr.rel (%p11) target = $region8
  $region5: #{entry_encoder_forward.10} parent=0 // loop_body
    %s15 = ssub.s32 %s10, 1
    %s16 = ssub.s32 %s10, 2
    %s17 = sadd.s32 %s10, 1
    %s18 = ssub.s32 %s10, %s17
    %p19 = scmp.eq.s32.totalorder %s18, 0
    %s21 = sadd.s32 %s20, 1
    %s22 = scalar_select %p19, %s20, %s21
    %p25 = pneg %p19
    %p26 = scmp.eq.s32.totalorder %s10, 1
    %p27 = por %p25, %p26
    %p28 = scmp.ne.s32.totalorder %s20, %s23
    %p29 = scmp.eq.s32.totalorder %s10, 0
    %p30 = por %p28, %p29
    %p31 = scmp.ne.s32.totalorder %s20, %s23
    %p32 = scmp.eq.s32.totalorder %s15, 1
    %p33 = por %p31, %p32
    %p34 = scmp.ne.s32.totalorder %s23, %s24
    %p35 = scmp.eq.s32.totalorder %s15, 0
    %p36 = por %p34, %p35
    %p37 = scmp.ne.s32.totalorder %s23, %s24
    %p38 = scmp.eq.s32.totalorder %s16, 1
    %p39 = por %p37, %p38
    %p41 = scmp.ne.s32.totalorder %s24, %s40
    %p42 = scmp.eq.s32.totalorder %s16, 0
    %p43 = por %p41, %p42
    %s45 = sadd.s32 %s44, 1
    %p48 = scmp.eq.s32.totalorder %s10, 1
    %p49 = scmp.ne.s32.totalorder %s44, %s46
    %p50 = scmp.eq.s32.totalorder %s10, 0
    %p51 = por %p49, %p50
    %p52 = scmp.ne.s32.totalorder %s44, %s46
    %p53 = scmp.eq.s32.totalorder %s15, 1
    %p54 = por %p52, %p53
    %p55 = scmp.ne.s32.totalorder %s46, %s47
    %p56 = scmp.eq.s32.totalorder %s15, 0
    %p57 = por %p55, %p56
    %p58 = scmp.ne.s32.totalorder %s46, %s47
    %p59 = scmp.eq.s32.totalorder %s16, 1
    %p60 = por %p58, %p59
    %p62 = scmp.ne.s32.totalorder %s47, %s61
    %p63 = scmp.eq.s32.totalorder %s16, 0
    %p64 = por %p62, %p63
    %s66 = sadd.s32 %s65, 1
    %p69 = scmp.eq.s32.totalorder %s10, 1
    %p70 = scmp.ne.s32.totalorder %s65, %s67
    %p71 = scmp.eq.s32.totalorder %s10, 0
    %p72 = por %p70, %p71
    %p73 = scmp.ne.s32.totalorder %s65, %s67
    %p74 = scmp.eq.s32.totalorder %s15, 1
    %p75 = por %p73, %p74
    %p76 = scmp.ne.s32.totalorder %s67, %s68
    %p77 = scmp.eq.s32.totalorder %s15, 0
    %p78 = por %p76, %p77
    %p79 = scmp.ne.s32.totalorder %s67, %s68
    %p80 = scmp.eq.s32.totalorder %s16, 1
    %p81 = por %p79, %p80
    %p83 = scmp.ne.s32.totalorder %s68, %s82
    %p84 = scmp.eq.s32.totalorder %s16, 0
    %p85 = por %p83, %p84
    %s87 = sadd.s32 %s86, 1
    %p90 = scmp.eq.s32.totalorder %s10, 1
    %p91 = scmp.ne.s32.totalorder %s86, %s88
    %p92 = scmp.eq.s32.totalorder %s10, 0
    %p93 = por %p91, %p92
    %p94 = scmp.ne.s32.totalorder %s86, %s88
    %p95 = scmp.eq.s32.totalorder %s15, 1
    %p96 = por %p94, %p95
    %p97 = scmp.ne.s32.totalorder %s88, %s89
    %p98 = scmp.eq.s32.totalorder %s15, 0
    %p99 = por %p97, %p98
    %p100 = scmp.ne.s32.totalorder %s88, %s89
    %p101 = scmp.eq.s32.totalorder %s16, 1
    %p102 = por %p100, %p101
    %p104 = scmp.ne.s32.totalorder %s89, %s103
    %p105 = scmp.eq.s32.totalorder %s16, 0
    %p106 = por %p104, %p105
    %s107 = ssub.s32 %s10, %s17
    %p108 = scmp.eq.s32.totalorder %s107, 0
    %s110 = sadd.s32 %s109, 1
    %s111 = scalar_select %p108, %s109, %s110
    %p114 = pneg %p108
    %p115 = scmp.eq.s32.totalorder %s10, 1
    %p116 = por %p114, %p115
    %p117 = scmp.ne.s32.totalorder %s109, %s112
    %p118 = scmp.eq.s32.totalorder %s10, 0
    %p119 = por %p117, %p118
    %p120 = scmp.ne.s32.totalorder %s109, %s112
    %p121 = scmp.eq.s32.totalorder %s15, 1
    %p122 = por %p120, %p121
    %p123 = scmp.ne.s32.totalorder %s112, %s113
    %p124 = scmp.eq.s32.totalorder %s15, 0
    %p125 = por %p123, %p124
    %p126 = scmp.ne.s32.totalorder %s112, %s113
    %p127 = scmp.eq.s32.totalorder %s16, 1
    %p128 = por %p126, %p127
    %p130 = scmp.ne.s32.totalorder %s113, %s129
    %p131 = scmp.eq.s32.totalorder %s16, 0
    %p132 = por %p130, %p131
    %p133 = scmp.le.s32.totalorder 1, %s10
    %p134 = scmp.lt.s32.totalorder %s10, 3
    %p135 = pnand %p133, %p134
    %p136 = pneg %p135
    // Predicated region
    $region9: #{entry_encoder_forward.10} parent=5 // pred_check
      _
    $region10: #{entry_encoder_forward.10} parent=5 // pred_check_branch
      %138 = sbr.rel (%p135) target = $region12
    $region11: #{entry_encoder_forward.10} parent=5 // pred_region
      %s139 = ssub.s32 %s10, 1
      // Predicated region
      $region13: #{entry_encoder_forward.10} parent=11 // pred_check
        %p140 = pneg %p57
      $region14: #{entry_encoder_forward.10} parent=11 // pred_check_branch
        %142 = sbr.rel (%p140) target = $region16
      $region15: #{entry_encoder_forward.10} parent=11 // pred_region
        _
      $region16: #{entry_encoder_forward.10} parent=11 // pred_fallthru
        _
      // Predicated region
      $region17: #{entry_encoder_forward.10} parent=11 // pred_check
        %p143 = pneg %p78
      $region18: #{entry_encoder_forward.10} parent=11 // pred_check_branch
        %145 = sbr.rel (%p143) target = $region20
      $region19: #{entry_encoder_forward.10} parent=11 // pred_region
        _
      $region20: #{entry_encoder_forward.10} parent=11 // pred_fallthru
        _
      // Predicated region
      $region21: #{entry_encoder_forward.10} parent=11 // pred_check
        %p146 = pneg %p99
      $region22: #{entry_encoder_forward.10} parent=11 // pred_check_branch
        %148 = sbr.rel (%p146) target = $region24
      $region23: #{entry_encoder_forward.10} parent=11 // pred_region
        _
      $region24: #{entry_encoder_forward.10} parent=11 // pred_fallthru
        _
    $region12: #{entry_encoder_forward.10} parent=5 // pred_fallthru
      _
    %p149 = scmp.lt.s32.totalorder %s10, 2
    // Predicated region
    $region25: #{entry_encoder_forward.10} parent=5 // pred_check
      %p150 = pneg %p149
    $region26: #{entry_encoder_forward.10} parent=5 // pred_check_branch
      %152 = sbr.rel (%p150) target = $region28
    $region27: #{entry_encoder_forward.10} parent=5 // pred_region
      // Predicated region
      $region29: #{entry_encoder_forward.10} parent=27 // pred_check
        %p153 = pneg %p30
      $region30: #{entry_encoder_forward.10} parent=27 // pred_check_branch
        %155 = sbr.rel (%p153) target = $region32
      $region31: #{entry_encoder_forward.10} parent=27 // pred_region
        %s156 = smul.u32 24, %s10
        %p157 = scmp.lt.s32.totalorder %s156, 47
        %s158 = scalar_select %p157, %s156, 47
        %s159 = smul.addr %s158, 4
        %s160 = scalar_lea.vmem %s0, %s159
        %s161 = smul.u32 24, %s10
      $region32: #{entry_encoder_forward.10} parent=27 // pred_fallthru
        _
    $region28: #{entry_encoder_forward.10} parent=5 // pred_fallthru
      _
    %p162 = scmp.le.s32.totalorder 1, %s10
    %p163 = scmp.lt.s32.totalorder %s10, 3
    %p164 = pnand %p162, %p163
    %p165 = pneg %p164
    // Predicated region
    $region33: #{entry_encoder_forward.10} parent=5 // pred_check
      _
    $region34: #{entry_encoder_forward.10} parent=5 // pred_check_branch
      %167 = sbr.rel (%p164) target = $region36
    $region35: #{entry_encoder_forward.10} parent=5 // pred_region
      %s168 = ssub.s32 %s10, 1
      %s169 = smul.u32 24, %s15
      %p170 = scmp.lt.s32.totalorder %s169, 47
      %s171 = scalar_select %p170, %s169, 47
      %s172 = smul.addr %s171, 4
      %s173 = scalar_lea.vmem %s0, %s172
      %p174 = pneg %p36
      %p175 = pneg %p33
      %p176 = pneg %p57
      %p177 = pneg %p54
      %p178 = pneg %p78
      %p179 = pneg %p75
      %p180 = pneg %p99
      %p181 = pneg %p96
      %p182 = pneg %p125
      %p183 = pneg %p122
      %s184 = smul.u32 24, %s15
      %p185 = scmp.lt.s32.totalorder %s184, 47
      %s186 = scalar_select %p185, %s184, 47
      %s187 = smul.addr %s186, 4
      %s188 = scalar_lea.vmem %s4, %s187
      %s189 = smul.u32 24, %s15
      %p190 = scmp.lt.s32.totalorder %s189, 47
      %s191 = scalar_select %p190, %s189, 47
      %s192 = smul.addr %s191, 4
      %s193 = scalar_lea.vmem %s0, %s192
      %s194 = smul.u32 24, %s15
      %s195 = smul.u32 24, %s15
      %p196 = scmp.lt.s32.totalorder %s195, 47
      %s197 = scalar_select %p196, %s195, 47
      %s198 = smul.addr %s197, 4
      %s199 = scalar_lea.vmem %s4, %s198
      %s200 = smul.u32 24, %s15
      %v202 = vld [vmem:[%s193] sm:$0xf]
      %v203 = vld [vmem:[%s193 + $0x4] sm:$0xf]
      %v204 = vld [vmem:[%s193 + $0x8] sm:$0xf]
      %v205 = vld [vmem:[%s193 + $0xc] sm:$0xf]
      %v206 = vld [vmem:[%s193 + $0x10] sm:$0xf]
      %v207 = vld [vmem:[%s193 + $0x14] sm:$0xf]
      %v208 = vld [vmem:[%s193 + $0x18] sm:$0xf]
      %v209 = vld [vmem:[%s193 + $0x1c] sm:$0xf]
      %v210 = vld [vmem:[%s193 + $0x20] sm:$0xf]
      %v211 = vld [vmem:[%s193 + $0x24] sm:$0xf]
      %v212 = vld [vmem:[%s193 + $0x28] sm:$0xf]
      %v213 = vld [vmem:[%s193 + $0x2c] sm:$0xf]
      %v214 = vld [vmem:[%s193 + $0x30] sm:$0xf]
      %v215 = vld [vmem:[%s193 + $0x34] sm:$0xf]
      %v216 = vld [vmem:[%s193 + $0x38] sm:$0xf]
      %v217 = vld [vmem:[%s193 + $0x3c] sm:$0xf]
      %v218 = vld [vmem:[%s193 + $0x40] sm:$0xf]
      %v219 = vld [vmem:[%s193 + $0x44] sm:$0xf]
      %v220 = vld [vmem:[%s193 + $0x48] sm:$0xf]
      %v221 = vld [vmem:[%s193 + $0x4c] sm:$0xf]
      %v222 = vld [vmem:[%s193 + $0x50] sm:$0xf]
      %v223 = vld [vmem:[%s193 + $0x54] sm:$0xf]
      %v224 = vld [vmem:[%s193 + $0x58] sm:$0xf]
      %v225 = vld [vmem:[%s193 + $0x5c] sm:$0xf]
      %v226 = vld [vmem:[%s1] sm:$0xf]
      %v227 = vld [vmem:[%s1 + $0x4] sm:$0xf]
      %v228 = vld [vmem:[%s1 + $0x8] sm:$0xf]
      %v229 = vld [vmem:[%s1 + $0xc] sm:$0xf]
      %v230 = vld [vmem:[%s1 + $0x10] sm:$0xf]
      %v231 = vld [vmem:[%s1 + $0x14] sm:$0xf]
      %v232 = vld [vmem:[%s1 + $0x18] sm:$0xf]
      %v233 = vld [vmem:[%s1 + $0x1c] sm:$0xf]
      %v234 = vld [vmem:[%s1 + $0x20] sm:$0xf]
      %v259 = vunpack.c.l.b16 %v202
      %v260 = vunpack.c.l.b16 %v203
      %v261 = vunpack.c.l.b16 %v204
      %v262 = vunpack.c.l.b16 %v205
      %v263 = vunpack.c.l.b16 %v206
      %v264 = vunpack.c.l.b16 %v207
      %v265 = vunpack.c.l.b16 %v208
      %v266 = vunpack.c.l.b16 %v209
      %v267 = vunpack.c.l.b16 %v210
      %v268 = vunpack.c.l.b16 %v211
      %v269 = vunpack.c.l.b16 %v212
      %v270 = vunpack.c.l.b16 %v213
      %v271 = vunpack.c.l.b16 %v214
      %v272 = vunpack.c.l.b16 %v215
      %v273 = vunpack.c.l.b16 %v216
      %v274 = vunpack.c.l.b16 %v217
      %v275 = vunpack.c.l.b16 %v218
      %v276 = vunpack.c.l.b16 %v219
      %v277 = vunpack.c.l.b16 %v220
      %v278 = vunpack.c.l.b16 %v221
      %v279 = vunpack.c.l.b16 %v222
      %v280 = vunpack.c.l.b16 %v223
      %v281 = vunpack.c.l.b16 %v224
      %v282 = vunpack.c.l.b16 %v225
      %v283 = vpack.c.b16 %v260, %v259
      %v284 = vpack.c.b16 %v262, %v261
      %v285 = vpack.c.b16 %v264, %v263
      %v286 = vpack.c.b16 %v266, %v265
      %v287 = vpack.c.b16 %v268, %v267
      %v288 = vpack.c.b16 %v270, %v269
      %v289 = vpack.c.b16 %v272, %v271
      %v290 = vpack.c.b16 %v274, %v273
      %v291 = vpack.c.b16 %v276, %v275
      %v292 = vpack.c.b16 %v278, %v277
      %v293 = vpack.c.b16 %v280, %v279
      %v294 = vpack.c.b16 %v282, %v281
      %v304 = vunpack.c.l.b16 %v226
      %v305 = vunpack.c.l.b16 %v227
      %v306 = vunpack.c.l.b16 %v228
      %v307 = vunpack.c.l.b16 %v229
      %v308 = vunpack.c.l.b16 %v230
      %v309 = vunpack.c.l.b16 %v231
      %v310 = vunpack.c.l.b16 %v232
      %v311 = vunpack.c.l.b16 %v233
      %v312 = vunpack.c.l.b16 %v234
      %v313 = vpack.c.b16 %v305, %v304
      %v314 = vpack.c.b16 %v307, %v306
      %v315 = vpack.c.b16 %v309, %v308
      %v316 = vpack.c.b16 %v311, %v310
      %v317 = vpack.c.b16 %v312, %v312
      %vm322 = vcmask 588800
      %v324 = vsel %vm322, %v283, 0
      %v327 = vsel %vm322, %v284, 0
      %v330 = vsel %vm322, %v285, 0
      %v333 = vsel %vm322, %v286, 0
      %v336 = vsel %vm322, %v287, 0
      %v339 = vsel %vm322, %v288, 0
      %v342 = vsel %vm322, %v289, 0
      %v345 = vsel %vm322, %v290, 0
      %v348 = vsel %vm322, %v291, 0
      %v351 = vsel %vm322, %v292, 0
      %v354 = vsel %vm322, %v293, 0
      %v357 = vsel %vm322, %v294, 0
      %vm359 = vcmask 1043456
      %v361 = vsel %vm359, %v317, 0
      %363 = vmatprep.subr.bf16.mxu0 0
      %364 = vmatpush1.bf16.msra.mxu0 %v313
      %365 = vmatprep.subr.bf16.mxu0 0
      %366 = vmatpush1.bf16.msra.mxu0 %v314
      %367 = vmatprep.subr.bf16.mxu0 0
      %368 = vmatpush1.bf16.msra.mxu0 %v315
      %369 = vmatprep.subr.bf16.mxu0 0
      %370 = vmatpush1.bf16.msra.mxu0 %v316
      %371 = vmatprep.subr.bf16.mxu0 0
      %372 = vmatpush1.bf16.msra.mxu0 %v361
      %373 = vmatprep.subr.bf16.mxu0 0
      %374 = vmatpush1.bf16.msra.mxu0 0
      %375 = vmatprep.subr.bf16.mxu0 0
      %376 = vmatpush1.bf16.msra.mxu0 0
      %377 = vmatprep.subr.bf16.mxu0 0
      %378 = vmatpush1.bf16.msra.mxu0 0
      %379 = vmatprep.subr.bf16.mxu0 0
      %380 = vmatpush1.bf16.msra.mxu0 0
      %381 = vmatprep.subr.bf16.mxu0 0
      %382 = vmatpush1.bf16.msra.mxu0 0
      %383 = vmatprep.subr.bf16.mxu0 0
      %384 = vmatpush1.bf16.msra.mxu0 0
      %385 = vmatprep.subr.bf16.mxu0 0
      %386 = vmatpush1.bf16.msra.mxu0 0
      %387 = vmatprep.subr.bf16.mxu0 0
      %388 = vmatpush1.bf16.msra.mxu0 0
      %389 = vmatprep.subr.bf16.mxu0 0
      %390 = vmatpush1.bf16.msra.mxu0 0
      %391 = vmatprep.subr.bf16.mxu0 0
      %392 = vmatpush1.bf16.msra.mxu0 0
      %393 = vmatprep.subr.bf16.mxu0 0
      %394 = vmatpush1.bf16.msra.mxu0 0
      %395 = vmatprep.mubr.bf16.mxu0 0
      %396 = vmatmul.mubr.bf16.gmra.mrb[0].mxu0 %v324
      %v397 = vpop.f32.mrb[0].mxu0
      %v398 = vadd.f32 0.0, %v397
      %v399 = vpop.f32.mrb[0].mxu0
      %v400 = vpop.f32.mrb[0].mxu0
      %v401 = vadd.f32 0.0, %v400
      %v402 = vpop.f32.mrb[0].mxu0
      %403 = vmatprep.mubr.bf16.mxu0 0
      %404 = vmatmul.mubr.bf16.gmra.mrb[0].mxu0 %v327
      %v405 = vpop.f32.mrb[0].mxu0
      %v406 = vadd.f32 0.0, %v405
      %v407 = vpop.f32.mrb[0].mxu0
      %v408 = vpop.f32.mrb[0].mxu0
      %v409 = vadd.f32 0.0, %v408
      %v410 = vpop.f32.mrb[0].mxu0
      %411 = vmatprep.mubr.bf16.mxu0 0
      %412 = vmatmul.mubr.bf16.gmra.mrb[0].mxu0 %v330
      %v413 = vpop.f32.mrb[0].mxu0
      %v414 = vadd.f32 0.0, %v413
      %v415 = vpop.f32.mrb[0].mxu0
      %v416 = vpop.f32.mrb[0].mxu0
      %v417 = vadd.f32 0.0, %v416
      %v418 = vpop.f32.mrb[0].mxu0
      %419 = vmatprep.mubr.bf16.mxu0 0
      %420 = vmatmul.mubr.bf16.gmra.mrb[0].mxu0 %v333
      %v421 = vpop.f32.mrb[0].mxu0
      %v422 = vadd.f32 0.0, %v421
      %v423 = vpop.f32.mrb[0].mxu0
      %v424 = vpop.f32.mrb[0].mxu0
      %v425 = vadd.f32 0.0, %v424
      %v426 = vpop.f32.mrb[0].mxu0
      %427 = vmatprep.mubr.bf16.mxu0 0
      %428 = vmatmul.mubr.bf16.gmra.mrb[0].mxu0 %v336
      %v429 = vpop.f32.mrb[0].mxu0
      %v430 = vadd.f32 0.0, %v429
      %v431 = vpop.f32.mrb[0].mxu0
      %v432 = vpop.f32.mrb[0].mxu0
      %v433 = vadd.f32 0.0, %v432
      %v434 = vpop.f32.mrb[0].mxu0
      %435 = vmatprep.mubr.bf16.mxu0 0
      %436 = vmatmul.mubr.bf16.gmra.mrb[0].mxu0 %v339
      %v437 = vpop.f32.mrb[0].mxu0
      %v438 = vadd.f32 0.0, %v437
      %v439 = vpop.f32.mrb[0].mxu0
      %v440 = vpop.f32.mrb[0].mxu0
      %v441 = vadd.f32 0.0, %v440
      %v442 = vpop.f32.mrb[0].mxu0
      %443 = vmatprep.mubr.bf16.mxu0 0
      %444 = vmatmul.mubr.bf16.gmra.mrb[0].mxu0 %v342
      %v445 = vpop.f32.mrb[0].mxu0
      %v446 = vadd.f32 0.0, %v445
      %v447 = vpop.f32.mrb[0].mxu0
      %v448 = vpop.f32.mrb[0].mxu0
      %v449 = vadd.f32 0.0, %v448
      %v450 = vpop.f32.mrb[0].mxu0
      %451 = vmatprep.mubr.bf16.mxu0 0
      %452 = vmatmul.mubr.bf16.gmra.mrb[0].mxu0 %v345
      %v453 = vpop.f32.mrb[0].mxu0
      %v454 = vadd.f32 0.0, %v453
      %v455 = vpop.f32.mrb[0].mxu0
      %v456 = vpop.f32.mrb[0].mxu0
      %v457 = vadd.f32 0.0, %v456
      %v458 = vpop.f32.mrb[0].mxu0
      %459 = vmatprep.mubr.bf16.mxu0 0
      %460 = vmatmul.mubr.bf16.gmra.mrb[0].mxu0 %v348
      %v461 = vpop.f32.mrb[0].mxu0
      %v462 = vadd.f32 0.0, %v461
      %v463 = vpop.f32.mrb[0].mxu0
      %v464 = vpop.f32.mrb[0].mxu0
      %v465 = vadd.f32 0.0, %v464
      %v466 = vpop.f32.mrb[0].mxu0
      %467 = vmatprep.mubr.bf16.mxu0 0
      %468 = vmatmul.mubr.bf16.gmra.mrb[0].mxu0 %v351
      %v469 = vpop.f32.mrb[0].mxu0
      %v470 = vadd.f32 0.0, %v469
      %v471 = vpop.f32.mrb[0].mxu0
      %v472 = vpop.f32.mrb[0].mxu0
      %v473 = vadd.f32 0.0, %v472
      %v474 = vpop.f32.mrb[0].mxu0
      %475 = vmatprep.mubr.bf16.mxu0 0
      %476 = vmatmul.mubr.bf16.gmra.mrb[0].mxu0 %v354
      %v477 = vpop.f32.mrb[0].mxu0
      %v478 = vadd.f32 0.0, %v477
      %v479 = vpop.f32.mrb[0].mxu0
      %v480 = vpop.f32.mrb[0].mxu0
      %v481 = vadd.f32 0.0, %v480
      %v482 = vpop.f32.mrb[0].mxu0
      %483 = vmatprep.mubr.bf16.mxu0 0
      %484 = vmatmul.mubr.bf16.gmra.mrb[0].mxu0 %v357
      %v485 = vpop.f32.mrb[0].mxu0
      %v486 = vadd.f32 0.0, %v485
      %v487 = vpop.f32.mrb[0].mxu0
      %v488 = vpop.f32.mrb[0].mxu0
      %v489 = vadd.f32 0.0, %v488
      %v490 = vpop.f32.mrb[0].mxu0
      %491 = vdwg.mxu0
      %v492 = vld [vmem:[%s2] sm:$0x1]
      %v494 = vlaneseq
      %v495 = vshrl.u32 %v494, 7
      %v496 = vsub.s32 0, %v495
      %v497 = vrot.slane %v492, %v496
      %v499 = vmul.f32 %v398, %v497
      %v500 = vmul.f32 %v401, %v497
      %v501 = vmul.f32 %v406, %v497
      %v502 = vmul.f32 %v409, %v497
      %v503 = vmul.f32 %v414, %v497
      %v504 = vmul.f32 %v417, %v497
      %v505 = vmul.f32 %v422, %v497
      %v506 = vmul.f32 %v425, %v497
      %v507 = vmul.f32 %v430, %v497
      %v508 = vmul.f32 %v433, %v497
      %v509 = vmul.f32 %v438, %v497
      %v510 = vmul.f32 %v441, %v497
      %v511 = vmul.f32 %v446, %v497
      %v512 = vmul.f32 %v449, %v497
      %v513 = vmul.f32 %v454, %v497
      %v514 = vmul.f32 %v457, %v497
      %v515 = vmul.f32 %v462, %v497
      %v516 = vmul.f32 %v465, %v497
      %v517 = vmul.f32 %v470, %v497
      %v518 = vmul.f32 %v473, %v497
      %v519 = vmul.f32 %v478, %v497
      %v520 = vmul.f32 %v481, %v497
      %v521 = vmul.f32 %v486, %v497
      %v522 = vmul.f32 %v489, %v497
      %v523 = vld [vmem:[%s3] sm:$0x1]
      %v525 = vlaneseq
      %v526 = vshrl.u32 %v525, 7
      %v527 = vsub.s32 0, %v526
      %v528 = vrot.slane %v523, %v527
      %v530 = vadd.f32 %v499, %v528
      %v531 = vadd.f32 %v500, %v528
      %v532 = vadd.f32 %v501, %v528
      %v533 = vadd.f32 %v502, %v528
      %v534 = vadd.f32 %v503, %v528
      %v535 = vadd.f32 %v504, %v528
      %v536 = vadd.f32 %v505, %v528
      %v537 = vadd.f32 %v506, %v528
      %v538 = vadd.f32 %v507, %v528
      %v539 = vadd.f32 %v508, %v528
      %v540 = vadd.f32 %v509, %v528
      %v541 = vadd.f32 %v510, %v528
      %v542 = vadd.f32 %v511, %v528
      %v543 = vadd.f32 %v512, %v528
      %v544 = vadd.f32 %v513, %v528
      %v545 = vadd.f32 %v514, %v528
      %v546 = vadd.f32 %v515, %v528
      %v547 = vadd.f32 %v516, %v528
      %v548 = vadd.f32 %v517, %v528
      %v549 = vadd.f32 %v518, %v528
      %v550 = vadd.f32 %v519, %v528
      %v551 = vadd.f32 %v520, %v528
      %v552 = vadd.f32 %v521, %v528
      %v553 = vadd.f32 %v522, %v528
      %v554 = vmax.f32 %v530, 0.0
      %v555 = vmax.f32 %v531, 0.0
      %v556 = vmax.f32 %v532, 0.0
      %v557 = vmax.f32 %v533, 0.0
      %v558 = vmax.f32 %v534, 0.0
      %v559 = vmax.f32 %v535, 0.0
      %v560 = vmax.f32 %v536, 0.0
      %v561 = vmax.f32 %v537, 0.0
      %v562 = vmax.f32 %v538, 0.0
      %v563 = vmax.f32 %v539, 0.0
      %v564 = vmax.f32 %v540, 0.0
      %v565 = vmax.f32 %v541, 0.0
      %v566 = vmax.f32 %v542, 0.0
      %v567 = vmax.f32 %v543, 0.0
      %v568 = vmax.f32 %v544, 0.0
      %v569 = vmax.f32 %v545, 0.0
      %v570 = vmax.f32 %v546, 0.0
      %v571 = vmax.f32 %v547, 0.0
      %v572 = vmax.f32 %v548, 0.0
      %v573 = vmax.f32 %v549, 0.0
      %v574 = vmax.f32 %v550, 0.0
      %v575 = vmax.f32 %v551, 0.0
      %v576 = vmax.f32 %v552, 0.0
      %v577 = vmax.f32 %v553, 0.0
      %v578 = vpack.c.bf16 %v555, %v554
      %v579 = vpack.c.bf16 %v557, %v556
      %v580 = vpack.c.bf16 %v559, %v558
      %v581 = vpack.c.bf16 %v561, %v560
      %v582 = vpack.c.bf16 %v563, %v562
      %v583 = vpack.c.bf16 %v565, %v564
      %v584 = vpack.c.bf16 %v567, %v566
      %v585 = vpack.c.bf16 %v569, %v568
      %v586 = vpack.c.bf16 %v571, %v570
      %v587 = vpack.c.bf16 %v573, %v572
      %v588 = vpack.c.bf16 %v575, %v574
      %v589 = vpack.c.bf16 %v577, %v576
      %v602 = vunpack.c.l.b16 %v578
      %v603 = vunpack.c.h.b16 %v578
      %v604 = vunpack.c.l.b16 %v579
      %v605 = vunpack.c.h.b16 %v579
      %v606 = vunpack.c.l.b16 %v580
      %v607 = vunpack.c.h.b16 %v580
      %v608 = vunpack.c.l.b16 %v581
      %v609 = vunpack.c.h.b16 %v581
      %v610 = vunpack.c.l.b16 %v582
      %v611 = vunpack.c.h.b16 %v582
      %v612 = vunpack.c.l.b16 %v583
      %v613 = vunpack.c.h.b16 %v583
      %v614 = vunpack.c.l.b16 %v584
      %v615 = vunpack.c.h.b16 %v584
      %v616 = vunpack.c.l.b16 %v585
      %v617 = vunpack.c.h.b16 %v585
      %v618 = vunpack.c.l.b16 %v586
      %v619 = vunpack.c.h.b16 %v586
      %v620 = vunpack.c.l.b16 %v587
      %v621 = vunpack.c.h.b16 %v587
      %v622 = vunpack.c.l.b16 %v588
      %v623 = vunpack.c.h.b16 %v588
      %v624 = vunpack.c.l.b16 %v589
      %v625 = vunpack.c.h.b16 %v589
      %v626 = vpack.c.b16 %v602, %v602
      %v627 = vpack.c.b16 %v603, %v603
      %v628 = vpack.c.b16 %v604, %v604
      %v629 = vpack.c.b16 %v605, %v605
      %v630 = vpack.c.b16 %v606, %v606
      %v631 = vpack.c.b16 %v607, %v607
      %v632 = vpack.c.b16 %v608, %v608
      %v633 = vpack.c.b16 %v609, %v609
      %v634 = vpack.c.b16 %v610, %v610
      %v635 = vpack.c.b16 %v611, %v611
      %v636 = vpack.c.b16 %v612, %v612
      %v637 = vpack.c.b16 %v613, %v613
      %v638 = vpack.c.b16 %v614, %v614
      %v639 = vpack.c.b16 %v615, %v615
      %v640 = vpack.c.b16 %v616, %v616
      %v641 = vpack.c.b16 %v617, %v617
      %v642 = vpack.c.b16 %v618, %v618
      %v643 = vpack.c.b16 %v619, %v619
      %v644 = vpack.c.b16 %v620, %v620
      %v645 = vpack.c.b16 %v621, %v621
      %v646 = vpack.c.b16 %v622, %v622
      %v647 = vpack.c.b16 %v623, %v623
      %v648 = vpack.c.b16 %v624, %v624
      %v649 = vpack.c.b16 %v625, %v625
      %674 = vst [vmem:[%s199] sm:$0xf] %v626
      %675 = vst [vmem:[%s199 + $0x4] sm:$0xf] %v627
      %676 = vst [vmem:[%s199 + $0x8] sm:$0xf] %v628
      %677 = vst [vmem:[%s199 + $0xc] sm:$0xf] %v629
      %678 = vst [vmem:[%s199 + $0x10] sm:$0xf] %v630
      %679 = vst [vmem:[%s199 + $0x14] sm:$0xf] %v631
      %680 = vst [vmem:[%s199 + $0x18] sm:$0xf] %v632
      %681 = vst [vmem:[%s199 + $0x1c] sm:$0xf] %v633
      %682 = vst [vmem:[%s199 + $0x20] sm:$0xf] %v634
      %683 = vst [vmem:[%s199 + $0x24] sm:$0xf] %v635
      %684 = vst [vmem:[%s199 + $0x28] sm:$0xf] %v636
      %685 = vst [vmem:[%s199 + $0x2c] sm:$0xf] %v637
      %686 = vst [vmem:[%s199 + $0x30] sm:$0xf] %v638
      %687 = vst [vmem:[%s199 + $0x34] sm:$0xf] %v639
      %688 = vst [vmem:[%s199 + $0x38] sm:$0xf] %v640
      %689 = vst [vmem:[%s199 + $0x3c] sm:$0xf] %v641
      %690 = vst [vmem:[%s199 + $0x40] sm:$0xf] %v642
      %691 = vst [vmem:[%s199 + $0x44] sm:$0xf] %v643
      %692 = vst [vmem:[%s199 + $0x48] sm:$0xf] %v644
      %693 = vst [vmem:[%s199 + $0x4c] sm:$0xf] %v645
      %694 = vst [vmem:[%s199 + $0x50] sm:$0xf] %v646
      %695 = vst [vmem:[%s199 + $0x54] sm:$0xf] %v647
      %696 = vst [vmem:[%s199 + $0x58] sm:$0xf] %v648
      %697 = vst [vmem:[%s199 + $0x5c] sm:$0xf] %v649
      %s698 = smul.u32 24, %s15
      %p699 = scmp.lt.s32.totalorder %s698, 47
      %s700 = scalar_select %p699, %s698, 47
      %s701 = smul.addr %s700, 4
      %s702 = scalar_lea.vmem %s4, %s701
      // Predicated region
      $region37: #{entry_encoder_forward.10} parent=35 // pred_check
        %p703 = pneg %p122
      $region38: #{entry_encoder_forward.10} parent=35 // pred_check_branch
        %705 = sbr.rel (%p703) target = $region40
      $region39: #{entry_encoder_forward.10} parent=35 // pred_region
        %s706 = smul.u32 24, %s15
      $region40: #{entry_encoder_forward.10} parent=35 // pred_fallthru
        _
    $region36: #{entry_encoder_forward.10} parent=5 // pred_fallthru
      _
    %p707 = scmp.le.s32.totalorder 2, %s10
    // Predicated region
    $region41: #{entry_encoder_forward.10} parent=5 // pred_check
      %p708 = pneg %p707
    $region42: #{entry_encoder_forward.10} parent=5 // pred_check_branch
      %710 = sbr.rel (%p708) target = $region44
    $region43: #{entry_encoder_forward.10} parent=5 // pred_region
      %s711 = ssub.s32 %s10, 2
      // Predicated region
      $region45: #{entry_encoder_forward.10} parent=43 // pred_check
        %p712 = pneg %p128
      $region46: #{entry_encoder_forward.10} parent=43 // pred_check_branch
        %714 = sbr.rel (%p712) target = $region48
      $region47: #{entry_encoder_forward.10} parent=43 // pred_region
        %s715 = smul.u32 24, %s16
        %p716 = scmp.lt.s32.totalorder %s715, 47
        %s717 = scalar_select %p716, %s715, 47
        %s718 = smul.addr %s717, 4
        %s719 = scalar_lea.vmem %s4, %s718
      $region48: #{entry_encoder_forward.10} parent=43 // pred_fallthru
        _
    $region44: #{entry_encoder_forward.10} parent=5 // pred_fallthru
      _
  $region6: #{entry_encoder_forward.10} parent=0 // loop_footer
    %s14 = sadd.s32 1, %s10
  $region7: #{entry_encoder_forward.10} parent=0 // loop_footer_branch
    %9 = sbr.rel target = $region3
  $region8: #{entry_encoder_forward.10} parent=0 // loop_exit
    _

// kernel: entry_encoder_forward.11
$region0: #{entry_encoder_forward.11}
  #allocation0 [shape = 'u32[]', space=smem, size = 0x4, offset = 0x4, fixed_abs, tag = 'smem constant byte address 0x4 - core index']
  #allocation1 [shape = 'u32[144,128]{1,0:T(1,128)}', space=vmem, size = 0x12000, scoped, tag = 'internal scratch']
  %s0 = inlined_call_operand.vmem [shape: bf16[6,10,5,128], index: 0, kind: input, shape index: {}]
  %s1 = inlined_call_operand.vmem [shape: bf16[6,10,5,128], index: 1, kind: input, shape index: {}]
  %s2 = inlined_call_operand.vmem [shape: bf16[6,4,4,128], index: 2, kind: output, shape index: {}]
  %s3 = sld [smem:[#allocation0]]
  $region41: #{entry_encoder_forward.11} parent=0
    _
  %s5 = ssub.s32 1, %s3
  %s6 = scalar_select 0, %s5, %s3
  loop: start=0, step=1, limit=8
  $region2: #{entry_encoder_forward.11} parent=0 // loop_pre_header
    _
  $region3: #{entry_encoder_forward.11} parent=0 // loop_header
    %s8 = sphi 0, %s12
    %p9 = scmp.ge.s32.totalorder %s8, 8
    %s18 = sphi 0, %s20
    %s21 = sphi 0, %s18
    %s22 = sphi 0, %s21
    %s38 = sphi 0, %s22
    %s44 = sphi 0, %s46
    %s47 = sphi 0, %s44
    %s48 = sphi 0, %s47
    %s64 = sphi 0, %s48
    %s70 = sphi 0, %s72
    %s73 = sphi 0, %s70
    %s74 = sphi 0, %s73
    %s90 = sphi 0, %s74
  $region4: #{entry_encoder_forward.11} parent=0 // loop_header_branch
    %11 = sbr.rel (%p9) target = $region8
  $region5: #{entry_encoder_forward.11} parent=0 // loop_body
    %s13 = ssub.s32 %s8, 1
    %s14 = ssub.s32 %s8, 2
    %s15 = sadd.s32 %s8, 1
    %s16 = ssub.s32 %s8, %s15
    %p17 = scmp.eq.s32.totalorder %s16, 0
    %s19 = sadd.s32 %s18, 1
    %s20 = scalar_select %p17, %s18, %s19
    %p23 = pneg %p17
    %p24 = scmp.eq.s32.totalorder %s8, 5
    %p25 = por %p23, %p24
    %p26 = scmp.ne.s32.totalorder %s18, %s21
    %p27 = scmp.eq.s32.totalorder %s8, 0
    %p28 = por %p26, %p27
    %p29 = scmp.ne.s32.totalorder %s18, %s21
    %p30 = scmp.eq.s32.totalorder %s13, 5
    %p31 = por %p29, %p30
    %p32 = scmp.ne.s32.totalorder %s21, %s22
    %p33 = scmp.eq.s32.totalorder %s13, 0
    %p34 = por %p32, %p33
    %p35 = scmp.ne.s32.totalorder %s21, %s22
    %p36 = scmp.eq.s32.totalorder %s14, 5
    %p37 = por %p35, %p36
    %p39 = scmp.ne.s32.totalorder %s22, %s38
    %p40 = scmp.eq.s32.totalorder %s14, 0
    %p41 = por %p39, %p40
    %s42 = ssub.s32 %s8, %s15
    %p43 = scmp.eq.s32.totalorder %s42, 0
    %s45 = sadd.s32 %s44, 1
    %s46 = scalar_select %p43, %s44, %s45
    %p49 = pneg %p43
    %p50 = scmp.eq.s32.totalorder %s8, 5
    %p51 = por %p49, %p50
    %p52 = scmp.ne.s32.totalorder %s44, %s47
    %p53 = scmp.eq.s32.totalorder %s8, 0
    %p54 = por %p52, %p53
    %p55 = scmp.ne.s32.totalorder %s44, %s47
    %p56 = scmp.eq.s32.totalorder %s13, 5
    %p57 = por %p55, %p56
    %p58 = scmp.ne.s32.totalorder %s47, %s48
    %p59 = scmp.eq.s32.totalorder %s13, 0
    %p60 = por %p58, %p59
    %p61 = scmp.ne.s32.totalorder %s47, %s48
    %p62 = scmp.eq.s32.totalorder %s14, 5
    %p63 = por %p61, %p62
    %p65 = scmp.ne.s32.totalorder %s48, %s64
    %p66 = scmp.eq.s32.totalorder %s14, 0
    %p67 = por %p65, %p66
    %s68 = ssub.s32 %s8, %s15
    %p69 = scmp.eq.s32.totalorder %s68, 0
    %s71 = sadd.s32 %s70, 1
    %s72 = scalar_select %p69, %s70, %s71
    %p75 = pneg %p69
    %p76 = scmp.eq.s32.totalorder %s8, 5
    %p77 = por %p75, %p76
    %p78 = scmp.ne.s32.totalorder %s70, %s73
    %p79 = scmp.eq.s32.totalorder %s8, 0
    %p80 = por %p78, %p79
    %p81 = scmp.ne.s32.totalorder %s70, %s73
    %p82 = scmp.eq.s32.totalorder %s13, 5
    %p83 = por %p81, %p82
    %p84 = scmp.ne.s32.totalorder %s73, %s74
    %p85 = scmp.eq.s32.totalorder %s13, 0
    %p86 = por %p84, %p85
    %p87 = scmp.ne.s32.totalorder %s73, %s74
    %p88 = scmp.eq.s32.totalorder %s14, 5
    %p89 = por %p87, %p88
    %p91 = scmp.ne.s32.totalorder %s74, %s90
    %p92 = scmp.eq.s32.totalorder %s14, 0
    %p93 = por %p91, %p92
    %p94 = scmp.le.s32.totalorder 1, %s8
    %p95 = scmp.lt.s32.totalorder %s8, 7
    %p96 = pnand %p94, %p95
    %p97 = pneg %p96
    // Predicated region
    $region9: #{entry_encoder_forward.11} parent=5 // pred_check
      _
    $region10: #{entry_encoder_forward.11} parent=5 // pred_check_branch
      %99 = sbr.rel (%p96) target = $region12
    $region11: #{entry_encoder_forward.11} parent=5 // pred_region
      %s100 = ssub.s32 %s8, 1
    $region12: #{entry_encoder_forward.11} parent=5 // pred_fallthru
      _
    %p101 = scmp.lt.s32.totalorder %s8, 6
    // Predicated region
    $region13: #{entry_encoder_forward.11} parent=5 // pred_check
      %p102 = pneg %p101
    $region14: #{entry_encoder_forward.11} parent=5 // pred_check_branch
      %104 = sbr.rel (%p102) target = $region16
    $region15: #{entry_encoder_forward.11} parent=5 // pred_region
      // Predicated region
      $region17: #{entry_encoder_forward.11} parent=15 // pred_check
        %p105 = pneg %p28
      $region18: #{entry_encoder_forward.11} parent=15 // pred_check_branch
        %107 = sbr.rel (%p105) target = $region20
      $region19: #{entry_encoder_forward.11} parent=15 // pred_region
        %p108 = scmp.lt.s32.totalorder %s8, 5
        %s109 = scalar_select %p108, %s8, 5
        %s110 = smul.addr %s109, 10
        %s111 = smul.addr %s110, 4
        %s112 = scalar_lea.vmem %s0, %s111
      $region20: #{entry_encoder_forward.11} parent=15 // pred_fallthru
        _
      // Predicated region
      $region21: #{entry_encoder_forward.11} parent=15 // pred_check
        %p113 = pneg %p54
      $region22: #{entry_encoder_forward.11} parent=15 // pred_check_branch
        %115 = sbr.rel (%p113) target = $region24
      $region23: #{entry_encoder_forward.11} parent=15 // pred_region
        %p116 = scmp.lt.s32.totalorder %s8, 5
        %s117 = scalar_select %p116, %s8, 5
        %s118 = smul.addr %s117, 10
        %s119 = smul.addr %s118, 4
        %s120 = scalar_lea.vmem %s1, %s119
      $region24: #{entry_encoder_forward.11} parent=15 // pred_fallthru
        _
    $region16: #{entry_encoder_forward.11} parent=5 // pred_fallthru
      _
    %p121 = scmp.le.s32.totalorder 1, %s8
    %p122 = scmp.lt.s32.totalorder %s8, 7
    %p123 = pnand %p121, %p122
    %p124 = pneg %p123
    // Predicated region
    $region25: #{entry_encoder_forward.11} parent=5 // pred_check
      _
    $region26: #{entry_encoder_forward.11} parent=5 // pred_check_branch
      %126 = sbr.rel (%p123) target = $region28
    $region27: #{entry_encoder_forward.11} parent=5 // pred_region
      %s127 = ssub.s32 %s8, 1
      %p128 = scmp.lt.s32.totalorder %s13, 5
      %s129 = scalar_select %p128, %s13, 5
      %s130 = smul.addr %s129, 10
      %s131 = smul.addr %s130, 4
      %s132 = scalar_lea.vmem %s0, %s131
      %p133 = pneg %p34
      %p134 = pneg %p31
      %p135 = scmp.lt.s32.totalorder %s13, 5
      %s136 = scalar_select %p135, %s13, 5
      %s137 = smul.addr %s136, 10
      %s138 = smul.addr %s137, 4
      %s139 = scalar_lea.vmem %s1, %s138
      %p140 = pneg %p60
      %p141 = pneg %p57
      %p142 = pneg %p86
      %p143 = pneg %p83
      %p144 = scmp.lt.s32.totalorder %s13, 5
      %s145 = scalar_select %p144, %s13, 5
      %s146 = smul.addr %s145, 4
      %s147 = smul.addr %s146, 2
      %s148 = scalar_lea.vmem %s2, %s147
      %p149 = scmp.lt.s32.totalorder %s13, 5
      %s150 = scalar_select %p149, %s13, 5
      %s151 = smul.addr %s150, 10
      %s152 = smul.addr %s151, 4
      %s153 = scalar_lea.vmem %s0, %s152
      %p154 = scmp.lt.s32.totalorder %s13, 5
      %s155 = scalar_select %p154, %s13, 5
      %s156 = smul.addr %s155, 10
      %s157 = smul.addr %s156, 4
      %s158 = scalar_lea.vmem %s1, %s157
      %p159 = scmp.lt.s32.totalorder %s13, 5
      %s160 = scalar_select %p159, %s13, 5
      %s161 = smul.addr %s160, 4
      %s162 = smul.addr %s161, 2
      %s163 = scalar_lea.vmem %s2, %s162
      %v164 = vld [vmem:[%s153] sm:$0x7]
      %v165 = vld [vmem:[%s153 + $0x4] sm:$0x7]
      %v166 = vld [vmem:[%s153 + $0x8] sm:$0x7]
      %v167 = vld [vmem:[%s153 + $0xc] sm:$0x7]
      %v168 = vld [vmem:[%s153 + $0x10] sm:$0x7]
      %v169 = vld [vmem:[%s153 + $0x14] sm:$0x7]
      %v170 = vld [vmem:[%s153 + $0x18] sm:$0x7]
      %v171 = vld [vmem:[%s153 + $0x1c] sm:$0x7]
      %v172 = vld [vmem:[%s153 + $0x20] sm:$0x7]
      %v173 = vld [vmem:[%s158] sm:$0x7]
      %v174 = vld [vmem:[%s158 + $0x4] sm:$0x7]
      %v175 = vld [vmem:[%s158 + $0x8] sm:$0x7]
      %v176 = vld [vmem:[%s158 + $0xc] sm:$0x7]
      %v177 = vld [vmem:[%s158 + $0x10] sm:$0x7]
      %v178 = vld [vmem:[%s158 + $0x14] sm:$0x7]
      %v179 = vld [vmem:[%s158 + $0x18] sm:$0x7]
      %v180 = vld [vmem:[%s158 + $0x1c] sm:$0x7]
      %v181 = vld [vmem:[%s158 + $0x20] sm:$0x7]
      %v182 = vmax.bf16 %v164, %v173
      %v183 = vmax.bf16 %v165, %v174
      %v184 = vmax.bf16 %v166, %v175
      %v185 = vmax.bf16 %v167, %v176
      %v186 = vmax.bf16 %v168, %v177
      %v187 = vmax.bf16 %v169, %v178
      %v188 = vmax.bf16 %v170, %v179
      %v189 = vmax.bf16 %v171, %v180
      %v190 = vmax.bf16 %v172, %v181
      %v192 = vshrl.u32 %v164, 16
      %v194 = vrot.slane %v192, 4
      %v195 = vshll.u32 %v164, 16
      %v197 = vrot.slane %v195, 5
      %v198 = vor.u32 %v194, %v197
      %v199 = vrot.slane %v198, 4
      %v201 = vshrl.u32 %v165, 16
      %v203 = vrot.slane %v201, 4
      %v204 = vshll.u32 %v165, 16
      %v206 = vrot.slane %v204, 5
      %v207 = vor.u32 %v203, %v206
      %v208 = vrot.slane %v207, 4
      %v210 = vshrl.u32 %v166, 16
      %v212 = vrot.slane %v210, 4
      %v213 = vshll.u32 %v166, 16
      %v215 = vrot.slane %v213, 5
      %v216 = vor.u32 %v212, %v215
      %v217 = vrot.slane %v216, 4
      %v219 = vshrl.u32 %v167, 16
      %v221 = vrot.slane %v219, 4
      %v222 = vshll.u32 %v167, 16
      %v224 = vrot.slane %v222, 5
      %v225 = vor.u32 %v221, %v224
      %v226 = vrot.slane %v225, 4
      %v228 = vshrl.u32 %v168, 16
      %v230 = vrot.slane %v228, 4
      %v231 = vshll.u32 %v168, 16
      %v233 = vrot.slane %v231, 5
      %v234 = vor.u32 %v230, %v233
      %v235 = vrot.slane %v234, 4
      %v237 = vshrl.u32 %v169, 16
      %v239 = vrot.slane %v237, 4
      %v240 = vshll.u32 %v169, 16
      %v242 = vrot.slane %v240, 5
      %v243 = vor.u32 %v239, %v242
      %v244 = vrot.slane %v243, 4
      %v246 = vshrl.u32 %v170, 16
      %v248 = vrot.slane %v246, 4
      %v249 = vshll.u32 %v170, 16
      %v251 = vrot.slane %v249, 5
      %v252 = vor.u32 %v248, %v251
      %v253 = vrot.slane %v252, 4
      %v255 = vshrl.u32 %v171, 16
      %v257 = vrot.slane %v255, 4
      %v258 = vshll.u32 %v171, 16
      %v260 = vrot.slane %v258, 5
      %v261 = vor.u32 %v257, %v260
      %v262 = vrot.slane %v261, 4
      %v264 = vshrl.u32 %v172, 16
      %v266 = vrot.slane %v264, 4
      %v267 = vshll.u32 %v172, 16
      %v269 = vrot.slane %v267, 5
      %v270 = vor.u32 %v266, %v269
      %v271 = vrot.slane %v270, 4
      %v281 = vmax.bf16 %v182, %v199
      %v282 = vmax.bf16 %v183, %v208
      %v283 = vmax.bf16 %v184, %v217
      %v284 = vmax.bf16 %v185, %v226
      %v285 = vmax.bf16 %v186, %v235
      %v286 = vmax.bf16 %v187, %v244
      %v287 = vmax.bf16 %v188, %v253
      %v288 = vmax.bf16 %v189, %v262
      %v289 = vmax.bf16 %v190, %v271
      %v290 = vmax.bf16 %v281, %v282
      %v291 = vmax.bf16 %v283, %v284
      %v292 = vmax.bf16 %v285, %v286
      %v293 = vmax.bf16 %v287, %v288
      %v294 = vmax.bf16 %v290, %v283
      %v295 = vmax.bf16 %v291, %v285
      %v296 = vmax.bf16 %v292, %v287
      %v297 = vmax.bf16 %v293, %v289
      %298 = vst [vmem:[%s163] sm:$0x3] %v294
      %299 = vst [vmem:[%s163 + $0x2] sm:$0x3] %v295
      %300 = vst [vmem:[%s163 + $0x4] sm:$0x3] %v296
      %301 = vst [vmem:[%s163 + $0x6] sm:$0x3] %v297
      %p302 = scmp.lt.s32.totalorder %s13, 5
      %s303 = scalar_select %p302, %s13, 5
      %s304 = smul.addr %s303, 4
      %s305 = smul.addr %s304, 2
      %s306 = scalar_lea.vmem %s2, %s305
      // Predicated region
      $region29: #{entry_encoder_forward.11} parent=27 // pred_check
        %p307 = pneg %p83
      $region30: #{entry_encoder_forward.11} parent=27 // pred_check_branch
        %309 = sbr.rel (%p307) target = $region32
      $region31: #{entry_encoder_forward.11} parent=27 // pred_region
        _
      $region32: #{entry_encoder_forward.11} parent=27 // pred_fallthru
        _
    $region28: #{entry_encoder_forward.11} parent=5 // pred_fallthru
      _
    %p310 = scmp.le.s32.totalorder 2, %s8
    // Predicated region
    $region33: #{entry_encoder_forward.11} parent=5 // pred_check
      %p311 = pneg %p310
    $region34: #{entry_encoder_forward.11} parent=5 // pred_check_branch
      %313 = sbr.rel (%p311) target = $region36
    $region35: #{entry_encoder_forward.11} parent=5 // pred_region
      %s314 = ssub.s32 %s8, 2
      // Predicated region
      $region37: #{entry_encoder_forward.11} parent=35 // pred_check
        %p315 = pneg %p89
      $region38: #{entry_encoder_forward.11} parent=35 // pred_check_branch
        %317 = sbr.rel (%p315) target = $region40
      $region39: #{entry_encoder_forward.11} parent=35 // pred_region
        %p318 = scmp.lt.s32.totalorder %s14, 5
        %s319 = scalar_select %p318, %s14, 5
        %s320 = smul.addr %s319, 4
        %s321 = smul.addr %s320, 2
        %s322 = scalar_lea.vmem %s2, %s321
      $region40: #{entry_encoder_forward.11} parent=35 // pred_fallthru
        _
    $region36: #{entry_encoder_forward.11} parent=5 // pred_fallthru
      _
  $region6: #{entry_encoder_forward.11} parent=0 // loop_footer
    %s12 = sadd.s32 1, %s8
  $region7: #{entry_encoder_forward.11} parent=0 // loop_footer_branch
    %7 = sbr.rel target = $region3
  $region8: #{entry_encoder_forward.11} parent=0 // loop_exit
    _

</llo_original>
